<compile_context>
chip_gen: v7x
topology: tpu7x:2x2x1
jax: 0.10.0
libtpu: 0.0.40
codegen_flags: <defaults>
</compile_context>

<pallas_src>
import math
from functools import partial

import numpy as np
import jax
import jax.numpy as jnp
from jax.experimental import pallas as pl
from jax.experimental.pallas import tpu as pltpu


def _layernorm(x, g, b, eps=1e-8):
    mu = jnp.mean(x, axis=-1, keepdims=True)
    var = jnp.mean(jnp.square(x - mu), axis=-1, keepdims=True)
    return (x - mu) * jax.lax.rsqrt(var + eps) * g + b


def sasrec2_kernel(x_ref, keep_ref, mask_ref, pos_e_ref, neg_e_ref,
                   ln1_g_ref, ln1_b_ref,
                   wq_t_ref, bq_ref, wkv_t_ref, bkv_ref, wo_t_ref, bo_ref,
                   ln2_g_ref, ln2_b_ref,
                   w1_t_ref, b1_ref, w2_t_ref, b2_ref,
                   lnf_g_ref, lnf_b_ref,
                   out_ref, *, num_heads, compute_dtype):
    Bt, n, d = x_ref.shape
    dh = d // num_heads
    M = Bt * n

    # Streamed activations arrive in compute_dtype (bf16 on v6e/v7x); all
    # elementwise math (LayerNorm / softmax / residuals) runs in f32.
    x_c = x_ref[...].reshape(M, d)                   # compute_dtype
    x2 = x_c.astype(jnp.float32)
    nx2 = _layernorm(x2, ln1_g_ref[...], ln1_b_ref[...])        # query-side LN

    # Q projection on the normed input (1/sqrt(dh) pre-folded into wq_t / bq by
    # the wrapper) and fused K|V projection on the raw input.
    q2 = jnp.dot(nx2.astype(compute_dtype), wq_t_ref[...],
                 preferred_element_type=jnp.float32) + bq_ref[...]      # (M, d)
    kv2 = jnp.dot(x_c, wkv_t_ref[...],
                  preferred_element_type=jnp.float32) + bkv_ref[...]    # (M, 2d)

    q3 = q2.reshape(Bt, n, d)
    kv3 = kv2.reshape(Bt, n, 2 * d)

    # PyTorch float attn_mask is ADDED to the scores; broadcast it once (JAX
    # does not CSE broadcast_in_dim, so hoist out of the head loop).
    mask_b = jnp.broadcast_to(mask_ref[...][None, :, :], (Bt, n, n))

    # Short static head loop (num_heads is tiny at d=32).
    heads = []
    for h in range(num_heads):
        qh = q3[:, :, h * dh:(h + 1) * dh]                 # (Bt, n, dh)
        kh = kv3[:, :, h * dh:(h + 1) * dh]                # (Bt, n, dh)
        vh = kv3[:, :, d + h * dh:d + (h + 1) * dh]        # (Bt, n, dh)
        s = jnp.einsum('bqd,bkd->bqk', qh, kh,
                       preferred_element_type=jnp.float32) + mask_b
        m = jnp.max(s, axis=-1, keepdims=True)
        p = jnp.exp(s - m)
        a = p * pl.reciprocal(jnp.sum(p, axis=-1, keepdims=True), approx=True)
        heads.append(jnp.einsum('bqk,bkd->bqd', a, vh,
                                preferred_element_type=jnp.float32))
    attn = jnp.concatenate(heads, axis=-1).reshape(M, d)   # one fused out-proj

    attn_out = jnp.dot(attn.astype(compute_dtype), wo_t_ref[...],
                       preferred_element_type=jnp.float32) + bo_ref[...]

    # residual with the normed query + LayerNorm + point-wise FFN (+ residual)
    s2 = _layernorm(attn_out + nx2, ln2_g_ref[...], ln2_b_ref[...])
    h1 = jnp.maximum(
        jnp.dot(s2.astype(compute_dtype), w1_t_ref[...],
                preferred_element_type=jnp.float32) + b1_ref[...], 0.0)
    f = jnp.dot(h1.astype(compute_dtype), w2_t_ref[...],
                preferred_element_type=jnp.float32) + b2_ref[...] + s2

    # timeline mask: keep's trailing size-1 dim broadcasts along lanes for free.
    seqs = f.reshape(Bt, n, d) * keep_ref[...]
    out3 = _layernorm(seqs.reshape(M, d), lnf_g_ref[...],
                      lnf_b_ref[...]).reshape(Bt, n, d)

    pos_s = jnp.sum(out3 * pos_e_ref[...].astype(jnp.float32), axis=-1)   # (Bt, n)
    neg_s = jnp.sum(out3 * neg_e_ref[...].astype(jnp.float32), axis=-1)   # (Bt, n)
    # Lane-dense store: (2n, Bt) slab with the big tile dim on lanes instead of a
    # 16-lane masked partial store; the wrapper untransposes.
    out_ref[0] = jnp.concatenate([pos_s, neg_s], axis=-1).T


def _make_spec(shape, index_map, buffer_count=None):
    # Optional deeper prefetch (pl.Buffered) for the streamed activations; guarded
    # so the kernel still builds if pipeline_mode is unavailable.
    if buffer_count is not None:
        try:
            return pl.BlockSpec(shape, index_map,
                                pipeline_mode=pl.Buffered(buffer_count))
        except (TypeError, AttributeError):
            pass
    return pl.BlockSpec(shape, index_map)


def sasrec2_forward(params, seq, pos, neg, *, n, d, num_blocks, num_heads,
                    batch_tile=None, matmul_dtype=jnp.float32,
                    stream_buffer_count=None):
    """Embeddings / masks / weight prep in plain JAX; hot path in Pallas.

    matmul_dtype=jnp.bfloat16 is recommended on v6e/v7x: it halves the HBM
    traffic of the dominant streamed inputs (x, pos_e, neg_e) and feeds the MXU
    bf16 operands; LayerNorm / softmax / residual math stays f32 in-kernel.
    """
    B = seq.shape[0]
    item_table = params["item_embed"]
    dh = d // num_heads
    scale = 1.0 / math.sqrt(dh)

    keep = (seq != 0).astype(jnp.float32)[..., None]                   # (B, n, 1)
    x = item_table[seq] * (d ** 0.5) + params["pos_embed"][None, :, :]
    x = (x * keep).astype(matmul_dtype)                                # (B, n, d)
    mask = jnp.tril(jnp.ones((n, n), jnp.float32))   # float attn_mask => ADDED
    pos_e = item_table[pos].astype(matmul_dtype)
    neg_e = item_table[neg].astype(matmul_dtype)

    # Only the LAST block's weights affect the output (see header comment).
    l = num_blocks - 1
    Wqkv = params["in_proj_w"][l]                       # (3d, d) packed (Wq; Wk; Wv)
    wq_t = (Wqkv[0:d].T * scale).astype(matmul_dtype)   # fold 1/sqrt(dh) into Q
    wkv_t = Wqkv[d:3 * d].T.astype(matmul_dtype)        # (d, 2d)  fused K|V
    bqkv = params["in_proj_b"][l]                       # (1, 3d)
    bq = bqkv[:, 0:d] * scale
    bkv = bqkv[:, d:3 * d]
    wo_t = params["out_proj_w"][l].T.astype(matmul_dtype)
    bo = params["out_proj_b"][l]
    ln1_g, ln1_b = params["ln1_g"][l], params["ln1_b"][l]
    ln2_g, ln2_b = params["ln2_g"][l], params["ln2_b"][l]
    w1_t = params["fc1_w"][l].T.astype(matmul_dtype)
    b1 = params["fc1_b"][l]
    w2_t = params["fc2_w"][l].T.astype(matmul_dtype)
    b2 = params["fc2_b"][l]
    lnf_g, lnf_b = params["lnf_g"], params["lnf_b"]

    # Batch tiling: target M = Bt*n ~= 2048 rows per grid step (amortizes the
    # ~0.35us/step grid overhead, tall MXU matmuls).  Per-step activations at
    # d=32 are a few MiB -> safe under the 32 MiB scoped VMEM default even on
    # v7x (64 MiB physical).  Keep >= 2 grid steps when B allows so the
    # "parallel" batch axis can feed both v7x TensorCores.
    if batch_tile is None:
        batch_tile = max(1, min(B, pl.cdiv(2048, n)))
        if B >= 2:
            batch_tile = min(batch_tile, max(1, B // 2))
    Bt = int(batch_tile)
    num_tiles = pl.cdiv(B, Bt)
    B_pad = num_tiles * Bt
    if B_pad != B:
        pad3 = ((0, B_pad - B), (0, 0), (0, 0))
        x = jnp.pad(x, pad3)
        keep = jnp.pad(keep, pad3)
        pos_e = jnp.pad(pos_e, pad3)
        neg_e = jnp.pad(neg_e, pad3)

    tile3 = lambda i: (i, 0, 0)
    full2 = lambda i: (0, 0)

    in_specs = [
        _make_spec((Bt, n, d), tile3, stream_buffer_count),   # x
        pl.BlockSpec((Bt, n, 1), tile3),                      # keep
        pl.BlockSpec((n, n), full2),                          # attn mask
        _make_spec((Bt, n, d), tile3, stream_buffer_count),   # pos_e
        _make_spec((Bt, n, d), tile3, stream_buffer_count),   # neg_e
        pl.BlockSpec((1, d), full2),            # ln1_g
        pl.BlockSpec((1, d), full2),            # ln1_b
        pl.BlockSpec((d, d), full2),            # wq_t (pre-scaled)
        pl.BlockSpec((1, d), full2),            # bq   (pre-scaled)
        pl.BlockSpec((d, 2 * d), full2),        # wkv_t
        pl.BlockSpec((1, 2 * d), full2),        # bkv
        pl.BlockSpec((d, d), full2),            # wo_t
        pl.BlockSpec((1, d), full2),            # bo
        pl.BlockSpec((1, d), full2),            # ln2_g
        pl.BlockSpec((1, d), full2),            # ln2_b
        pl.BlockSpec((d, d), full2),            # w1_t
        pl.BlockSpec((1, d), full2),            # b1
        pl.BlockSpec((d, d), full2),            # w2_t
        pl.BlockSpec((1, d), full2),            # b2
        pl.BlockSpec((1, d), full2),            # lnf_g
        pl.BlockSpec((1, d), full2),            # lnf_b
    ]
    # Lane-dense output slab: (2n, Bt) per tile with Bt on lanes.
    out_specs = pl.BlockSpec((1, 2 * n, Bt), tile3)
    out_shape = jax.ShapeDtypeStruct((num_tiles, 2 * n, Bt), jnp.float32)

    kernel = partial(sasrec2_kernel, num_heads=num_heads, compute_dtype=matmul_dtype)
    slabs = pl.pallas_call(
        kernel,
        grid=(num_tiles,),
        in_specs=in_specs,
        out_specs=out_specs,
        out_shape=out_shape,
        compiler_params=pltpu.CompilerParams(
            dimension_semantics=("parallel",),   # shard batch tiles across TCs (v7x)
            vmem_limit_bytes=32 * 1024 * 1024,
        ),
    )(x, keep, mask, pos_e, neg_e,
      ln1_g, ln1_b, wq_t, bq, wkv_t, bkv, wo_t, bo,
      ln2_g, ln2_b, w1_t, b1, w2_t, b2, lnf_g, lnf_b)

    scores = jnp.swapaxes(slabs, 1, 2).reshape(B_pad, 2 * n)[:B]
    return scores[:, :n], scores[:, n:]


def reference_forward(params, seq, pos, neg, *, n, d, num_blocks, num_heads):
    """Pure-JAX mirror of the PyTorch forward (eval mode), incl. the full block loop."""
    item_table = params["item_embed"]
    B = seq.shape[0]
    dh = d // num_heads
    keep = (seq != 0).astype(jnp.float32)[..., None]
    x = item_table[seq] * (d ** 0.5) + params["pos_embed"][None]
    x = x * keep
    mask = jnp.tril(jnp.ones((n, n), jnp.float32))

    def ln(z, g, b):
        mu = z.mean(-1, keepdims=True)
        var = ((z - mu) ** 2).mean(-1, keepdims=True)
        return (z - mu) / jnp.sqrt(var + 1e-8) * g + b

    seqs = x
    for l in range(num_blocks):
        nx = ln(x, params["ln1_g"][l, 0], params["ln1_b"][l, 0])
        W = params["in_proj_w"][l]
        bqkv = params["in_proj_b"][l, 0]
        q = nx @ W[0:d].T + bqkv[0:d]
        k = x @ W[d:2 * d].T + bqkv[d:2 * d]
        v = x @ W[2 * d:3 * d].T + bqkv[2 * d:3 * d]
        qh = q.reshape(B, n, num_heads, dh).transpose(0, 2, 1, 3)
        kh = k.reshape(B, n, num_heads, dh).transpose(0, 2, 1, 3)
        vh = v.reshape(B, n, num_heads, dh).transpose(0, 2, 1, 3)
        s = qh @ kh.transpose(0, 1, 3, 2) / math.sqrt(dh) + mask
        a = jax.nn.softmax(s, axis=-1)
        o = (a @ vh).transpose(0, 2, 1, 3).reshape(B, n, d)
        attn_out = o @ params["out_proj_w"][l].T + params["out_proj_b"][l, 0]
        s2 = attn_out + nx
        s2 = ln(s2, params["ln2_g"][l, 0], params["ln2_b"][l, 0])
        h1 = jax.nn.relu(s2 @ params["fc1_w"][l].T + params["fc1_b"][l, 0])
        f = h1 @ params["fc2_w"][l].T + params["fc2_b"][l, 0]
        f = f + s2
        seqs = f * keep
    out = ln(seqs, params["lnf_g"][0], params["lnf_b"][0])
    return (out * item_table[pos]).sum(-1), (out * item_table[neg]).sum(-1)


if __name__ == "__main__":
    B, n, d = 8, 8, 32
    num_blocks, num_heads = 2, 2
    item_nums = 20

    keys = iter(jax.random.split(jax.random.PRNGKey(0), 32))

    def rnd(shape, scale=0.1):
        return scale * jax.random.normal(next(keys), shape, dtype=jnp.float32)

    item_embed = rnd((item_nums + 1, d), 1.0)
    item_embed = item_embed.at[0].set(0.0)       # padding_idx = 0
    params = dict(
        item_embed=item_embed,
        pos_embed=rnd((n, d), 1.0),
        ln1_g=1.0 + rnd((num_blocks, 1, d), 0.05),
        ln1_b=rnd((num_blocks, 1, d), 0.05),
        in_proj_w=rnd((num_blocks, 3 * d, d)),          # packed (Wq; Wk; Wv)
        in_proj_b=rnd((num_blocks, 1, 3 * d), 0.05),
        out_proj_w=rnd((num_blocks, d, d)),
        out_proj_b=rnd((num_blocks, 1, d), 0.05),
        ln2_g=1.0 + rnd((num_blocks, 1, d), 0.05),
        ln2_b=rnd((num_blocks, 1, d), 0.05),
        fc1_w=rnd((num_blocks, d, d)),                  # Conv1d(k=1) weight, squeezed
        fc1_b=rnd((num_blocks, 1, d), 0.05),
        fc2_w=rnd((num_blocks, d, d)),
        fc2_b=rnd((num_blocks, 1, d), 0.05),
        lnf_g=1.0 + rnd((1, d), 0.05),
        lnf_b=rnd((1, d), 0.05),
    )

    seq = jax.random.randint(next(keys), (B, n), 0, item_nums + 1)
    seq = seq.at[:, 0].set(0)       # exercise the timeline / padding mask
    seq = seq.at[0, :3].set(0)
    pos = jax.random.randint(next(keys), (B, n), 1, item_nums + 1)
    neg = jax.random.randint(next(keys), (B, n), 1, item_nums + 1)

    ref_pos, ref_neg = reference_forward(params, seq, pos, neg, n=n, d=d,
                                         num_blocks=num_blocks, num_heads=num_heads)

    # f32 matmul operands: tight check against the PyTorch-faithful reference.
    # (default batch_tile logic -> Bt=4, 2 grid steps, exercises tiling + padding paths)
    pos_pred, neg_pred = sasrec2_forward(params, seq, pos, neg, n=n, d=d,
                                         num_blocks=num_blocks, num_heads=num_heads,
                                         matmul_dtype=jnp.float32)
    jax.block_until_ready((pos_pred, neg_pred))
    np.testing.assert_allclose(np.asarray(pos_pred), np.asarray(ref_pos), rtol=2e-2, atol=2e-2)
    np.testing.assert_allclose(np.asarray(neg_pred), np.asarray(ref_neg), rtol=2e-2, atol=2e-2)

    # bf16 matmul operands + bf16 streamed activations (v6e/v7x-recommended config):
    # loose sanity bound against the f32 reference (reduced-precision inputs/weights).
    pos_bf, neg_bf = sasrec2_forward(params, seq, pos, neg, n=n, d=d,
                                     num_blocks=num_blocks, num_heads=num_heads,
                                     matmul_dtype=jnp.bfloat16)
    jax.block_until_ready((pos_bf, neg_bf))
    np.testing.assert_allclose(np.asarray(pos_bf), np.asarray(ref_pos), rtol=2e-1, atol=2e-1)
    np.testing.assert_allclose(np.asarray(neg_bf), np.asarray(ref_neg), rtol=2e-1, atol=2e-1)

    print("KERNEL_OK")
</pallas_src>

<mosaic_0001>
module attributes {stable_mosaic.version = 11 : i64} {
  func.func @sasrec2_kernel(%arg0: i32, %arg1: memref<4x8x32xf32, #tpu.memory_space<vmem>>, %arg2: memref<4x8x1xf32, #tpu.memory_space<vmem>>, %arg3: memref<8x8xf32, #tpu.memory_space<vmem>>, %arg4: memref<4x8x32xf32, #tpu.memory_space<vmem>>, %arg5: memref<4x8x32xf32, #tpu.memory_space<vmem>>, %arg6: memref<1x32xf32, #tpu.memory_space<vmem>>, %arg7: memref<1x32xf32, #tpu.memory_space<vmem>>, %arg8: memref<32x32xf32, #tpu.memory_space<vmem>>, %arg9: memref<1x32xf32, #tpu.memory_space<vmem>>, %arg10: memref<32x64xf32, #tpu.memory_space<vmem>>, %arg11: memref<1x64xf32, #tpu.memory_space<vmem>>, %arg12: memref<32x32xf32, #tpu.memory_space<vmem>>, %arg13: memref<1x32xf32, #tpu.memory_space<vmem>>, %arg14: memref<1x32xf32, #tpu.memory_space<vmem>>, %arg15: memref<1x32xf32, #tpu.memory_space<vmem>>, %arg16: memref<32x32xf32, #tpu.memory_space<vmem>>, %arg17: memref<1x32xf32, #tpu.memory_space<vmem>>, %arg18: memref<32x32xf32, #tpu.memory_space<vmem>>, %arg19: memref<1x32xf32, #tpu.memory_space<vmem>>, %arg20: memref<1x32xf32, #tpu.memory_space<vmem>>, %arg21: memref<1x32xf32, #tpu.memory_space<vmem>>, %arg22: memref<1x16x4xf32, #tpu.memory_space<vmem>>) attributes {dimension_semantics = [#tpu.dimension_semantics<parallel>], iteration_bounds = array<i64: 2>, scalar_prefetch = 0 : i64, scratch_operands = 0 : i64, tpu.core_type = #tpu.core_type<tc>, window_params = [{transform_indices = @transform_0, window_bounds = array<i64: 4, 8, 32>}, {transform_indices = @transform_1, window_bounds = array<i64: 4, 8, 1>}, {pipeline_mode = #tpu.pipeline_mode<synchronous>, transform_indices = @transform_2, window_bounds = array<i64: 8, 8>}, {transform_indices = @transform_3, window_bounds = array<i64: 4, 8, 32>}, {transform_indices = @transform_4, window_bounds = array<i64: 4, 8, 32>}, {pipeline_mode = #tpu.pipeline_mode<synchronous>, transform_indices = @transform_5, window_bounds = array<i64: 1, 32>}, {pipeline_mode = #tpu.pipeline_mode<synchronous>, transform_indices = @transform_6, window_bounds = array<i64: 1, 32>}, {pipeline_mode = #tpu.pipeline_mode<synchronous>, transform_indices = @transform_7, window_bounds = array<i64: 32, 32>}, {pipeline_mode = #tpu.pipeline_mode<synchronous>, transform_indices = @transform_8, window_bounds = array<i64: 1, 32>}, {pipeline_mode = #tpu.pipeline_mode<synchronous>, transform_indices = @transform_9, window_bounds = array<i64: 32, 64>}, {pipeline_mode = #tpu.pipeline_mode<synchronous>, transform_indices = @transform_10, window_bounds = array<i64: 1, 64>}, {pipeline_mode = #tpu.pipeline_mode<synchronous>, transform_indices = @transform_11, window_bounds = array<i64: 32, 32>}, {pipeline_mode = #tpu.pipeline_mode<synchronous>, transform_indices = @transform_12, window_bounds = array<i64: 1, 32>}, {pipeline_mode = #tpu.pipeline_mode<synchronous>, transform_indices = @transform_13, window_bounds = array<i64: 1, 32>}, {pipeline_mode = #tpu.pipeline_mode<synchronous>, transform_indices = @transform_14, window_bounds = array<i64: 1, 32>}, {pipeline_mode = #tpu.pipeline_mode<synchronous>, transform_indices = @transform_15, window_bounds = array<i64: 32, 32>}, {pipeline_mode = #tpu.pipeline_mode<synchronous>, transform_indices = @transform_16, window_bounds = array<i64: 1, 32>}, {pipeline_mode = #tpu.pipeline_mode<synchronous>, transform_indices = @transform_17, window_bounds = array<i64: 32, 32>}, {pipeline_mode = #tpu.pipeline_mode<synchronous>, transform_indices = @transform_18, window_bounds = array<i64: 1, 32>}, {pipeline_mode = #tpu.pipeline_mode<synchronous>, transform_indices = @transform_19, window_bounds = array<i64: 1, 32>}, {pipeline_mode = #tpu.pipeline_mode<synchronous>, transform_indices = @transform_20, window_bounds = array<i64: 1, 32>}, {transform_indices = @transform_21, window_bounds = array<i64: 1, 16, 4>}]} {
    %c0 = arith.constant 0 : index
    %c0_0 = arith.constant 0 : index
    %c0_1 = arith.constant 0 : index
    %0 = vector.load %arg1[%c0, %c0_0, %c0_1] : memref<4x8x32xf32, #tpu.memory_space<vmem>>, vector<4x8x32xf32>
    %1 = vector.shape_cast %0 : vector<4x8x32xf32> to vector<32x32xf32>
    %c0_2 = arith.constant 0 : index
    %c0_3 = arith.constant 0 : index
    %2 = vector.load %arg6[%c0_2, %c0_3] : memref<1x32xf32, #tpu.memory_space<vmem>>, vector<1x32xf32>
    %c0_4 = arith.constant 0 : index
    %c0_5 = arith.constant 0 : index
    %3 = vector.load %arg7[%c0_4, %c0_5] : memref<1x32xf32, #tpu.memory_space<vmem>>, vector<1x32xf32>
    %cst = arith.constant dense<0.000000e+00> : vector<32xf32>
    %4 = vector.multi_reduction <add>, %1, %cst [1] : vector<32x32xf32> to vector<32xf32>
    %5 = vector.shape_cast %4 : vector<32xf32> to vector<32x1xf32>
    %cst_6 = arith.constant 3.200000e+01 : f32
    %6 = vector.broadcast %cst_6 : f32 to vector<32x1xf32>
    %7 = arith.divf %5, %6 : vector<32x1xf32>
    %8 = vector.broadcast %7 : vector<32x1xf32> to vector<32x32xf32>
    %9 = arith.subf %1, %8 : vector<32x32xf32>
    %10 = arith.mulf %9, %9 : vector<32x32xf32>
    %cst_7 = arith.constant dense<0.000000e+00> : vector<32xf32>
    %11 = vector.multi_reduction <add>, %10, %cst_7 [1] : vector<32x32xf32> to vector<32xf32>
    %12 = vector.shape_cast %11 : vector<32xf32> to vector<32x1xf32>
    %cst_8 = arith.constant 3.200000e+01 : f32
    %13 = vector.broadcast %cst_8 : f32 to vector<32x1xf32>
    %14 = arith.divf %12, %13 : vector<32x1xf32>
    %15 = vector.broadcast %7 : vector<32x1xf32> to vector<32x32xf32>
    %16 = arith.subf %1, %15 : vector<32x32xf32>
    %cst_9 = arith.constant 9.99999993E-9 : f32
    %17 = vector.broadcast %cst_9 : f32 to vector<32x1xf32>
    %18 = arith.addf %14, %17 : vector<32x1xf32>
    %19 = math.rsqrt %18 : vector<32x1xf32>
    %20 = vector.broadcast %19 : vector<32x1xf32> to vector<32x32xf32>
    %21 = arith.mulf %16, %20 : vector<32x32xf32>
    %22 = vector.broadcast %2 : vector<1x32xf32> to vector<32x32xf32>
    %23 = arith.mulf %21, %22 : vector<32x32xf32>
    %24 = vector.broadcast %3 : vector<1x32xf32> to vector<32x32xf32>
    %25 = arith.addf %23, %24 : vector<32x32xf32>
    %c0_10 = arith.constant 0 : index
    %c0_11 = arith.constant 0 : index
    %26 = vector.load %arg8[%c0_10, %c0_11] : memref<32x32xf32, #tpu.memory_space<vmem>>, vector<32x32xf32>
    %cst_12 = arith.constant dense<0.000000e+00> : vector<32x32xf32>
    %27 = tpu.matmul %25, %26, %cst_12 {dimension_numbers = #tpu.dot_dimension_numbers<[1], [0], [0], [1], [0, 0, 1, 1], [], []>} : vector<32x32xf32>, vector<32x32xf32>, vector<32x32xf32> -> vector<32x32xf32>
    %c0_13 = arith.constant 0 : index
    %c0_14 = arith.constant 0 : index
    %28 = vector.load %arg9[%c0_13, %c0_14] : memref<1x32xf32, #tpu.memory_space<vmem>>, vector<1x32xf32>
    %29 = vector.broadcast %28 : vector<1x32xf32> to vector<32x32xf32>
    %30 = arith.addf %27, %29 : vector<32x32xf32>
    %c0_15 = arith.constant 0 : index
    %c0_16 = arith.constant 0 : index
    %31 = vector.load %arg10[%c0_15, %c0_16] : memref<32x64xf32, #tpu.memory_space<vmem>>, vector<32x64xf32>
    %cst_17 = arith.constant dense<0.000000e+00> : vector<32x64xf32>
    %32 = tpu.matmul %1, %31, %cst_17 {dimension_numbers = #tpu.dot_dimension_numbers<[1], [0], [0], [1], [0, 0, 1, 1], [], []>} : vector<32x32xf32>, vector<32x64xf32>, vector<32x64xf32> -> vector<32x64xf32>
    %c0_18 = arith.constant 0 : index
    %c0_19 = arith.constant 0 : index
    %33 = vector.load %arg11[%c0_18, %c0_19] : memref<1x64xf32, #tpu.memory_space<vmem>>, vector<1x64xf32>
    %34 = vector.broadcast %33 : vector<1x64xf32> to vector<32x64xf32>
    %35 = arith.addf %32, %34 : vector<32x64xf32>
    %36 = vector.shape_cast %30 : vector<32x32xf32> to vector<4x8x32xf32>
    %37 = vector.shape_cast %35 : vector<32x64xf32> to vector<4x8x64xf32>
    %c0_20 = arith.constant 0 : index
    %c0_21 = arith.constant 0 : index
    %38 = vector.load %arg3[%c0_20, %c0_21] : memref<8x8xf32, #tpu.memory_space<vmem>>, vector<8x8xf32>
    %39 = vector.shape_cast %38 : vector<8x8xf32> to vector<1x8x8xf32>
    %40 = vector.shape_cast %39 : vector<1x8x8xf32> to vector<1x8x8xf32>
    %41 = vector.broadcast %40 : vector<1x8x8xf32> to vector<4x8x8xf32>
    %42 = vector.extract_strided_slice %36 {offsets = [0, 0, 0], sizes = [4, 8, 16], strides = [1, 1, 1]} : vector<4x8x32xf32> to vector<4x8x16xf32>
    %43 = vector.extract_strided_slice %37 {offsets = [0, 0, 0], sizes = [4, 8, 16], strides = [1, 1, 1]} : vector<4x8x64xf32> to vector<4x8x16xf32>
    %44 = vector.extract_strided_slice %37 {offsets = [0, 0, 32], sizes = [4, 8, 16], strides = [1, 1, 1]} : vector<4x8x64xf32> to vector<4x8x16xf32>
    "tpu.trace_start"() <{level = 10 : i32, message = "bqd,bkd->bqk"}> : () -> ()
    %cst_22 = arith.constant dense<0.000000e+00> : vector<4x8x8xf32>
    %45 = tpu.matmul %42, %43, %cst_22 {dimension_numbers = #tpu.dot_dimension_numbers<[2], [2], [1], [1], [0, 0, 0, 1, 1, 1], [0], [0]>} : vector<4x8x16xf32>, vector<4x8x16xf32>, vector<4x8x8xf32> -> vector<4x8x8xf32>
    "tpu.trace_stop"() : () -> ()
    %46 = arith.addf %45, %41 : vector<4x8x8xf32>
    %cst_23 = arith.constant dense<0xFF800000> : vector<4x8xf32>
    %47 = vector.multi_reduction <maximumf>, %46, %cst_23 [2] : vector<4x8x8xf32> to vector<4x8xf32>
    %48 = vector.shape_cast %47 : vector<4x8xf32> to vector<4x8x1xf32>
    %49 = vector.broadcast %48 : vector<4x8x1xf32> to vector<4x8x8xf32>
    %50 = arith.subf %46, %49 : vector<4x8x8xf32>
    %51 = math.exp %50 : vector<4x8x8xf32>
    %cst_24 = arith.constant dense<0.000000e+00> : vector<4x8xf32>
    %52 = vector.multi_reduction <add>, %51, %cst_24 [2] : vector<4x8x8xf32> to vector<4x8xf32>
    %53 = vector.shape_cast %52 : vector<4x8xf32> to vector<4x8x1xf32>
    %54 = tpu.reciprocal %53 {approx = true} : vector<4x8x1xf32> -> vector<4x8x1xf32>
    %55 = vector.broadcast %54 : vector<4x8x1xf32> to vector<4x8x8xf32>
    %56 = arith.mulf %51, %55 : vector<4x8x8xf32>
    "tpu.trace_start"() <{level = 10 : i32, message = "bqk,bkd->bqd"}> : () -> ()
    %cst_25 = arith.constant dense<0.000000e+00> : vector<4x8x16xf32>
    %57 = tpu.matmul %56, %44, %cst_25 {dimension_numbers = #tpu.dot_dimension_numbers<[2], [1], [1], [2], [0, 0, 0, 1, 1, 2], [0], [0]>} : vector<4x8x8xf32>, vector<4x8x16xf32>, vector<4x8x16xf32> -> vector<4x8x16xf32>
    "tpu.trace_stop"() : () -> ()
    %58 = vector.extract_strided_slice %36 {offsets = [0, 0, 16], sizes = [4, 8, 16], strides = [1, 1, 1]} : vector<4x8x32xf32> to vector<4x8x16xf32>
    %59 = vector.extract_strided_slice %37 {offsets = [0, 0, 16], sizes = [4, 8, 16], strides = [1, 1, 1]} : vector<4x8x64xf32> to vector<4x8x16xf32>
    %60 = vector.extract_strided_slice %37 {offsets = [0, 0, 48], sizes = [4, 8, 16], strides = [1, 1, 1]} : vector<4x8x64xf32> to vector<4x8x16xf32>
    "tpu.trace_start"() <{level = 10 : i32, message = "bqd,bkd->bqk"}> : () -> ()
    %cst_26 = arith.constant dense<0.000000e+00> : vector<4x8x8xf32>
    %61 = tpu.matmul %58, %59, %cst_26 {dimension_numbers = #tpu.dot_dimension_numbers<[2], [2], [1], [1], [0, 0, 0, 1, 1, 1], [0], [0]>} : vector<4x8x16xf32>, vector<4x8x16xf32>, vector<4x8x8xf32> -> vector<4x8x8xf32>
    "tpu.trace_stop"() : () -> ()
    %62 = arith.addf %61, %41 : vector<4x8x8xf32>
    %cst_27 = arith.constant dense<0xFF800000> : vector<4x8xf32>
    %63 = vector.multi_reduction <maximumf>, %62, %cst_27 [2] : vector<4x8x8xf32> to vector<4x8xf32>
    %64 = vector.shape_cast %63 : vector<4x8xf32> to vector<4x8x1xf32>
    %65 = vector.broadcast %64 : vector<4x8x1xf32> to vector<4x8x8xf32>
    %66 = arith.subf %62, %65 : vector<4x8x8xf32>
    %67 = math.exp %66 : vector<4x8x8xf32>
    %cst_28 = arith.constant dense<0.000000e+00> : vector<4x8xf32>
    %68 = vector.multi_reduction <add>, %67, %cst_28 [2] : vector<4x8x8xf32> to vector<4x8xf32>
    %69 = vector.shape_cast %68 : vector<4x8xf32> to vector<4x8x1xf32>
    %70 = tpu.reciprocal %69 {approx = true} : vector<4x8x1xf32> -> vector<4x8x1xf32>
    %71 = vector.broadcast %70 : vector<4x8x1xf32> to vector<4x8x8xf32>
    %72 = arith.mulf %67, %71 : vector<4x8x8xf32>
    "tpu.trace_start"() <{level = 10 : i32, message = "bqk,bkd->bqd"}> : () -> ()
    %cst_29 = arith.constant dense<0.000000e+00> : vector<4x8x16xf32>
    %73 = tpu.matmul %72, %60, %cst_29 {dimension_numbers = #tpu.dot_dimension_numbers<[2], [1], [1], [2], [0, 0, 0, 1, 1, 2], [0], [0]>} : vector<4x8x8xf32>, vector<4x8x16xf32>, vector<4x8x16xf32> -> vector<4x8x16xf32>
    "tpu.trace_stop"() : () -> ()
    %74 = tpu.concatenate %57, %73 in 2 : vector<4x8x16xf32>, vector<4x8x16xf32> -> vector<4x8x32xf32>
    %75 = vector.shape_cast %74 : vector<4x8x32xf32> to vector<32x32xf32>
    %c0_30 = arith.constant 0 : index
    %c0_31 = arith.constant 0 : index
    %76 = vector.load %arg12[%c0_30, %c0_31] : memref<32x32xf32, #tpu.memory_space<vmem>>, vector<32x32xf32>
    %cst_32 = arith.constant dense<0.000000e+00> : vector<32x32xf32>
    %77 = tpu.matmul %75, %76, %cst_32 {dimension_numbers = #tpu.dot_dimension_numbers<[1], [0], [0], [1], [0, 0, 1, 1], [], []>} : vector<32x32xf32>, vector<32x32xf32>, vector<32x32xf32> -> vector<32x32xf32>
    %c0_33 = arith.constant 0 : index
    %c0_34 = arith.constant 0 : index
    %78 = vector.load %arg13[%c0_33, %c0_34] : memref<1x32xf32, #tpu.memory_space<vmem>>, vector<1x32xf32>
    %79 = vector.broadcast %78 : vector<1x32xf32> to vector<32x32xf32>
    %80 = arith.addf %77, %79 : vector<32x32xf32>
    %81 = arith.addf %80, %25 : vector<32x32xf32>
    %c0_35 = arith.constant 0 : index
    %c0_36 = arith.constant 0 : index
    %82 = vector.load %arg14[%c0_35, %c0_36] : memref<1x32xf32, #tpu.memory_space<vmem>>, vector<1x32xf32>
    %c0_37 = arith.constant 0 : index
    %c0_38 = arith.constant 0 : index
    %83 = vector.load %arg15[%c0_37, %c0_38] : memref<1x32xf32, #tpu.memory_space<vmem>>, vector<1x32xf32>
    %cst_39 = arith.constant dense<0.000000e+00> : vector<32xf32>
    %84 = vector.multi_reduction <add>, %81, %cst_39 [1] : vector<32x32xf32> to vector<32xf32>
    %85 = vector.shape_cast %84 : vector<32xf32> to vector<32x1xf32>
    %cst_40 = arith.constant 3.200000e+01 : f32
    %86 = vector.broadcast %cst_40 : f32 to vector<32x1xf32>
    %87 = arith.divf %85, %86 : vector<32x1xf32>
    %88 = vector.broadcast %87 : vector<32x1xf32> to vector<32x32xf32>
    %89 = arith.subf %81, %88 : vector<32x32xf32>
    %90 = arith.mulf %89, %89 : vector<32x32xf32>
    %cst_41 = arith.constant dense<0.000000e+00> : vector<32xf32>
    %91 = vector.multi_reduction <add>, %90, %cst_41 [1] : vector<32x32xf32> to vector<32xf32>
    %92 = vector.shape_cast %91 : vector<32xf32> to vector<32x1xf32>
    %cst_42 = arith.constant 3.200000e+01 : f32
    %93 = vector.broadcast %cst_42 : f32 to vector<32x1xf32>
    %94 = arith.divf %92, %93 : vector<32x1xf32>
    %95 = vector.broadcast %87 : vector<32x1xf32> to vector<32x32xf32>
    %96 = arith.subf %81, %95 : vector<32x32xf32>
    %cst_43 = arith.constant 9.99999993E-9 : f32
    %97 = vector.broadcast %cst_43 : f32 to vector<32x1xf32>
    %98 = arith.addf %94, %97 : vector<32x1xf32>
    %99 = math.rsqrt %98 : vector<32x1xf32>
    %100 = vector.broadcast %99 : vector<32x1xf32> to vector<32x32xf32>
    %101 = arith.mulf %96, %100 : vector<32x32xf32>
    %102 = vector.broadcast %82 : vector<1x32xf32> to vector<32x32xf32>
    %103 = arith.mulf %101, %102 : vector<32x32xf32>
    %104 = vector.broadcast %83 : vector<1x32xf32> to vector<32x32xf32>
    %105 = arith.addf %103, %104 : vector<32x32xf32>
    %c0_44 = arith.constant 0 : index
    %c0_45 = arith.constant 0 : index
    %106 = vector.load %arg16[%c0_44, %c0_45] : memref<32x32xf32, #tpu.memory_space<vmem>>, vector<32x32xf32>
    %cst_46 = arith.constant dense<0.000000e+00> : vector<32x32xf32>
    %107 = tpu.matmul %105, %106, %cst_46 {dimension_numbers = #tpu.dot_dimension_numbers<[1], [0], [0], [1], [0, 0, 1, 1], [], []>} : vector<32x32xf32>, vector<32x32xf32>, vector<32x32xf32> -> vector<32x32xf32>
    %c0_47 = arith.constant 0 : index
    %c0_48 = arith.constant 0 : index
    %108 = vector.load %arg17[%c0_47, %c0_48] : memref<1x32xf32, #tpu.memory_space<vmem>>, vector<1x32xf32>
    %109 = vector.broadcast %108 : vector<1x32xf32> to vector<32x32xf32>
    %110 = arith.addf %107, %109 : vector<32x32xf32>
    %cst_49 = arith.constant 0.000000e+00 : f32
    %111 = vector.broadcast %cst_49 : f32 to vector<32x32xf32>
    %112 = arith.maximumf %110, %111 : vector<32x32xf32>
    %c0_50 = arith.constant 0 : index
    %c0_51 = arith.constant 0 : index
    %113 = vector.load %arg18[%c0_50, %c0_51] : memref<32x32xf32, #tpu.memory_space<vmem>>, vector<32x32xf32>
    %cst_52 = arith.constant dense<0.000000e+00> : vector<32x32xf32>
    %114 = tpu.matmul %112, %113, %cst_52 {dimension_numbers = #tpu.dot_dimension_numbers<[1], [0], [0], [1], [0, 0, 1, 1], [], []>} : vector<32x32xf32>, vector<32x32xf32>, vector<32x32xf32> -> vector<32x32xf32>
    %c0_53 = arith.constant 0 : index
    %c0_54 = arith.constant 0 : index
    %115 = vector.load %arg19[%c0_53, %c0_54] : memref<1x32xf32, #tpu.memory_space<vmem>>, vector<1x32xf32>
    %116 = vector.broadcast %115 : vector<1x32xf32> to vector<32x32xf32>
    %117 = arith.addf %114, %116 : vector<32x32xf32>
    %118 = arith.addf %117, %105 : vector<32x32xf32>
    %119 = vector.shape_cast %118 : vector<32x32xf32> to vector<4x8x32xf32>
    %c0_55 = arith.constant 0 : index
    %c0_56 = arith.constant 0 : index
    %c0_57 = arith.constant 0 : index
    %120 = vector.load %arg2[%c0_55, %c0_56, %c0_57] : memref<4x8x1xf32, #tpu.memory_space<vmem>>, vector<4x8x1xf32>
    %121 = vector.broadcast %120 : vector<4x8x1xf32> to vector<4x8x32xf32>
    %122 = arith.mulf %119, %121 : vector<4x8x32xf32>
    %123 = vector.shape_cast %122 : vector<4x8x32xf32> to vector<32x32xf32>
    %c0_58 = arith.constant 0 : index
    %c0_59 = arith.constant 0 : index
    %124 = vector.load %arg20[%c0_58, %c0_59] : memref<1x32xf32, #tpu.memory_space<vmem>>, vector<1x32xf32>
    %c0_60 = arith.constant 0 : index
    %c0_61 = arith.constant 0 : index
    %125 = vector.load %arg21[%c0_60, %c0_61] : memref<1x32xf32, #tpu.memory_space<vmem>>, vector<1x32xf32>
    %cst_62 = arith.constant dense<0.000000e+00> : vector<32xf32>
    %126 = vector.multi_reduction <add>, %123, %cst_62 [1] : vector<32x32xf32> to vector<32xf32>
    %127 = vector.shape_cast %126 : vector<32xf32> to vector<32x1xf32>
    %cst_63 = arith.constant 3.200000e+01 : f32
    %128 = vector.broadcast %cst_63 : f32 to vector<32x1xf32>
    %129 = arith.divf %127, %128 : vector<32x1xf32>
    %130 = vector.broadcast %129 : vector<32x1xf32> to vector<32x32xf32>
    %131 = arith.subf %123, %130 : vector<32x32xf32>
    %132 = arith.mulf %131, %131 : vector<32x32xf32>
    %cst_64 = arith.constant dense<0.000000e+00> : vector<32xf32>
    %133 = vector.multi_reduction <add>, %132, %cst_64 [1] : vector<32x32xf32> to vector<32xf32>
    %134 = vector.shape_cast %133 : vector<32xf32> to vector<32x1xf32>
    %cst_65 = arith.constant 3.200000e+01 : f32
    %135 = vector.broadcast %cst_65 : f32 to vector<32x1xf32>
    %136 = arith.divf %134, %135 : vector<32x1xf32>
    %137 = vector.broadcast %129 : vector<32x1xf32> to vector<32x32xf32>
    %138 = arith.subf %123, %137 : vector<32x32xf32>
    %cst_66 = arith.constant 9.99999993E-9 : f32
    %139 = vector.broadcast %cst_66 : f32 to vector<32x1xf32>
    %140 = arith.addf %136, %139 : vector<32x1xf32>
    %141 = math.rsqrt %140 : vector<32x1xf32>
    %142 = vector.broadcast %141 : vector<32x1xf32> to vector<32x32xf32>
    %143 = arith.mulf %138, %142 : vector<32x32xf32>
    %144 = vector.broadcast %124 : vector<1x32xf32> to vector<32x32xf32>
    %145 = arith.mulf %143, %144 : vector<32x32xf32>
    %146 = vector.broadcast %125 : vector<1x32xf32> to vector<32x32xf32>
    %147 = arith.addf %145, %146 : vector<32x32xf32>
    %148 = vector.shape_cast %147 : vector<32x32xf32> to vector<4x8x32xf32>
    %c0_67 = arith.constant 0 : index
    %c0_68 = arith.constant 0 : index
    %c0_69 = arith.constant 0 : index
    %149 = vector.load %arg4[%c0_67, %c0_68, %c0_69] : memref<4x8x32xf32, #tpu.memory_space<vmem>>, vector<4x8x32xf32>
    %150 = arith.mulf %148, %149 : vector<4x8x32xf32>
    %cst_70 = arith.constant dense<0.000000e+00> : vector<4x8xf32>
    %151 = vector.multi_reduction <add>, %150, %cst_70 [2] : vector<4x8x32xf32> to vector<4x8xf32>
    %c0_71 = arith.constant 0 : index
    %c0_72 = arith.constant 0 : index
    %c0_73 = arith.constant 0 : index
    %152 = vector.load %arg5[%c0_71, %c0_72, %c0_73] : memref<4x8x32xf32, #tpu.memory_space<vmem>>, vector<4x8x32xf32>
    %153 = arith.mulf %148, %152 : vector<4x8x32xf32>
    %cst_74 = arith.constant dense<0.000000e+00> : vector<4x8xf32>
    %154 = vector.multi_reduction <add>, %153, %cst_74 [2] : vector<4x8x32xf32> to vector<4x8xf32>
    %155 = tpu.concatenate %151, %154 in 1 : vector<4x8xf32>, vector<4x8xf32> -> vector<4x16xf32>
    %156 = tpu.transpose %155, [1, 0] : vector<4x16xf32> -> vector<16x4xf32>
    %c0_75 = arith.constant 0 : index
    %c0_76 = arith.constant 0 : index
    %c0_77 = arith.constant 0 : index
    %157 = vector.load %arg22[%c0_75, %c0_76, %c0_77] : memref<1x16x4xf32, #tpu.memory_space<vmem>>, vector<1x16x4xf32>
    %158 = vector.shape_cast %157 : vector<1x16x4xf32> to vector<16x4xf32>
    %159 = vector.shape_cast %156 : vector<16x4xf32> to vector<1x16x4xf32>
    tpu.vector_store %arg22[%c0_75, %c0_76, %c0_77], %159 {strides = array<i32>} : memref<1x16x4xf32, #tpu.memory_space<vmem>>, vector<1x16x4xf32>,
    return
  }
  func.func @transform_0(%arg0: i32) -> (i32, i32, i32) {
    %c0_i32 = arith.constant 0 : i32
    %c0_i32_0 = arith.constant 0 : i32
    %c0_i32_1 = arith.constant 0 : i32
    return %arg0, %c0_i32, %c0_i32_0 : i32, i32, i32
  }
  func.func @transform_1(%arg0: i32) -> (i32, i32, i32) {
    %c0_i32 = arith.constant 0 : i32
    %c0_i32_0 = arith.constant 0 : i32
    %c0_i32_1 = arith.constant 0 : i32
    return %arg0, %c0_i32, %c0_i32_0 : i32, i32, i32
  }
  func.func @transform_2(%arg0: i32) -> (i32, i32) {
    %c0_i32 = arith.constant 0 : i32
    %c0_i32_0 = arith.constant 0 : i32
    %c0_i32_1 = arith.constant 0 : i32
    return %c0_i32, %c0_i32_0 : i32, i32
  }
  func.func @transform_3(%arg0: i32) -> (i32, i32, i32) {
    %c0_i32 = arith.constant 0 : i32
    %c0_i32_0 = arith.constant 0 : i32
    %c0_i32_1 = arith.constant 0 : i32
    return %arg0, %c0_i32, %c0_i32_0 : i32, i32, i32
  }
  func.func @transform_4(%arg0: i32) -> (i32, i32, i32) {
    %c0_i32 = arith.constant 0 : i32
    %c0_i32_0 = arith.constant 0 : i32
    %c0_i32_1 = arith.constant 0 : i32
    return %arg0, %c0_i32, %c0_i32_0 : i32, i32, i32
  }
  func.func @transform_5(%arg0: i32) -> (i32, i32) {
    %c0_i32 = arith.constant 0 : i32
    %c0_i32_0 = arith.constant 0 : i32
    %c0_i32_1 = arith.constant 0 : i32
    return %c0_i32, %c0_i32_0 : i32, i32
  }
  func.func @transform_6(%arg0: i32) -> (i32, i32) {
    %c0_i32 = arith.constant 0 : i32
    %c0_i32_0 = arith.constant 0 : i32
    %c0_i32_1 = arith.constant 0 : i32
    return %c0_i32, %c0_i32_0 : i32, i32
  }
  func.func @transform_7(%arg0: i32) -> (i32, i32) {
    %c0_i32 = arith.constant 0 : i32
    %c0_i32_0 = arith.constant 0 : i32
    %c0_i32_1 = arith.constant 0 : i32
    return %c0_i32, %c0_i32_0 : i32, i32
  }
  func.func @transform_8(%arg0: i32) -> (i32, i32) {
    %c0_i32 = arith.constant 0 : i32
    %c0_i32_0 = arith.constant 0 : i32
    %c0_i32_1 = arith.constant 0 : i32
    return %c0_i32, %c0_i32_0 : i32, i32
  }
  func.func @transform_9(%arg0: i32) -> (i32, i32) {
    %c0_i32 = arith.constant 0 : i32
    %c0_i32_0 = arith.constant 0 : i32
    %c0_i32_1 = arith.constant 0 : i32
    return %c0_i32, %c0_i32_0 : i32, i32
  }
  func.func @transform_10(%arg0: i32) -> (i32, i32) {
    %c0_i32 = arith.constant 0 : i32
    %c0_i32_0 = arith.constant 0 : i32
    %c0_i32_1 = arith.constant 0 : i32
    return %c0_i32, %c0_i32_0 : i32, i32
  }
  func.func @transform_11(%arg0: i32) -> (i32, i32) {
    %c0_i32 = arith.constant 0 : i32
    %c0_i32_0 = arith.constant 0 : i32
    %c0_i32_1 = arith.constant 0 : i32
    return %c0_i32, %c0_i32_0 : i32, i32
  }
  func.func @transform_12(%arg0: i32) -> (i32, i32) {
    %c0_i32 = arith.constant 0 : i32
    %c0_i32_0 = arith.constant 0 : i32
    %c0_i32_1 = arith.constant 0 : i32
    return %c0_i32, %c0_i32_0 : i32, i32
  }
  func.func @transform_13(%arg0: i32) -> (i32, i32) {
    %c0_i32 = arith.constant 0 : i32
    %c0_i32_0 = arith.constant 0 : i32
    %c0_i32_1 = arith.constant 0 : i32
    return %c0_i32, %c0_i32_0 : i32, i32
  }
  func.func @transform_14(%arg0: i32) -> (i32, i32) {
    %c0_i32 = arith.constant 0 : i32
    %c0_i32_0 = arith.constant 0 : i32
    %c0_i32_1 = arith.constant 0 : i32
    return %c0_i32, %c0_i32_0 : i32, i32
  }
  func.func @transform_15(%arg0: i32) -> (i32, i32) {
    %c0_i32 = arith.constant 0 : i32
    %c0_i32_0 = arith.constant 0 : i32
    %c0_i32_1 = arith.constant 0 : i32
    return %c0_i32, %c0_i32_0 : i32, i32
  }
  func.func @transform_16(%arg0: i32) -> (i32, i32) {
    %c0_i32 = arith.constant 0 : i32
    %c0_i32_0 = arith.constant 0 : i32
    %c0_i32_1 = arith.constant 0 : i32
    return %c0_i32, %c0_i32_0 : i32, i32
  }
  func.func @transform_17(%arg0: i32) -> (i32, i32) {
    %c0_i32 = arith.constant 0 : i32
    %c0_i32_0 = arith.constant 0 : i32
    %c0_i32_1 = arith.constant 0 : i32
    return %c0_i32, %c0_i32_0 : i32, i32
  }
  func.func @transform_18(%arg0: i32) -> (i32, i32) {
    %c0_i32 = arith.constant 0 : i32
    %c0_i32_0 = arith.constant 0 : i32
    %c0_i32_1 = arith.constant 0 : i32
    return %c0_i32, %c0_i32_0 : i32, i32
  }
  func.func @transform_19(%arg0: i32) -> (i32, i32) {
    %c0_i32 = arith.constant 0 : i32
    %c0_i32_0 = arith.constant 0 : i32
    %c0_i32_1 = arith.constant 0 : i32
    return %c0_i32, %c0_i32_0 : i32, i32
  }
  func.func @transform_20(%arg0: i32) -> (i32, i32) {
    %c0_i32 = arith.constant 0 : i32
    %c0_i32_0 = arith.constant 0 : i32
    %c0_i32_1 = arith.constant 0 : i32
    return %c0_i32, %c0_i32_0 : i32, i32
  }
  func.func @transform_21(%arg0: i32) -> (i32, i32, i32) {
    %c0_i32 = arith.constant 0 : i32
    %c0_i32_0 = arith.constant 0 : i32
    %c0_i32_1 = arith.constant 0 : i32
    return %arg0, %c0_i32, %c0_i32_0 : i32, i32, i32
  }
}

</mosaic_0001>

<llo_original>
// kernel: tpu_custom_call.1
$region0: #{tpu_custom_call.1}
  #allocation0 [shape = 'u32[]', space=smem, size = 0x4, offset = 0x4, fixed_abs, tag = 'smem constant byte address 0x4 - core index']
  #allocation1 [shape = 'u32[144,128]{1,0:T(1,128)}', space=vmem, size = 0x12000, scoped, tag = 'internal scratch']
  %s0 = inlined_call_operand.vmem [shape: f32[8,8,32], index: 0, kind: input, shape index: {}]
  %s1 = inlined_call_operand.vmem [shape: f32[8,8,1], index: 1, kind: input, shape index: {}]
  %s2 = inlined_call_operand.hbm [shape: f32[8,8], index: 2, kind: input, shape index: {}]
  %s3 = inlined_call_operand.hbm [shape: f32[8,8,32], index: 3, kind: input, shape index: {}]
  %s4 = inlined_call_operand.hbm [shape: f32[8,8,32], index: 4, kind: input, shape index: {}]
  %s5 = inlined_call_operand.hbm [shape: f32[1,32], index: 5, kind: input, shape index: {}]
  %s6 = inlined_call_operand.hbm [shape: f32[1,32], index: 6, kind: input, shape index: {}]
  %s7 = inlined_call_operand.vmem [shape: f32[32,32], index: 7, kind: input, shape index: {}]
  %s8 = inlined_call_operand.hbm [shape: f32[1,32], index: 8, kind: input, shape index: {}]
  %s9 = inlined_call_operand.hbm [shape: f32[32,64], index: 9, kind: input, shape index: {}]
  %s10 = inlined_call_operand.hbm [shape: f32[1,64], index: 10, kind: input, shape index: {}]
  %s11 = inlined_call_operand.hbm [shape: f32[32,32], index: 11, kind: input, shape index: {}]
  %s12 = inlined_call_operand.hbm [shape: f32[1,32], index: 12, kind: input, shape index: {}]
  %s13 = inlined_call_operand.hbm [shape: f32[1,32], index: 13, kind: input, shape index: {}]
  %s14 = inlined_call_operand.hbm [shape: f32[1,32], index: 14, kind: input, shape index: {}]
  %s15 = inlined_call_operand.vmem [shape: f32[32,32], index: 15, kind: input, shape index: {}]
  %s16 = inlined_call_operand.vmem [shape: f32[1,32], index: 16, kind: input, shape index: {}]
  %s17 = inlined_call_operand.hbm [shape: f32[32,32], index: 17, kind: input, shape index: {}]
  %s18 = inlined_call_operand.vmem [shape: f32[1,32], index: 18, kind: input, shape index: {}]
  %s19 = inlined_call_operand.vmem [shape: f32[1,32], index: 19, kind: input, shape index: {}]
  %s20 = inlined_call_operand.vmem [shape: f32[1,32], index: 20, kind: input, shape index: {}]
  %s21 = inlined_call_operand.vmem [shape: f32[2,16,4], index: 21, kind: output, shape index: {}]
  %s22 = sld [smem:[#allocation0]]
  $region169: #{tpu_custom_call.1} parent=0
    _
  %s24 = ssub.s32 1, %s22
  %s25 = scalar_select 0, %s24, %s22
  $region1: #{tpu_custom_call.1} parent=0
    #allocation2 [shape = 'u8[4096]{0}', space=vmem, size = 0x1000, scoped, tag = 'input window, operand 2, single buffered']
    #allocation3 [shape = 's32[2]{0}', space=sflag, size = 0x8, scoped, tag = 'scoped memory for tpu_custom_call.1']
    #allocation4 [shape = 'u8[32768]{0}', space=vmem, size = 0x8000, scoped, tag = 'input window, operand 3']
    #allocation5 [shape = 's32[2]{0}', space=sflag, size = 0x8, scoped, tag = 'scoped memory for tpu_custom_call.1']
    #allocation6 [shape = 'u8[32768]{0}', space=vmem, size = 0x8000, scoped, tag = 'input window, operand 4']
    #allocation7 [shape = 'u8[512]{0}', space=vmem, size = 0x400, scoped, tag = 'input window, operand 5, single buffered']
    #allocation8 [shape = 's32[1]{0}', space=sflag, size = 0x4, scoped, tag = 'scoped memory for tpu_custom_call.1']
    #allocation9 [shape = 'u8[512]{0}', space=vmem, size = 0x400, scoped, tag = 'input window, operand 6, single buffered']
    #allocation10 [shape = 'u8[512]{0}', space=vmem, size = 0x400, scoped, tag = 'input window, operand 8, single buffered']
    #allocation11 [shape = 's32[1]{0}', space=sflag, size = 0x4, scoped, tag = 'scoped memory for tpu_custom_call.1']
    #allocation12 [shape = 'u8[16384]{0}', space=vmem, size = 0x4000, scoped, tag = 'input window, operand 9, single buffered']
    #allocation13 [shape = 'u8[512]{0}', space=vmem, size = 0x400, scoped, tag = 'input window, operand 10, single buffered']
    #allocation14 [shape = 's32[1]{0}', space=sflag, size = 0x4, scoped, tag = 'scoped memory for tpu_custom_call.1']
    #allocation15 [shape = 'u8[16384]{0}', space=vmem, size = 0x4000, scoped, tag = 'input window, operand 11, single buffered']
    #allocation16 [shape = 'u8[512]{0}', space=vmem, size = 0x400, scoped, tag = 'input window, operand 12, single buffered']
    #allocation17 [shape = 's32[1]{0}', space=sflag, size = 0x4, scoped, tag = 'scoped memory for tpu_custom_call.1']
    #allocation18 [shape = 'u8[512]{0}', space=vmem, size = 0x400, scoped, tag = 'input window, operand 13, single buffered']
    #allocation19 [shape = 'u8[512]{0}', space=vmem, size = 0x400, scoped, tag = 'input window, operand 14, single buffered']
    #allocation20 [shape = 's32[1]{0}', space=sflag, size = 0x4, scoped, tag = 'scoped memory for tpu_custom_call.1']
    #allocation21 [shape = 'u8[16384]{0}', space=vmem, size = 0x4000, scoped, tag = 'input window, operand 17, single buffered']
    %26 = vsyncpa [#allocation3], 0
    %27 = vsyncpa [#allocation5], 0
    %s28 = scalar_lea.sflag [#allocation5], 1
    %29 = vsyncpa %s28, 0
    %30 = vsyncpa [#allocation8], 0
    %31 = vsyncpa [#allocation11], 0
    %32 = vsyncpa [#allocation14], 0
    %33 = vsyncpa [#allocation17], 0
    %34 = vsyncpa [#allocation20], 0
    loop: start=0, step=1, limit=4
    $region2: #{tpu_custom_call.1} parent=1 // loop_pre_header
      _
    $region3: #{tpu_custom_call.1} parent=1 // loop_header
      %s36 = sphi 0, %s40
      %p37 = scmp.ge.s32.totalorder %s36, 4
      %s46 = sphi 0, %s48
      %s49 = sphi 0, %s46
      %s50 = sphi 0, %s49
      %s66 = sphi 0, %s50
      %s72 = sphi 0, %s74
      %s75 = sphi 0, %s72
      %s76 = sphi 0, %s75
      %s92 = sphi 0, %s76
      %s96 = sphi 0, %s96
      %s98 = sphi 0, %s96
      %s99 = sphi 0, %s98
      %s113 = sphi 0, %s99
      %s119 = sphi 0, %s121
      %s122 = sphi 0, %s119
      %s123 = sphi 0, %s122
      %s139 = sphi 0, %s123
      %s145 = sphi 0, %s147
      %s148 = sphi 0, %s145
      %s149 = sphi 0, %s148
      %s165 = sphi 0, %s149
      %s169 = sphi 0, %s169
      %s171 = sphi 0, %s169
      %s172 = sphi 0, %s171
      %s186 = sphi 0, %s172
      %s190 = sphi 0, %s190
      %s192 = sphi 0, %s190
      %s193 = sphi 0, %s192
      %s207 = sphi 0, %s193
      %s211 = sphi 0, %s211
      %s213 = sphi 0, %s211
      %s214 = sphi 0, %s213
      %s228 = sphi 0, %s214
      %s232 = sphi 0, %s232
      %s234 = sphi 0, %s232
      %s235 = sphi 0, %s234
      %s249 = sphi 0, %s235
      %s253 = sphi 0, %s253
      %s255 = sphi 0, %s253
      %s256 = sphi 0, %s255
      %s270 = sphi 0, %s256
      %s274 = sphi 0, %s274
      %s276 = sphi 0, %s274
      %s277 = sphi 0, %s276
      %s291 = sphi 0, %s277
      %s295 = sphi 0, %s295
      %s297 = sphi 0, %s295
      %s298 = sphi 0, %s297
      %s312 = sphi 0, %s298
      %s316 = sphi 0, %s316
      %s318 = sphi 0, %s316
      %s319 = sphi 0, %s318
      %s333 = sphi 0, %s319
      %s337 = sphi 0, %s337
      %s339 = sphi 0, %s337
      %s340 = sphi 0, %s339
      %s354 = sphi 0, %s340
      %s358 = sphi 0, %s358
      %s360 = sphi 0, %s358
      %s361 = sphi 0, %s360
      %s375 = sphi 0, %s361
      %s379 = sphi 0, %s379
      %s381 = sphi 0, %s379
      %s382 = sphi 0, %s381
      %s396 = sphi 0, %s382
      %s400 = sphi 0, %s400
      %s402 = sphi 0, %s400
      %s403 = sphi 0, %s402
      %s417 = sphi 0, %s403
      %s421 = sphi 0, %s421
      %s423 = sphi 0, %s421
      %s424 = sphi 0, %s423
      %s438 = sphi 0, %s424
      %s442 = sphi 0, %s442
      %s444 = sphi 0, %s442
      %s445 = sphi 0, %s444
      %s459 = sphi 0, %s445
      %s463 = sphi 0, %s463
      %s465 = sphi 0, %s463
      %s466 = sphi 0, %s465
      %s480 = sphi 0, %s466
      %s484 = sphi 0, %s484
      %s486 = sphi 0, %s484
      %s487 = sphi 0, %s486
      %s501 = sphi 0, %s487
      %s507 = sphi 0, %s509
      %s510 = sphi 0, %s507
      %s511 = sphi 0, %s510
      %s527 = sphi 0, %s511
    $region4: #{tpu_custom_call.1} parent=1 // loop_header_branch
      %39 = sbr.rel (%p37) target = $region8
    $region5: #{tpu_custom_call.1} parent=1 // loop_body
      %s41 = ssub.s32 %s36, 1
      %s42 = ssub.s32 %s36, 2
      %s43 = sadd.s32 %s36, 1
      %s44 = ssub.s32 %s36, %s43
      %p45 = scmp.eq.s32.totalorder %s44, 0
      %s47 = sadd.s32 %s46, 1
      %s48 = scalar_select %p45, %s46, %s47
      %p51 = pneg %p45
      %p52 = scmp.eq.s32.totalorder %s36, 1
      %p53 = por %p51, %p52
      %p54 = scmp.ne.s32.totalorder %s46, %s49
      %p55 = scmp.eq.s32.totalorder %s36, 0
      %p56 = por %p54, %p55
      %p57 = scmp.ne.s32.totalorder %s46, %s49
      %p58 = scmp.eq.s32.totalorder %s41, 1
      %p59 = por %p57, %p58
      %p60 = scmp.ne.s32.totalorder %s49, %s50
      %p61 = scmp.eq.s32.totalorder %s41, 0
      %p62 = por %p60, %p61
      %p63 = scmp.ne.s32.totalorder %s49, %s50
      %p64 = scmp.eq.s32.totalorder %s42, 1
      %p65 = por %p63, %p64
      %p67 = scmp.ne.s32.totalorder %s50, %s66
      %p68 = scmp.eq.s32.totalorder %s42, 0
      %p69 = por %p67, %p68
      %s70 = ssub.s32 %s36, %s43
      %p71 = scmp.eq.s32.totalorder %s70, 0
      %s73 = sadd.s32 %s72, 1
      %s74 = scalar_select %p71, %s72, %s73
      %p77 = pneg %p71
      %p78 = scmp.eq.s32.totalorder %s36, 1
      %p79 = por %p77, %p78
      %p80 = scmp.ne.s32.totalorder %s72, %s75
      %p81 = scmp.eq.s32.totalorder %s36, 0
      %p82 = por %p80, %p81
      %p83 = scmp.ne.s32.totalorder %s72, %s75
      %p84 = scmp.eq.s32.totalorder %s41, 1
      %p85 = por %p83, %p84
      %p86 = scmp.ne.s32.totalorder %s75, %s76
      %p87 = scmp.eq.s32.totalorder %s41, 0
      %p88 = por %p86, %p87
      %p89 = scmp.ne.s32.totalorder %s75, %s76
      %p90 = scmp.eq.s32.totalorder %s42, 1
      %p91 = por %p89, %p90
      %p93 = scmp.ne.s32.totalorder %s76, %s92
      %p94 = scmp.eq.s32.totalorder %s42, 0
      %p95 = por %p93, %p94
      %s97 = sadd.s32 %s96, 1
      %p100 = scmp.eq.s32.totalorder %s36, 1
      %p101 = scmp.ne.s32.totalorder %s96, %s98
      %p102 = scmp.eq.s32.totalorder %s36, 0
      %p103 = por %p101, %p102
      %p104 = scmp.ne.s32.totalorder %s96, %s98
      %p105 = scmp.eq.s32.totalorder %s41, 1
      %p106 = por %p104, %p105
      %p107 = scmp.ne.s32.totalorder %s98, %s99
      %p108 = scmp.eq.s32.totalorder %s41, 0
      %p109 = por %p107, %p108
      %p110 = scmp.ne.s32.totalorder %s98, %s99
      %p111 = scmp.eq.s32.totalorder %s42, 1
      %p112 = por %p110, %p111
      %p114 = scmp.ne.s32.totalorder %s99, %s113
      %p115 = scmp.eq.s32.totalorder %s42, 0
      %p116 = por %p114, %p115
      %s117 = ssub.s32 %s36, %s43
      %p118 = scmp.eq.s32.totalorder %s117, 0
      %s120 = sadd.s32 %s119, 1
      %s121 = scalar_select %p118, %s119, %s120
      %p124 = pneg %p118
      %p125 = scmp.eq.s32.totalorder %s36, 1
      %p126 = por %p124, %p125
      %p127 = scmp.ne.s32.totalorder %s119, %s122
      %p128 = scmp.eq.s32.totalorder %s36, 0
      %p129 = por %p127, %p128
      %p130 = scmp.ne.s32.totalorder %s119, %s122
      %p131 = scmp.eq.s32.totalorder %s41, 1
      %p132 = por %p130, %p131
      %p133 = scmp.ne.s32.totalorder %s122, %s123
      %p134 = scmp.eq.s32.totalorder %s41, 0
      %p135 = por %p133, %p134
      %p136 = scmp.ne.s32.totalorder %s122, %s123
      %p137 = scmp.eq.s32.totalorder %s42, 1
      %p138 = por %p136, %p137
      %p140 = scmp.ne.s32.totalorder %s123, %s139
      %p141 = scmp.eq.s32.totalorder %s42, 0
      %p142 = por %p140, %p141
      %s143 = ssub.s32 %s36, %s43
      %p144 = scmp.eq.s32.totalorder %s143, 0
      %s146 = sadd.s32 %s145, 1
      %s147 = scalar_select %p144, %s145, %s146
      %p150 = pneg %p144
      %p151 = scmp.eq.s32.totalorder %s36, 1
      %p152 = por %p150, %p151
      %p153 = scmp.ne.s32.totalorder %s145, %s148
      %p154 = scmp.eq.s32.totalorder %s36, 0
      %p155 = por %p153, %p154
      %p156 = scmp.ne.s32.totalorder %s145, %s148
      %p157 = scmp.eq.s32.totalorder %s41, 1
      %p158 = por %p156, %p157
      %p159 = scmp.ne.s32.totalorder %s148, %s149
      %p160 = scmp.eq.s32.totalorder %s41, 0
      %p161 = por %p159, %p160
      %p162 = scmp.ne.s32.totalorder %s148, %s149
      %p163 = scmp.eq.s32.totalorder %s42, 1
      %p164 = por %p162, %p163
      %p166 = scmp.ne.s32.totalorder %s149, %s165
      %p167 = scmp.eq.s32.totalorder %s42, 0
      %p168 = por %p166, %p167
      %s170 = sadd.s32 %s169, 1
      %p173 = scmp.eq.s32.totalorder %s36, 1
      %p174 = scmp.ne.s32.totalorder %s169, %s171
      %p175 = scmp.eq.s32.totalorder %s36, 0
      %p176 = por %p174, %p175
      %p177 = scmp.ne.s32.totalorder %s169, %s171
      %p178 = scmp.eq.s32.totalorder %s41, 1
      %p179 = por %p177, %p178
      %p180 = scmp.ne.s32.totalorder %s171, %s172
      %p181 = scmp.eq.s32.totalorder %s41, 0
      %p182 = por %p180, %p181
      %p183 = scmp.ne.s32.totalorder %s171, %s172
      %p184 = scmp.eq.s32.totalorder %s42, 1
      %p185 = por %p183, %p184
      %p187 = scmp.ne.s32.totalorder %s172, %s186
      %p188 = scmp.eq.s32.totalorder %s42, 0
      %p189 = por %p187, %p188
      %s191 = sadd.s32 %s190, 1
      %p194 = scmp.eq.s32.totalorder %s36, 1
      %p195 = scmp.ne.s32.totalorder %s190, %s192
      %p196 = scmp.eq.s32.totalorder %s36, 0
      %p197 = por %p195, %p196
      %p198 = scmp.ne.s32.totalorder %s190, %s192
      %p199 = scmp.eq.s32.totalorder %s41, 1
      %p200 = por %p198, %p199
      %p201 = scmp.ne.s32.totalorder %s192, %s193
      %p202 = scmp.eq.s32.totalorder %s41, 0
      %p203 = por %p201, %p202
      %p204 = scmp.ne.s32.totalorder %s192, %s193
      %p205 = scmp.eq.s32.totalorder %s42, 1
      %p206 = por %p204, %p205
      %p208 = scmp.ne.s32.totalorder %s193, %s207
      %p209 = scmp.eq.s32.totalorder %s42, 0
      %p210 = por %p208, %p209
      %s212 = sadd.s32 %s211, 1
      %p215 = scmp.eq.s32.totalorder %s36, 1
      %p216 = scmp.ne.s32.totalorder %s211, %s213
      %p217 = scmp.eq.s32.totalorder %s36, 0
      %p218 = por %p216, %p217
      %p219 = scmp.ne.s32.totalorder %s211, %s213
      %p220 = scmp.eq.s32.totalorder %s41, 1
      %p221 = por %p219, %p220
      %p222 = scmp.ne.s32.totalorder %s213, %s214
      %p223 = scmp.eq.s32.totalorder %s41, 0
      %p224 = por %p222, %p223
      %p225 = scmp.ne.s32.totalorder %s213, %s214
      %p226 = scmp.eq.s32.totalorder %s42, 1
      %p227 = por %p225, %p226
      %p229 = scmp.ne.s32.totalorder %s214, %s228
      %p230 = scmp.eq.s32.totalorder %s42, 0
      %p231 = por %p229, %p230
      %s233 = sadd.s32 %s232, 1
      %p236 = scmp.eq.s32.totalorder %s36, 1
      %p237 = scmp.ne.s32.totalorder %s232, %s234
      %p238 = scmp.eq.s32.totalorder %s36, 0
      %p239 = por %p237, %p238
      %p240 = scmp.ne.s32.totalorder %s232, %s234
      %p241 = scmp.eq.s32.totalorder %s41, 1
      %p242 = por %p240, %p241
      %p243 = scmp.ne.s32.totalorder %s234, %s235
      %p244 = scmp.eq.s32.totalorder %s41, 0
      %p245 = por %p243, %p244
      %p246 = scmp.ne.s32.totalorder %s234, %s235
      %p247 = scmp.eq.s32.totalorder %s42, 1
      %p248 = por %p246, %p247
      %p250 = scmp.ne.s32.totalorder %s235, %s249
      %p251 = scmp.eq.s32.totalorder %s42, 0
      %p252 = por %p250, %p251
      %s254 = sadd.s32 %s253, 1
      %p257 = scmp.eq.s32.totalorder %s36, 1
      %p258 = scmp.ne.s32.totalorder %s253, %s255
      %p259 = scmp.eq.s32.totalorder %s36, 0
      %p260 = por %p258, %p259
      %p261 = scmp.ne.s32.totalorder %s253, %s255
      %p262 = scmp.eq.s32.totalorder %s41, 1
      %p263 = por %p261, %p262
      %p264 = scmp.ne.s32.totalorder %s255, %s256
      %p265 = scmp.eq.s32.totalorder %s41, 0
      %p266 = por %p264, %p265
      %p267 = scmp.ne.s32.totalorder %s255, %s256
      %p268 = scmp.eq.s32.totalorder %s42, 1
      %p269 = por %p267, %p268
      %p271 = scmp.ne.s32.totalorder %s256, %s270
      %p272 = scmp.eq.s32.totalorder %s42, 0
      %p273 = por %p271, %p272
      %s275 = sadd.s32 %s274, 1
      %p278 = scmp.eq.s32.totalorder %s36, 1
      %p279 = scmp.ne.s32.totalorder %s274, %s276
      %p280 = scmp.eq.s32.totalorder %s36, 0
      %p281 = por %p279, %p280
      %p282 = scmp.ne.s32.totalorder %s274, %s276
      %p283 = scmp.eq.s32.totalorder %s41, 1
      %p284 = por %p282, %p283
      %p285 = scmp.ne.s32.totalorder %s276, %s277
      %p286 = scmp.eq.s32.totalorder %s41, 0
      %p287 = por %p285, %p286
      %p288 = scmp.ne.s32.totalorder %s276, %s277
      %p289 = scmp.eq.s32.totalorder %s42, 1
      %p290 = por %p288, %p289
      %p292 = scmp.ne.s32.totalorder %s277, %s291
      %p293 = scmp.eq.s32.totalorder %s42, 0
      %p294 = por %p292, %p293
      %s296 = sadd.s32 %s295, 1
      %p299 = scmp.eq.s32.totalorder %s36, 1
      %p300 = scmp.ne.s32.totalorder %s295, %s297
      %p301 = scmp.eq.s32.totalorder %s36, 0
      %p302 = por %p300, %p301
      %p303 = scmp.ne.s32.totalorder %s295, %s297
      %p304 = scmp.eq.s32.totalorder %s41, 1
      %p305 = por %p303, %p304
      %p306 = scmp.ne.s32.totalorder %s297, %s298
      %p307 = scmp.eq.s32.totalorder %s41, 0
      %p308 = por %p306, %p307
      %p309 = scmp.ne.s32.totalorder %s297, %s298
      %p310 = scmp.eq.s32.totalorder %s42, 1
      %p311 = por %p309, %p310
      %p313 = scmp.ne.s32.totalorder %s298, %s312
      %p314 = scmp.eq.s32.totalorder %s42, 0
      %p315 = por %p313, %p314
      %s317 = sadd.s32 %s316, 1
      %p320 = scmp.eq.s32.totalorder %s36, 1
      %p321 = scmp.ne.s32.totalorder %s316, %s318
      %p322 = scmp.eq.s32.totalorder %s36, 0
      %p323 = por %p321, %p322
      %p324 = scmp.ne.s32.totalorder %s316, %s318
      %p325 = scmp.eq.s32.totalorder %s41, 1
      %p326 = por %p324, %p325
      %p327 = scmp.ne.s32.totalorder %s318, %s319
      %p328 = scmp.eq.s32.totalorder %s41, 0
      %p329 = por %p327, %p328
      %p330 = scmp.ne.s32.totalorder %s318, %s319
      %p331 = scmp.eq.s32.totalorder %s42, 1
      %p332 = por %p330, %p331
      %p334 = scmp.ne.s32.totalorder %s319, %s333
      %p335 = scmp.eq.s32.totalorder %s42, 0
      %p336 = por %p334, %p335
      %s338 = sadd.s32 %s337, 1
      %p341 = scmp.eq.s32.totalorder %s36, 1
      %p342 = scmp.ne.s32.totalorder %s337, %s339
      %p343 = scmp.eq.s32.totalorder %s36, 0
      %p344 = por %p342, %p343
      %p345 = scmp.ne.s32.totalorder %s337, %s339
      %p346 = scmp.eq.s32.totalorder %s41, 1
      %p347 = por %p345, %p346
      %p348 = scmp.ne.s32.totalorder %s339, %s340
      %p349 = scmp.eq.s32.totalorder %s41, 0
      %p350 = por %p348, %p349
      %p351 = scmp.ne.s32.totalorder %s339, %s340
      %p352 = scmp.eq.s32.totalorder %s42, 1
      %p353 = por %p351, %p352
      %p355 = scmp.ne.s32.totalorder %s340, %s354
      %p356 = scmp.eq.s32.totalorder %s42, 0
      %p357 = por %p355, %p356
      %s359 = sadd.s32 %s358, 1
      %p362 = scmp.eq.s32.totalorder %s36, 1
      %p363 = scmp.ne.s32.totalorder %s358, %s360
      %p364 = scmp.eq.s32.totalorder %s36, 0
      %p365 = por %p363, %p364
      %p366 = scmp.ne.s32.totalorder %s358, %s360
      %p367 = scmp.eq.s32.totalorder %s41, 1
      %p368 = por %p366, %p367
      %p369 = scmp.ne.s32.totalorder %s360, %s361
      %p370 = scmp.eq.s32.totalorder %s41, 0
      %p371 = por %p369, %p370
      %p372 = scmp.ne.s32.totalorder %s360, %s361
      %p373 = scmp.eq.s32.totalorder %s42, 1
      %p374 = por %p372, %p373
      %p376 = scmp.ne.s32.totalorder %s361, %s375
      %p377 = scmp.eq.s32.totalorder %s42, 0
      %p378 = por %p376, %p377
      %s380 = sadd.s32 %s379, 1
      %p383 = scmp.eq.s32.totalorder %s36, 1
      %p384 = scmp.ne.s32.totalorder %s379, %s381
      %p385 = scmp.eq.s32.totalorder %s36, 0
      %p386 = por %p384, %p385
      %p387 = scmp.ne.s32.totalorder %s379, %s381
      %p388 = scmp.eq.s32.totalorder %s41, 1
      %p389 = por %p387, %p388
      %p390 = scmp.ne.s32.totalorder %s381, %s382
      %p391 = scmp.eq.s32.totalorder %s41, 0
      %p392 = por %p390, %p391
      %p393 = scmp.ne.s32.totalorder %s381, %s382
      %p394 = scmp.eq.s32.totalorder %s42, 1
      %p395 = por %p393, %p394
      %p397 = scmp.ne.s32.totalorder %s382, %s396
      %p398 = scmp.eq.s32.totalorder %s42, 0
      %p399 = por %p397, %p398
      %s401 = sadd.s32 %s400, 1
      %p404 = scmp.eq.s32.totalorder %s36, 1
      %p405 = scmp.ne.s32.totalorder %s400, %s402
      %p406 = scmp.eq.s32.totalorder %s36, 0
      %p407 = por %p405, %p406
      %p408 = scmp.ne.s32.totalorder %s400, %s402
      %p409 = scmp.eq.s32.totalorder %s41, 1
      %p410 = por %p408, %p409
      %p411 = scmp.ne.s32.totalorder %s402, %s403
      %p412 = scmp.eq.s32.totalorder %s41, 0
      %p413 = por %p411, %p412
      %p414 = scmp.ne.s32.totalorder %s402, %s403
      %p415 = scmp.eq.s32.totalorder %s42, 1
      %p416 = por %p414, %p415
      %p418 = scmp.ne.s32.totalorder %s403, %s417
      %p419 = scmp.eq.s32.totalorder %s42, 0
      %p420 = por %p418, %p419
      %s422 = sadd.s32 %s421, 1
      %p425 = scmp.eq.s32.totalorder %s36, 1
      %p426 = scmp.ne.s32.totalorder %s421, %s423
      %p427 = scmp.eq.s32.totalorder %s36, 0
      %p428 = por %p426, %p427
      %p429 = scmp.ne.s32.totalorder %s421, %s423
      %p430 = scmp.eq.s32.totalorder %s41, 1
      %p431 = por %p429, %p430
      %p432 = scmp.ne.s32.totalorder %s423, %s424
      %p433 = scmp.eq.s32.totalorder %s41, 0
      %p434 = por %p432, %p433
      %p435 = scmp.ne.s32.totalorder %s423, %s424
      %p436 = scmp.eq.s32.totalorder %s42, 1
      %p437 = por %p435, %p436
      %p439 = scmp.ne.s32.totalorder %s424, %s438
      %p440 = scmp.eq.s32.totalorder %s42, 0
      %p441 = por %p439, %p440
      %s443 = sadd.s32 %s442, 1
      %p446 = scmp.eq.s32.totalorder %s36, 1
      %p447 = scmp.ne.s32.totalorder %s442, %s444
      %p448 = scmp.eq.s32.totalorder %s36, 0
      %p449 = por %p447, %p448
      %p450 = scmp.ne.s32.totalorder %s442, %s444
      %p451 = scmp.eq.s32.totalorder %s41, 1
      %p452 = por %p450, %p451
      %p453 = scmp.ne.s32.totalorder %s444, %s445
      %p454 = scmp.eq.s32.totalorder %s41, 0
      %p455 = por %p453, %p454
      %p456 = scmp.ne.s32.totalorder %s444, %s445
      %p457 = scmp.eq.s32.totalorder %s42, 1
      %p458 = por %p456, %p457
      %p460 = scmp.ne.s32.totalorder %s445, %s459
      %p461 = scmp.eq.s32.totalorder %s42, 0
      %p462 = por %p460, %p461
      %s464 = sadd.s32 %s463, 1
      %p467 = scmp.eq.s32.totalorder %s36, 1
      %p468 = scmp.ne.s32.totalorder %s463, %s465
      %p469 = scmp.eq.s32.totalorder %s36, 0
      %p470 = por %p468, %p469
      %p471 = scmp.ne.s32.totalorder %s463, %s465
      %p472 = scmp.eq.s32.totalorder %s41, 1
      %p473 = por %p471, %p472
      %p474 = scmp.ne.s32.totalorder %s465, %s466
      %p475 = scmp.eq.s32.totalorder %s41, 0
      %p476 = por %p474, %p475
      %p477 = scmp.ne.s32.totalorder %s465, %s466
      %p478 = scmp.eq.s32.totalorder %s42, 1
      %p479 = por %p477, %p478
      %p481 = scmp.ne.s32.totalorder %s466, %s480
      %p482 = scmp.eq.s32.totalorder %s42, 0
      %p483 = por %p481, %p482
      %s485 = sadd.s32 %s484, 1
      %p488 = scmp.eq.s32.totalorder %s36, 1
      %p489 = scmp.ne.s32.totalorder %s484, %s486
      %p490 = scmp.eq.s32.totalorder %s36, 0
      %p491 = por %p489, %p490
      %p492 = scmp.ne.s32.totalorder %s484, %s486
      %p493 = scmp.eq.s32.totalorder %s41, 1
      %p494 = por %p492, %p493
      %p495 = scmp.ne.s32.totalorder %s486, %s487
      %p496 = scmp.eq.s32.totalorder %s41, 0
      %p497 = por %p495, %p496
      %p498 = scmp.ne.s32.totalorder %s486, %s487
      %p499 = scmp.eq.s32.totalorder %s42, 1
      %p500 = por %p498, %p499
      %p502 = scmp.ne.s32.totalorder %s487, %s501
      %p503 = scmp.eq.s32.totalorder %s42, 0
      %p504 = por %p502, %p503
      %s505 = ssub.s32 %s36, %s43
      %p506 = scmp.eq.s32.totalorder %s505, 0
      %s508 = sadd.s32 %s507, 1
      %s509 = scalar_select %p506, %s507, %s508
      %p512 = pneg %p506
      %p513 = scmp.eq.s32.totalorder %s36, 1
      %p514 = por %p512, %p513
      %p515 = scmp.ne.s32.totalorder %s507, %s510
      %p516 = scmp.eq.s32.totalorder %s36, 0
      %p517 = por %p515, %p516
      %p518 = scmp.ne.s32.totalorder %s507, %s510
      %p519 = scmp.eq.s32.totalorder %s41, 1
      %p520 = por %p518, %p519
      %p521 = scmp.ne.s32.totalorder %s510, %s511
      %p522 = scmp.eq.s32.totalorder %s41, 0
      %p523 = por %p521, %p522
      %p524 = scmp.ne.s32.totalorder %s510, %s511
      %p525 = scmp.eq.s32.totalorder %s42, 1
      %p526 = por %p524, %p525
      %p528 = scmp.ne.s32.totalorder %s511, %s527
      %p529 = scmp.eq.s32.totalorder %s42, 0
      %p530 = por %p528, %p529
      %p531 = scmp.le.s32.totalorder 1, %s36
      %p532 = scmp.lt.s32.totalorder %s36, 3
      %p533 = pnand %p531, %p532
      %p534 = pneg %p533
      // Predicated region
      $region9: #{tpu_custom_call.1} parent=5 // pred_check
        _
      $region10: #{tpu_custom_call.1} parent=5 // pred_check_branch
        %536 = sbr.rel (%p533) target = $region12
      $region11: #{tpu_custom_call.1} parent=5 // pred_region
        %s537 = ssub.s32 %s36, 1
        // Predicated region
        $region13: #{tpu_custom_call.1} parent=11 // pred_check
          %p538 = pneg %p109
        $region14: #{tpu_custom_call.1} parent=11 // pred_check_branch
          %540 = sbr.rel (%p538) target = $region16
        $region15: #{tpu_custom_call.1} parent=11 // pred_region
          %s542 = ssub.s32 128, 128
          %543 = vsyncadd [#allocation3], %s542
          %s545 = sshll.u32 [#allocation2], 4
          %s546 = int_to_ptr.vmem [resolvable:$true] %s545
          %548 = dma.hbm_to_vmem [thread:$0]  %s2, 128, %s546, [#allocation3]
        $region16: #{tpu_custom_call.1} parent=11 // pred_fallthru
          _
        // Predicated region
        $region17: #{tpu_custom_call.1} parent=11 // pred_check
          %p549 = pneg %p182
        $region18: #{tpu_custom_call.1} parent=11 // pred_check_branch
          %551 = sbr.rel (%p549) target = $region20
        $region19: #{tpu_custom_call.1} parent=11 // pred_region
          %s553 = ssub.s32 16, 16
          %554 = vsyncadd [#allocation8], %s553
          %s556 = sshll.u32 [#allocation7], 4
          %s557 = int_to_ptr.vmem [resolvable:$true] %s556
          %559 = dma.hbm_to_vmem [thread:$0]  %s5, 16, %s557, [#allocation8]
        $region20: #{tpu_custom_call.1} parent=11 // pred_fallthru
          _
        // Predicated region
        $region21: #{tpu_custom_call.1} parent=11 // pred_check
          %p560 = pneg %p203
        $region22: #{tpu_custom_call.1} parent=11 // pred_check_branch
          %562 = sbr.rel (%p560) target = $region24
        $region23: #{tpu_custom_call.1} parent=11 // pred_region
          %s564 = ssub.s32 16, 16
          %565 = vsyncadd [#allocation8], %s564
          %s567 = sshll.u32 [#allocation9], 4
          %s568 = int_to_ptr.vmem [resolvable:$true] %s567
          %570 = dma.hbm_to_vmem [thread:$0]  %s6, 16, %s568, [#allocation8]
        $region24: #{tpu_custom_call.1} parent=11 // pred_fallthru
          _
        // Predicated region
        $region25: #{tpu_custom_call.1} parent=11 // pred_check
          %p571 = pneg %p224
        $region26: #{tpu_custom_call.1} parent=11 // pred_check_branch
          %573 = sbr.rel (%p571) target = $region28
        $region27: #{tpu_custom_call.1} parent=11 // pred_region
          _
        $region28: #{tpu_custom_call.1} parent=11 // pred_fallthru
          _
        // Predicated region
        $region29: #{tpu_custom_call.1} parent=11 // pred_check
          %p574 = pneg %p245
        $region30: #{tpu_custom_call.1} parent=11 // pred_check_branch
          %576 = sbr.rel (%p574) target = $region32
        $region31: #{tpu_custom_call.1} parent=11 // pred_region
          %s578 = ssub.s32 16, 16
          %579 = vsyncadd [#allocation11], %s578
          %s581 = sshll.u32 [#allocation10], 4
          %s582 = int_to_ptr.vmem [resolvable:$true] %s581
          %584 = dma.hbm_to_vmem [thread:$0]  %s8, 16, %s582, [#allocation11]
        $region32: #{tpu_custom_call.1} parent=11 // pred_fallthru
          _
        // Predicated region
        $region33: #{tpu_custom_call.1} parent=11 // pred_check
          %p585 = pneg %p266
        $region34: #{tpu_custom_call.1} parent=11 // pred_check_branch
          %587 = sbr.rel (%p585) target = $region36
        $region35: #{tpu_custom_call.1} parent=11 // pred_region
          %s589 = ssub.s32 512, 512
          %590 = vsyncadd [#allocation11], %s589
          %s591 = sshll.u32 [#allocation12], 4
          %s592 = int_to_ptr.vmem [resolvable:$true] %s591
          %597 = dma.hbm_to_vmem [thread:$0]  %s9, 512, %s592, [#allocation11], 128, 128, 8
        $region36: #{tpu_custom_call.1} parent=11 // pred_fallthru
          _
        // Predicated region
        $region37: #{tpu_custom_call.1} parent=11 // pred_check
          %p598 = pneg %p287
        $region38: #{tpu_custom_call.1} parent=11 // pred_check_branch
          %600 = sbr.rel (%p598) target = $region40
        $region39: #{tpu_custom_call.1} parent=11 // pred_region
          %s602 = ssub.s32 16, 16
          %603 = vsyncadd [#allocation14], %s602
          %s605 = sshll.u32 [#allocation13], 4
          %s606 = int_to_ptr.vmem [resolvable:$true] %s605
          %608 = dma.hbm_to_vmem [thread:$0]  %s10, 16, %s606, [#allocation14]
        $region40: #{tpu_custom_call.1} parent=11 // pred_fallthru
          _
        // Predicated region
        $region41: #{tpu_custom_call.1} parent=11 // pred_check
          %p609 = pneg %p308
        $region42: #{tpu_custom_call.1} parent=11 // pred_check_branch
          %611 = sbr.rel (%p609) target = $region44
        $region43: #{tpu_custom_call.1} parent=11 // pred_region
          %s613 = ssub.s32 512, 512
          %614 = vsyncadd [#allocation14], %s613
          %s615 = sshll.u32 [#allocation15], 4
          %s616 = int_to_ptr.vmem [resolvable:$true] %s615
          %621 = dma.hbm_to_vmem [thread:$0]  %s11, 512, %s616, [#allocation14], 128, 128, 8
        $region44: #{tpu_custom_call.1} parent=11 // pred_fallthru
          _
        // Predicated region
        $region45: #{tpu_custom_call.1} parent=11 // pred_check
          %p622 = pneg %p329
        $region46: #{tpu_custom_call.1} parent=11 // pred_check_branch
          %624 = sbr.rel (%p622) target = $region48
        $region47: #{tpu_custom_call.1} parent=11 // pred_region
          %s626 = ssub.s32 16, 16
          %627 = vsyncadd [#allocation17], %s626
          %s629 = sshll.u32 [#allocation16], 4
          %s630 = int_to_ptr.vmem [resolvable:$true] %s629
          %632 = dma.hbm_to_vmem [thread:$0]  %s12, 16, %s630, [#allocation17]
        $region48: #{tpu_custom_call.1} parent=11 // pred_fallthru
          _
        // Predicated region
        $region49: #{tpu_custom_call.1} parent=11 // pred_check
          %p633 = pneg %p350
        $region50: #{tpu_custom_call.1} parent=11 // pred_check_branch
          %635 = sbr.rel (%p633) target = $region52
        $region51: #{tpu_custom_call.1} parent=11 // pred_region
          %s637 = ssub.s32 16, 16
          %638 = vsyncadd [#allocation17], %s637
          %s640 = sshll.u32 [#allocation18], 4
          %s641 = int_to_ptr.vmem [resolvable:$true] %s640
          %643 = dma.hbm_to_vmem [thread:$0]  %s13, 16, %s641, [#allocation17]
        $region52: #{tpu_custom_call.1} parent=11 // pred_fallthru
          _
        // Predicated region
        $region53: #{tpu_custom_call.1} parent=11 // pred_check
          %p644 = pneg %p371
        $region54: #{tpu_custom_call.1} parent=11 // pred_check_branch
          %646 = sbr.rel (%p644) target = $region56
        $region55: #{tpu_custom_call.1} parent=11 // pred_region
          %s648 = ssub.s32 16, 16
          %649 = vsyncadd [#allocation20], %s648
          %s651 = sshll.u32 [#allocation19], 4
          %s652 = int_to_ptr.vmem [resolvable:$true] %s651
          %654 = dma.hbm_to_vmem [thread:$0]  %s14, 16, %s652, [#allocation20]
        $region56: #{tpu_custom_call.1} parent=11 // pred_fallthru
          _
        // Predicated region
        $region57: #{tpu_custom_call.1} parent=11 // pred_check
          %p655 = pneg %p392
        $region58: #{tpu_custom_call.1} parent=11 // pred_check_branch
          %657 = sbr.rel (%p655) target = $region60
        $region59: #{tpu_custom_call.1} parent=11 // pred_region
          _
        $region60: #{tpu_custom_call.1} parent=11 // pred_fallthru
          _
        // Predicated region
        $region61: #{tpu_custom_call.1} parent=11 // pred_check
          %p658 = pneg %p413
        $region62: #{tpu_custom_call.1} parent=11 // pred_check_branch
          %660 = sbr.rel (%p658) target = $region64
        $region63: #{tpu_custom_call.1} parent=11 // pred_region
          _
        $region64: #{tpu_custom_call.1} parent=11 // pred_fallthru
          _
        // Predicated region
        $region65: #{tpu_custom_call.1} parent=11 // pred_check
          %p661 = pneg %p434
        $region66: #{tpu_custom_call.1} parent=11 // pred_check_branch
          %663 = sbr.rel (%p661) target = $region68
        $region67: #{tpu_custom_call.1} parent=11 // pred_region
          %s665 = ssub.s32 512, 512
          %666 = vsyncadd [#allocation20], %s665
          %s667 = sshll.u32 [#allocation21], 4
          %s668 = int_to_ptr.vmem [resolvable:$true] %s667
          %673 = dma.hbm_to_vmem [thread:$0]  %s17, 512, %s668, [#allocation20], 128, 128, 8
        $region68: #{tpu_custom_call.1} parent=11 // pred_fallthru
          _
        // Predicated region
        $region69: #{tpu_custom_call.1} parent=11 // pred_check
          %p674 = pneg %p455
        $region70: #{tpu_custom_call.1} parent=11 // pred_check_branch
          %676 = sbr.rel (%p674) target = $region72
        $region71: #{tpu_custom_call.1} parent=11 // pred_region
          _
        $region72: #{tpu_custom_call.1} parent=11 // pred_fallthru
          _
        // Predicated region
        $region73: #{tpu_custom_call.1} parent=11 // pred_check
          %p677 = pneg %p476
        $region74: #{tpu_custom_call.1} parent=11 // pred_check_branch
          %679 = sbr.rel (%p677) target = $region76
        $region75: #{tpu_custom_call.1} parent=11 // pred_region
          _
        $region76: #{tpu_custom_call.1} parent=11 // pred_fallthru
          _
        // Predicated region
        $region77: #{tpu_custom_call.1} parent=11 // pred_check
          %p680 = pneg %p497
        $region78: #{tpu_custom_call.1} parent=11 // pred_check_branch
          %682 = sbr.rel (%p680) target = $region80
        $region79: #{tpu_custom_call.1} parent=11 // pred_region
          _
        $region80: #{tpu_custom_call.1} parent=11 // pred_fallthru
          _
      $region12: #{tpu_custom_call.1} parent=5 // pred_fallthru
        _
      %p683 = scmp.lt.s32.totalorder %s36, 2
      // Predicated region
      $region81: #{tpu_custom_call.1} parent=5 // pred_check
        %p684 = pneg %p683
      $region82: #{tpu_custom_call.1} parent=5 // pred_check_branch
        %686 = sbr.rel (%p684) target = $region84
      $region83: #{tpu_custom_call.1} parent=5 // pred_region
        // Predicated region
        $region85: #{tpu_custom_call.1} parent=83 // pred_check
          %p687 = pneg %p56
        $region86: #{tpu_custom_call.1} parent=83 // pred_check_branch
          %689 = sbr.rel (%p687) target = $region88
        $region87: #{tpu_custom_call.1} parent=83 // pred_region
          %s690 = smul.u32 4, %s36
          %p691 = scmp.lt.s32.totalorder %s690, 7
          %s692 = scalar_select %p691, %s690, 7
          %s693 = smul.addr %s692, 8
          %s694 = scalar_lea.vmem %s0, %s693
          %s695 = smul.u32 4, %s36
        $region88: #{tpu_custom_call.1} parent=83 // pred_fallthru
          _
        // Predicated region
        $region89: #{tpu_custom_call.1} parent=83 // pred_check
          %p696 = pneg %p82
        $region90: #{tpu_custom_call.1} parent=83 // pred_check_branch
          %698 = sbr.rel (%p696) target = $region92
        $region91: #{tpu_custom_call.1} parent=83 // pred_region
          %s699 = smul.u32 4, %s36
          %p700 = scmp.lt.s32.totalorder %s699, 7
          %s701 = scalar_select %p700, %s699, 7
          %s702 = smul.addr %s701, 8
          %s703 = scalar_lea.vmem %s1, %s702
          %s704 = smul.u32 4, %s36
        $region92: #{tpu_custom_call.1} parent=83 // pred_fallthru
          _
        // Predicated region
        $region93: #{tpu_custom_call.1} parent=83 // pred_check
          %p705 = pneg %p129
        $region94: #{tpu_custom_call.1} parent=83 // pred_check_branch
          %707 = sbr.rel (%p705) target = $region96
        $region95: #{tpu_custom_call.1} parent=83 // pred_region
          %s708 = sand.u32 %s36, 1
          %s709 = scalar_lea.sflag [#allocation5], %s708
          %s710 = sand.u32 %s119, 1
          %s711 = smul.addr %s710, 32
          %s712 = scalar_lea.vmem [#allocation4], %s711
          %s713 = smul.u32 4, %s36
          %s715 = ssub.s32 512, 512
          %716 = vsyncadd %s709, %s715
          %s717 = smul.addr %s713, 128
          %s718 = scalar_lea.hbm %s3, %s717
          %s719 = sshll.u32 %s712, 4
          %s720 = int_to_ptr.vmem [resolvable:$true] %s719
          %725 = dma.hbm_to_vmem [thread:$0]  %s718, 512, %s720, %s709, 128, 128, 8
        $region96: #{tpu_custom_call.1} parent=83 // pred_fallthru
          _
        // Predicated region
        $region97: #{tpu_custom_call.1} parent=83 // pred_check
          %p726 = pneg %p155
        $region98: #{tpu_custom_call.1} parent=83 // pred_check_branch
          %728 = sbr.rel (%p726) target = $region100
        $region99: #{tpu_custom_call.1} parent=83 // pred_region
          %s729 = sand.u32 %s36, 1
          %s730 = scalar_lea.sflag [#allocation5], %s729
          %s731 = sand.u32 %s145, 1
          %s732 = smul.addr %s731, 32
          %s733 = scalar_lea.vmem [#allocation6], %s732
          %s734 = smul.u32 4, %s36
          %s736 = ssub.s32 512, 512
          %737 = vsyncadd %s730, %s736
          %s738 = smul.addr %s734, 128
          %s739 = scalar_lea.hbm %s4, %s738
          %s740 = sshll.u32 %s733, 4
          %s741 = int_to_ptr.vmem [resolvable:$true] %s740
          %746 = dma.hbm_to_vmem [thread:$0]  %s739, 512, %s741, %s730, 128, 128, 8
        $region100: #{tpu_custom_call.1} parent=83 // pred_fallthru
          _
      $region84: #{tpu_custom_call.1} parent=5 // pred_fallthru
        _
      %p747 = scmp.le.s32.totalorder 1, %s36
      %p748 = scmp.lt.s32.totalorder %s36, 3
      %p749 = pnand %p747, %p748
      %p750 = pneg %p749
      // Predicated region
      $region101: #{tpu_custom_call.1} parent=5 // pred_check
        _
      $region102: #{tpu_custom_call.1} parent=5 // pred_check_branch
        %752 = sbr.rel (%p749) target = $region104
      $region103: #{tpu_custom_call.1} parent=5 // pred_region
        %s753 = ssub.s32 %s36, 1
        // Predicated region
        $region105: #{tpu_custom_call.1} parent=103 // pred_check
          %p754 = pneg %p109
        $region106: #{tpu_custom_call.1} parent=103 // pred_check_branch
          %756 = sbr.rel (%p754) target = $region108
        $region107: #{tpu_custom_call.1} parent=103 // pred_region
          %757 = dma.done [#allocation3], 128
        $region108: #{tpu_custom_call.1} parent=103 // pred_fallthru
          _
        %s758 = sand.u32 %s41, 1
        %s759 = scalar_lea.sflag [#allocation5], %s758
        %s760 = sand.u32 %s122, 1
        %s761 = smul.addr %s760, 32
        %s762 = scalar_lea.vmem [#allocation4], %s761
        // Predicated region
        $region109: #{tpu_custom_call.1} parent=103 // pred_check
          %p763 = pneg %p135
        $region110: #{tpu_custom_call.1} parent=103 // pred_check_branch
          %765 = sbr.rel (%p763) target = $region112
        $region111: #{tpu_custom_call.1} parent=103 // pred_region
          %766 = dma.done %s759, 512
        $region112: #{tpu_custom_call.1} parent=103 // pred_fallthru
          _
        %s767 = sand.u32 %s41, 1
        %s768 = scalar_lea.sflag [#allocation5], %s767
        %s769 = sand.u32 %s148, 1
        %s770 = smul.addr %s769, 32
        %s771 = scalar_lea.vmem [#allocation6], %s770
        // Predicated region
        $region113: #{tpu_custom_call.1} parent=103 // pred_check
          %p772 = pneg %p161
        $region114: #{tpu_custom_call.1} parent=103 // pred_check_branch
          %774 = sbr.rel (%p772) target = $region116
        $region115: #{tpu_custom_call.1} parent=103 // pred_region
          %775 = dma.done %s768, 512
        $region116: #{tpu_custom_call.1} parent=103 // pred_fallthru
          _
        // Predicated region
        $region117: #{tpu_custom_call.1} parent=103 // pred_check
          %p776 = pneg %p182
        $region118: #{tpu_custom_call.1} parent=103 // pred_check_branch
          %778 = sbr.rel (%p776) target = $region120
        $region119: #{tpu_custom_call.1} parent=103 // pred_region
          %779 = dma.done [#allocation8], 16
        $region120: #{tpu_custom_call.1} parent=103 // pred_fallthru
          _
        // Predicated region
        $region121: #{tpu_custom_call.1} parent=103 // pred_check
          %p780 = pneg %p203
        $region122: #{tpu_custom_call.1} parent=103 // pred_check_branch
          %782 = sbr.rel (%p780) target = $region124
        $region123: #{tpu_custom_call.1} parent=103 // pred_region
          %783 = dma.done [#allocation8], 16
        $region124: #{tpu_custom_call.1} parent=103 // pred_fallthru
          _
        // Predicated region
        $region125: #{tpu_custom_call.1} parent=103 // pred_check
          %p784 = pneg %p245
        $region126: #{tpu_custom_call.1} parent=103 // pred_check_branch
          %786 = sbr.rel (%p784) target = $region128
        $region127: #{tpu_custom_call.1} parent=103 // pred_region
          %787 = dma.done [#allocation11], 16
        $region128: #{tpu_custom_call.1} parent=103 // pred_fallthru
          _
        // Predicated region
        $region129: #{tpu_custom_call.1} parent=103 // pred_check
          %p788 = pneg %p266
        $region130: #{tpu_custom_call.1} parent=103 // pred_check_branch
          %790 = sbr.rel (%p788) target = $region132
        $region131: #{tpu_custom_call.1} parent=103 // pred_region
          %791 = dma.done [#allocation11], 512
        $region132: #{tpu_custom_call.1} parent=103 // pred_fallthru
          _
        // Predicated region
        $region133: #{tpu_custom_call.1} parent=103 // pred_check
          %p792 = pneg %p287
        $region134: #{tpu_custom_call.1} parent=103 // pred_check_branch
          %794 = sbr.rel (%p792) target = $region136
        $region135: #{tpu_custom_call.1} parent=103 // pred_region
          %795 = dma.done [#allocation14], 16
        $region136: #{tpu_custom_call.1} parent=103 // pred_fallthru
          _
        // Predicated region
        $region137: #{tpu_custom_call.1} parent=103 // pred_check
          %p796 = pneg %p308
        $region138: #{tpu_custom_call.1} parent=103 // pred_check_branch
          %798 = sbr.rel (%p796) target = $region140
        $region139: #{tpu_custom_call.1} parent=103 // pred_region
          %799 = dma.done [#allocation14], 512
        $region140: #{tpu_custom_call.1} parent=103 // pred_fallthru
          _
        // Predicated region
        $region141: #{tpu_custom_call.1} parent=103 // pred_check
          %p800 = pneg %p329
        $region142: #{tpu_custom_call.1} parent=103 // pred_check_branch
          %802 = sbr.rel (%p800) target = $region144
        $region143: #{tpu_custom_call.1} parent=103 // pred_region
          %803 = dma.done [#allocation17], 16
        $region144: #{tpu_custom_call.1} parent=103 // pred_fallthru
          _
        // Predicated region
        $region145: #{tpu_custom_call.1} parent=103 // pred_check
          %p804 = pneg %p350
        $region146: #{tpu_custom_call.1} parent=103 // pred_check_branch
          %806 = sbr.rel (%p804) target = $region148
        $region147: #{tpu_custom_call.1} parent=103 // pred_region
          %807 = dma.done [#allocation17], 16
        $region148: #{tpu_custom_call.1} parent=103 // pred_fallthru
          _
        // Predicated region
        $region149: #{tpu_custom_call.1} parent=103 // pred_check
          %p808 = pneg %p371
        $region150: #{tpu_custom_call.1} parent=103 // pred_check_branch
          %810 = sbr.rel (%p808) target = $region152
        $region151: #{tpu_custom_call.1} parent=103 // pred_region
          %811 = dma.done [#allocation20], 16
        $region152: #{tpu_custom_call.1} parent=103 // pred_fallthru
          _
        // Predicated region
        $region153: #{tpu_custom_call.1} parent=103 // pred_check
          %p812 = pneg %p434
        $region154: #{tpu_custom_call.1} parent=103 // pred_check_branch
          %814 = sbr.rel (%p812) target = $region156
        $region155: #{tpu_custom_call.1} parent=103 // pred_region
          %815 = dma.done [#allocation20], 512
        $region156: #{tpu_custom_call.1} parent=103 // pred_fallthru
          _
        %s816 = smul.u32 4, %s41
        %p817 = scmp.lt.s32.totalorder %s816, 7
        %s818 = scalar_select %p817, %s816, 7
        %s819 = smul.addr %s818, 8
        %s820 = scalar_lea.vmem %s0, %s819
        %p821 = pneg %p62
        %p822 = pneg %p59
        %s823 = smul.u32 4, %s41
        %p824 = scmp.lt.s32.totalorder %s823, 7
        %s825 = scalar_select %p824, %s823, 7
        %s826 = smul.addr %s825, 8
        %s827 = scalar_lea.vmem %s1, %s826
        %p828 = pneg %p88
        %p829 = pneg %p85
        %p830 = pneg %p109
        %p831 = pneg %p106
        %s832 = sand.u32 %s41, 1
        %s833 = scalar_lea.sflag [#allocation5], %s832
        %s834 = sand.u32 %s122, 1
        %s835 = smul.addr %s834, 32
        %s836 = scalar_lea.vmem [#allocation4], %s835
        %p837 = pneg %p135
        %p838 = pneg %p132
        %s839 = sand.u32 %s41, 1
        %s840 = scalar_lea.sflag [#allocation5], %s839
        %s841 = sand.u32 %s148, 1
        %s842 = smul.addr %s841, 32
        %s843 = scalar_lea.vmem [#allocation6], %s842
        %p844 = pneg %p161
        %p845 = pneg %p158
        %p846 = pneg %p182
        %p847 = pneg %p179
        %p848 = pneg %p203
        %p849 = pneg %p200
        %p850 = pneg %p224
        %p851 = pneg %p221
        %p852 = pneg %p245
        %p853 = pneg %p242
        %p854 = pneg %p266
        %p855 = pneg %p263
        %p856 = pneg %p287
        %p857 = pneg %p284
        %p858 = pneg %p308
        %p859 = pneg %p305
        %p860 = pneg %p329
        %p861 = pneg %p326
        %p862 = pneg %p350
        %p863 = pneg %p347
        %p864 = pneg %p371
        %p865 = pneg %p368
        %p866 = pneg %p392
        %p867 = pneg %p389
        %p868 = pneg %p413
        %p869 = pneg %p410
        %p870 = pneg %p434
        %p871 = pneg %p431
        %p872 = pneg %p455
        %p873 = pneg %p452
        %p874 = pneg %p476
        %p875 = pneg %p473
        %p876 = pneg %p497
        %p877 = pneg %p494
        %p878 = pneg %p523
        %p879 = pneg %p520
        %p880 = scmp.lt.s32.totalorder %s41, 1
        %s881 = scalar_select %p880, %s41, 1
        %s882 = smul.addr %s881, 2
        %s883 = smul.addr %s882, 8
        %s884 = scalar_lea.vmem %s21, %s883
        %s885 = smul.u32 4, %s41
        %p886 = scmp.lt.s32.totalorder %s885, 7
        %s887 = scalar_select %p886, %s885, 7
        %s888 = smul.addr %s887, 8
        %s889 = scalar_lea.vmem %s0, %s888
        %s890 = smul.u32 4, %s41
        %s891 = smul.u32 4, %s41
        %p892 = scmp.lt.s32.totalorder %s891, 7
        %s893 = scalar_select %p892, %s891, 7
        %s894 = smul.addr %s893, 8
        %s895 = scalar_lea.vmem %s1, %s894
        %s896 = smul.u32 4, %s41
        %s897 = smul.u32 4, %s41
        %s898 = smul.u32 4, %s41
        %p899 = scmp.lt.s32.totalorder %s41, 1
        %s900 = scalar_select %p899, %s41, 1
        %s901 = smul.addr %s900, 2
        %s902 = smul.addr %s901, 8
        %s903 = scalar_lea.vmem %s21, %s902
        %v904 = vld [vmem:[%s889] sm:$0xff]
        %v905 = vld [vmem:[%s889 + $0x8] sm:$0xff]
        %v906 = vld [vmem:[%s889 + $0x10] sm:$0xff]
        %v907 = vld [vmem:[%s889 + $0x18] sm:$0xff]
        %v908 = vld [vmem:[#allocation7] sm:$0x1]
        %v909 = vld [vmem:[#allocation9] sm:$0x1]
        %vm910 = vcmask 261120
        %v911 = vsel %vm910, %v904, 0.0
        %912 = vadd.xlane.f32.xlu0 %v911
        %v913 = vpop.xlane.xlu0 %912
        %v914 = vsel %vm910, %v905, 0.0
        %915 = vadd.xlane.f32.xlu0 %v914
        %v916 = vpop.xlane.xlu0 %915
        %v917 = vsel %vm910, %v906, 0.0
        %918 = vadd.xlane.f32.xlu0 %v917
        %v919 = vpop.xlane.xlu0 %918
        %v920 = vsel %vm910, %v907, 0.0
        %921 = vadd.xlane.f32.xlu0 %v920
        %v922 = vpop.xlane.xlu0 %921
        %v923 = vrcp.pop 32.0
        %v924 = vmul.f32 %v913, %v923
        %v925 = vmul.f32 %v916, %v923
        %v926 = vmul.f32 %v919, %v923
        %v927 = vmul.f32 %v922, %v923
        %v928 = vsub.f32 %v904, %v924
        %v929 = vsub.f32 %v905, %v925
        %v930 = vsub.f32 %v906, %v926
        %v931 = vsub.f32 %v907, %v927
        %v932 = vmul.f32 %v928, %v928
        %v933 = vmul.f32 %v929, %v929
        %v934 = vmul.f32 %v930, %v930
        %v935 = vmul.f32 %v931, %v931
        %v936 = vsel %vm910, %v932, 0.0
        %937 = vadd.xlane.f32.xlu0 %v936
        %v938 = vpop.xlane.xlu0 %937
        %v939 = vsel %vm910, %v933, 0.0
        %940 = vadd.xlane.f32.xlu0 %v939
        %v941 = vpop.xlane.xlu0 %940
        %v942 = vsel %vm910, %v934, 0.0
        %943 = vadd.xlane.f32.xlu0 %v942
        %v944 = vpop.xlane.xlu0 %943
        %v945 = vsel %vm910, %v935, 0.0
        %946 = vadd.xlane.f32.xlu0 %v945
        %v947 = vpop.xlane.xlu0 %946
        %v948 = vmul.f32 %v938, %v923
        %v949 = vmul.f32 %v941, %v923
        %v950 = vmul.f32 %v944, %v923
        %v951 = vmul.f32 %v947, %v923
        %v952 = vadd.f32 %v948, 1e-08
        %v953 = vadd.f32 %v949, 1e-08
        %v954 = vadd.f32 %v950, 1e-08
        %v955 = vadd.f32 %v951, 1e-08
        %v956 = vrsqrt.pop %v952
        %v957 = vrsqrt.pop %v953
        %v958 = vrsqrt.pop %v954
        %v959 = vrsqrt.pop %v955
        %v960 = vmul.f32 %v928, %v956
        %v961 = vmul.f32 %v929, %v957
        %v962 = vmul.f32 %v930, %v958
        %v963 = vmul.f32 %v931, %v959
        %v965 = vlaneseq
        %v966 = vshrl.u32 %v965, 7
        %v967 = vsub.s32 0, %v966
        %v968 = vrot.slane %v908, %v967
        %v970 = vmul.f32 %v960, %v968
        %v971 = vmul.f32 %v961, %v968
        %v972 = vmul.f32 %v962, %v968
        %v973 = vmul.f32 %v963, %v968
        %v975 = vlaneseq
        %v976 = vshrl.u32 %v975, 7
        %v977 = vsub.s32 0, %v976
        %v978 = vrot.slane %v909, %v977
        %v980 = vadd.f32 %v970, %v978
        %v981 = vadd.f32 %v971, %v978
        %v982 = vadd.f32 %v972, %v978
        %v983 = vadd.f32 %v973, %v978
        %v984 = vld [vmem:[%s7] sm:$0xff]
        %v985 = vld [vmem:[%s7 + $0x8] sm:$0xff]
        %v986 = vld [vmem:[%s7 + $0x10] sm:$0xff]
        %v987 = vld [vmem:[%s7 + $0x18] sm:$0xff]
        %v988 = vld [vmem:[#allocation10] sm:$0x1]
        %v990 = vlaneseq
        %v991 = vshrl.u32 %v990, 7
        %v992 = vsub.s32 0, %v991
        %v993 = vrot.slane %v988, %v992
        %v996 = vsel %vm910, %v980, 0
        %v999 = vsel %vm910, %v981, 0
        %v1002 = vsel %vm910, %v982, 0
        %v1005 = vsel %vm910, %v983, 0
        %1007 = vmatprep.subr.mxu0 0.0
        %1008 = vmatpush1.msra.mxu0 %v984
        %1009 = vmatprep.subr.mxu0 0.0
        %1010 = vmatpush1.msra.mxu0 %v985
        %1011 = vmatprep.subr.mxu0 0.0
        %1012 = vmatpush1.msra.mxu0 %v986
        %1013 = vmatprep.subr.mxu0 0.0
        %1014 = vmatpush1.msra.mxu0 %v987
        %1015 = vmatprep.subr.mxu0 0.0
        %1016 = vmatpush1.msra.mxu0 0.0
        %1017 = vmatprep.subr.mxu0 0.0
        %1018 = vmatpush1.msra.mxu0 0.0
        %1019 = vmatprep.subr.mxu0 0.0
        %1020 = vmatpush1.msra.mxu0 0.0
        %1021 = vmatprep.subr.mxu0 0.0
        %1022 = vmatpush1.msra.mxu0 0.0
        %1023 = vmatprep.subr.mxu0 0.0
        %1024 = vmatpush1.msra.mxu0 0.0
        %1025 = vmatprep.subr.mxu0 0.0
        %1026 = vmatpush1.msra.mxu0 0.0
        %1027 = vmatprep.subr.mxu0 0.0
        %1028 = vmatpush1.msra.mxu0 0.0
        %1029 = vmatprep.subr.mxu0 0.0
        %1030 = vmatpush1.msra.mxu0 0.0
        %1031 = vmatprep.subr.mxu0 0.0
        %1032 = vmatpush1.msra.mxu0 0.0
        %1033 = vmatprep.subr.mxu0 0.0
        %1034 = vmatpush1.msra.mxu0 0.0
        %1035 = vmatprep.subr.mxu0 0.0
        %1036 = vmatpush1.msra.mxu0 0.0
        %1037 = vmatprep.subr.mxu0 0.0
        %1038 = vmatpush1.msra.mxu0 0.0
        %1039 = vmatprep.subr.mxu0 0.0
        %1040 = vmatpush1.msra.mxu0 0.0
        %1041 = vmatprep.subr.mxu0 0.0
        %1042 = vmatpush1.msra.mxu0 0.0
        %1043 = vmatprep.subr.mxu0 0.0
        %1044 = vmatpush1.msra.mxu0 0.0
        %1045 = vmatprep.subr.mxu0 0.0
        %1046 = vmatpush1.msra.mxu0 0.0
        %1047 = vmatprep.subr.mxu0 0.0
        %1048 = vmatpush1.msra.mxu0 0.0
        %1049 = vmatprep.subr.mxu0 0.0
        %1050 = vmatpush1.msra.mxu0 0.0
        %1051 = vmatprep.subr.mxu0 0.0
        %1052 = vmatpush1.msra.mxu0 0.0
        %1053 = vmatprep.subr.mxu0 0.0
        %1054 = vmatpush1.msra.mxu0 0.0
        %1055 = vmatprep.subr.mxu0 0.0
        %1056 = vmatpush1.msra.mxu0 0.0
        %1057 = vmatprep.subr.mxu0 0.0
        %1058 = vmatpush1.msra.mxu0 0.0
        %1059 = vmatprep.subr.mxu0 0.0
        %1060 = vmatpush1.msra.mxu0 0.0
        %1061 = vmatprep.subr.mxu0 0.0
        %1062 = vmatpush1.msra.mxu0 0.0
        %1063 = vmatprep.subr.mxu0 0.0
        %1064 = vmatpush1.msra.mxu0 0.0
        %1065 = vmatprep.subr.mxu0 0.0
        %1066 = vmatpush1.msra.mxu0 0.0
        %1067 = vmatprep.subr.mxu0 0.0
        %1068 = vmatpush1.msra.mxu0 0.0
        %1069 = vmatprep.subr.mxu0 0.0
        %1070 = vmatpush1.msra.mxu0 0.0
        %1071 = vmatprep.mubr.f32.mxu0 0.0
        %1072 = vmatmul.mubr.f32.gmra.mrb[0].mxu0 %v996
        %v1073 = vpop.f32.mrb[0].mxu0
        %v1074 = vadd.f32 %v993, %v1073
        %v1075 = vpop.f32.mrb[0].mxu0
        %1076 = vmatprep.mubr.f32.mxu0 0.0
        %1077 = vmatmul.mubr.f32.gmra.mrb[0].mxu0 %v999
        %v1078 = vpop.f32.mrb[0].mxu0
        %v1079 = vadd.f32 %v993, %v1078
        %v1080 = vpop.f32.mrb[0].mxu0
        %1081 = vmatprep.mubr.f32.mxu0 0.0
        %1082 = vmatmul.mubr.f32.gmra.mrb[0].mxu0 %v1002
        %v1083 = vpop.f32.mrb[0].mxu0
        %v1084 = vadd.f32 %v993, %v1083
        %v1085 = vpop.f32.mrb[0].mxu0
        %1086 = vmatprep.mubr.f32.mxu0 0.0
        %1087 = vmatmul.mubr.f32.gmra.mrb[0].mxu0 %v1005
        %v1088 = vpop.f32.mrb[0].mxu0
        %v1089 = vadd.f32 %v993, %v1088
        %v1090 = vpop.f32.mrb[0].mxu0
        %1091 = vdwg.mxu0
        %v1092 = vld [vmem:[#allocation12] sm:$0xff]
        %v1093 = vld [vmem:[#allocation12 + $0x8] sm:$0xff]
        %v1094 = vld [vmem:[#allocation12 + $0x10] sm:$0xff]
        %v1095 = vld [vmem:[#allocation12 + $0x18] sm:$0xff]
        %v1096 = vld [vmem:[#allocation13] sm:$0x1]
        %v1098 = vlaneseq
        %v1099 = vshrl.u32 %v1098, 7
        %v1100 = vsub.s32 0, %v1099
        %v1101 = vrot.slane %v1096, %v1100
        %v1104 = vsel %vm910, %v904, 0
        %v1107 = vsel %vm910, %v905, 0
        %v1110 = vsel %vm910, %v906, 0
        %v1113 = vsel %vm910, %v907, 0
        %1115 = vmatprep.subr.mxu0 0.0
        %1116 = vmatpush1.msra.mxu0 %v1092
        %1117 = vmatprep.subr.mxu0 0.0
        %1118 = vmatpush1.msra.mxu0 %v1093
        %1119 = vmatprep.subr.mxu0 0.0
        %1120 = vmatpush1.msra.mxu0 %v1094
        %1121 = vmatprep.subr.mxu0 0.0
        %1122 = vmatpush1.msra.mxu0 %v1095
        %1123 = vmatprep.subr.mxu0 0.0
        %1124 = vmatpush1.msra.mxu0 0.0
        %1125 = vmatprep.subr.mxu0 0.0
        %1126 = vmatpush1.msra.mxu0 0.0
        %1127 = vmatprep.subr.mxu0 0.0
        %1128 = vmatpush1.msra.mxu0 0.0
        %1129 = vmatprep.subr.mxu0 0.0
        %1130 = vmatpush1.msra.mxu0 0.0
        %1131 = vmatprep.subr.mxu0 0.0
        %1132 = vmatpush1.msra.mxu0 0.0
        %1133 = vmatprep.subr.mxu0 0.0
        %1134 = vmatpush1.msra.mxu0 0.0
        %1135 = vmatprep.subr.mxu0 0.0
        %1136 = vmatpush1.msra.mxu0 0.0
        %1137 = vmatprep.subr.mxu0 0.0
        %1138 = vmatpush1.msra.mxu0 0.0
        %1139 = vmatprep.subr.mxu0 0.0
        %1140 = vmatpush1.msra.mxu0 0.0
        %1141 = vmatprep.subr.mxu0 0.0
        %1142 = vmatpush1.msra.mxu0 0.0
        %1143 = vmatprep.subr.mxu0 0.0
        %1144 = vmatpush1.msra.mxu0 0.0
        %1145 = vmatprep.subr.mxu0 0.0
        %1146 = vmatpush1.msra.mxu0 0.0
        %1147 = vmatprep.subr.mxu0 0.0
        %1148 = vmatpush1.msra.mxu0 0.0
        %1149 = vmatprep.subr.mxu0 0.0
        %1150 = vmatpush1.msra.mxu0 0.0
        %1151 = vmatprep.subr.mxu0 0.0
        %1152 = vmatpush1.msra.mxu0 0.0
        %1153 = vmatprep.subr.mxu0 0.0
        %1154 = vmatpush1.msra.mxu0 0.0
        %1155 = vmatprep.subr.mxu0 0.0
        %1156 = vmatpush1.msra.mxu0 0.0
        %1157 = vmatprep.subr.mxu0 0.0
        %1158 = vmatpush1.msra.mxu0 0.0
        %1159 = vmatprep.subr.mxu0 0.0
        %1160 = vmatpush1.msra.mxu0 0.0
        %1161 = vmatprep.subr.mxu0 0.0
        %1162 = vmatpush1.msra.mxu0 0.0
        %1163 = vmatprep.subr.mxu0 0.0
        %1164 = vmatpush1.msra.mxu0 0.0
        %1165 = vmatprep.subr.mxu0 0.0
        %1166 = vmatpush1.msra.mxu0 0.0
        %1167 = vmatprep.subr.mxu0 0.0
        %1168 = vmatpush1.msra.mxu0 0.0
        %1169 = vmatprep.subr.mxu0 0.0
        %1170 = vmatpush1.msra.mxu0 0.0
        %1171 = vmatprep.subr.mxu0 0.0
        %1172 = vmatpush1.msra.mxu0 0.0
        %1173 = vmatprep.subr.mxu0 0.0
        %1174 = vmatpush1.msra.mxu0 0.0
        %1175 = vmatprep.subr.mxu0 0.0
        %1176 = vmatpush1.msra.mxu0 0.0
        %1177 = vmatprep.subr.mxu0 0.0
        %1178 = vmatpush1.msra.mxu0 0.0
        %1179 = vmatprep.mubr.f32.mxu0 0.0
        %1180 = vmatmul.mubr.f32.gmra.mrb[0].mxu0 %v1104
        %v1181 = vpop.f32.mrb[0].mxu0
        %v1182 = vadd.f32 %v1101, %v1181
        %v1183 = vpop.f32.mrb[0].mxu0
        %1184 = vmatprep.mubr.f32.mxu0 0.0
        %1185 = vmatmul.mubr.f32.gmra.mrb[0].mxu0 %v1107
        %v1186 = vpop.f32.mrb[0].mxu0
        %v1187 = vadd.f32 %v1101, %v1186
        %v1188 = vpop.f32.mrb[0].mxu0
        %1189 = vmatprep.mubr.f32.mxu0 0.0
        %1190 = vmatmul.mubr.f32.gmra.mrb[0].mxu0 %v1110
        %v1191 = vpop.f32.mrb[0].mxu0
        %v1192 = vadd.f32 %v1101, %v1191
        %v1193 = vpop.f32.mrb[0].mxu0
        %1194 = vmatprep.mubr.f32.mxu0 0.0
        %1195 = vmatmul.mubr.f32.gmra.mrb[0].mxu0 %v1113
        %v1196 = vpop.f32.mrb[0].mxu0
        %v1197 = vadd.f32 %v1101, %v1196
        %v1198 = vpop.f32.mrb[0].mxu0
        %1199 = vdwg.mxu0
        %v1200 = vld [vmem:[#allocation2] sm:$0xff]
        %vm1201 = vcmask 130048
        %v1203 = vsel %vm1201, %v1074, 0
        %v1206 = vsel %vm1201, %v1182, 0
        %1208 = vmatprep.subr.mxu0 0.0
        %1209 = vmatpush1.xpose.msra.mxu0 %v1206
        %1210 = vmatprep.subr.mxu0 0.0
        %1211 = vmatpush1.xpose.msra.mxu0 0.0
        %1212 = vmatprep.subr.mxu0 0.0
        %1213 = vmatpush1.xpose.msra.mxu0 0.0
        %1214 = vmatprep.subr.mxu0 0.0
        %1215 = vmatpush1.xpose.msra.mxu0 0.0
        %1216 = vmatprep.subr.mxu0 0.0
        %1217 = vmatpush1.xpose.msra.mxu0 0.0
        %1218 = vmatprep.subr.mxu0 0.0
        %1219 = vmatpush1.xpose.msra.mxu0 0.0
        %1220 = vmatprep.subr.mxu0 0.0
        %1221 = vmatpush1.xpose.msra.mxu0 0.0
        %1222 = vmatprep.subr.mxu0 0.0
        %1223 = vmatpush1.xpose.msra.mxu0 0.0
        %1224 = vmatprep.subr.mxu0 0.0
        %1225 = vmatpush1.xpose.msra.mxu0 0.0
        %1226 = vmatprep.subr.mxu0 0.0
        %1227 = vmatpush1.xpose.msra.mxu0 0.0
        %1228 = vmatprep.subr.mxu0 0.0
        %1229 = vmatpush1.xpose.msra.mxu0 0.0
        %1230 = vmatprep.subr.mxu0 0.0
        %1231 = vmatpush1.xpose.msra.mxu0 0.0
        %1232 = vmatprep.subr.mxu0 0.0
        %1233 = vmatpush1.xpose.msra.mxu0 0.0
        %1234 = vmatprep.subr.mxu0 0.0
        %1235 = vmatpush1.xpose.msra.mxu0 0.0
        %1236 = vmatprep.subr.mxu0 0.0
        %1237 = vmatpush1.xpose.msra.mxu0 0.0
        %1238 = vmatprep.subr.mxu0 0.0
        %1239 = vmatpush1.xpose.msra.mxu0 0.0
        %1240 = vmatprep.subr.mxu0 0.0
        %1241 = vmatpush1.xpose.msra.mxu0 0.0
        %1242 = vmatprep.subr.mxu0 0.0
        %1243 = vmatpush1.xpose.msra.mxu0 0.0
        %1244 = vmatprep.subr.mxu0 0.0
        %1245 = vmatpush1.xpose.msra.mxu0 0.0
        %1246 = vmatprep.subr.mxu0 0.0
        %1247 = vmatpush1.xpose.msra.mxu0 0.0
        %1248 = vmatprep.subr.mxu0 0.0
        %1249 = vmatpush1.xpose.msra.mxu0 0.0
        %1250 = vmatprep.subr.mxu0 0.0
        %1251 = vmatpush1.xpose.msra.mxu0 0.0
        %1252 = vmatprep.subr.mxu0 0.0
        %1253 = vmatpush1.xpose.msra.mxu0 0.0
        %1254 = vmatprep.subr.mxu0 0.0
        %1255 = vmatpush1.xpose.msra.mxu0 0.0
        %1256 = vmatprep.subr.mxu0 0.0
        %1257 = vmatpush1.xpose.msra.mxu0 0.0
        %1258 = vmatprep.subr.mxu0 0.0
        %1259 = vmatpush1.xpose.msra.mxu0 0.0
        %1260 = vmatprep.subr.mxu0 0.0
        %1261 = vmatpush1.xpose.msra.mxu0 0.0
        %1262 = vmatprep.subr.mxu0 0.0
        %1263 = vmatpush1.xpose.msra.mxu0 0.0
        %1264 = vmatprep.subr.mxu0 0.0
        %1265 = vmatpush1.xpose.msra.mxu0 0.0
        %1266 = vmatprep.subr.mxu0 0.0
        %1267 = vmatpush1.xpose.msra.mxu0 0.0
        %1268 = vmatprep.subr.mxu0 0.0
        %1269 = vmatpush1.xpose.msra.mxu0 0.0
        %1270 = vmatprep.subr.mxu0 0.0
        %1271 = vmatpush1.xpose.msra.mxu0 0.0
        %1272 = vmatprep.mubr.f32.mxu0 0.0
        %1273 = vmatmul.mubr.f32.gmra.mrb[0].mxu0 %v1203
        %v1274 = vpop.f32.mrb[0].mxu0
        %v1275 = vadd.f32 %v1200, %v1274
        %v1276 = vpop.f32.mrb[0].mxu0
        %1277 = vdwg.mxu0
        %v1279 = vsel %vm1201, %v1079, 0
        %v1282 = vsel %vm1201, %v1187, 0
        %1284 = vmatprep.subr.mxu0 0.0
        %1285 = vmatpush1.xpose.msra.mxu0 %v1282
        %1286 = vmatprep.subr.mxu0 0.0
        %1287 = vmatpush1.xpose.msra.mxu0 0.0
        %1288 = vmatprep.subr.mxu0 0.0
        %1289 = vmatpush1.xpose.msra.mxu0 0.0
        %1290 = vmatprep.subr.mxu0 0.0
        %1291 = vmatpush1.xpose.msra.mxu0 0.0
        %1292 = vmatprep.subr.mxu0 0.0
        %1293 = vmatpush1.xpose.msra.mxu0 0.0
        %1294 = vmatprep.subr.mxu0 0.0
        %1295 = vmatpush1.xpose.msra.mxu0 0.0
        %1296 = vmatprep.subr.mxu0 0.0
        %1297 = vmatpush1.xpose.msra.mxu0 0.0
        %1298 = vmatprep.subr.mxu0 0.0
        %1299 = vmatpush1.xpose.msra.mxu0 0.0
        %1300 = vmatprep.subr.mxu0 0.0
        %1301 = vmatpush1.xpose.msra.mxu0 0.0
        %1302 = vmatprep.subr.mxu0 0.0
        %1303 = vmatpush1.xpose.msra.mxu0 0.0
        %1304 = vmatprep.subr.mxu0 0.0
        %1305 = vmatpush1.xpose.msra.mxu0 0.0
        %1306 = vmatprep.subr.mxu0 0.0
        %1307 = vmatpush1.xpose.msra.mxu0 0.0
        %1308 = vmatprep.subr.mxu0 0.0
        %1309 = vmatpush1.xpose.msra.mxu0 0.0
        %1310 = vmatprep.subr.mxu0 0.0
        %1311 = vmatpush1.xpose.msra.mxu0 0.0
        %1312 = vmatprep.subr.mxu0 0.0
        %1313 = vmatpush1.xpose.msra.mxu0 0.0
        %1314 = vmatprep.subr.mxu0 0.0
        %1315 = vmatpush1.xpose.msra.mxu0 0.0
        %1316 = vmatprep.subr.mxu0 0.0
        %1317 = vmatpush1.xpose.msra.mxu0 0.0
        %1318 = vmatprep.subr.mxu0 0.0
        %1319 = vmatpush1.xpose.msra.mxu0 0.0
        %1320 = vmatprep.subr.mxu0 0.0
        %1321 = vmatpush1.xpose.msra.mxu0 0.0
        %1322 = vmatprep.subr.mxu0 0.0
        %1323 = vmatpush1.xpose.msra.mxu0 0.0
        %1324 = vmatprep.subr.mxu0 0.0
        %1325 = vmatpush1.xpose.msra.mxu0 0.0
        %1326 = vmatprep.subr.mxu0 0.0
        %1327 = vmatpush1.xpose.msra.mxu0 0.0
        %1328 = vmatprep.subr.mxu0 0.0
        %1329 = vmatpush1.xpose.msra.mxu0 0.0
        %1330 = vmatprep.subr.mxu0 0.0
        %1331 = vmatpush1.xpose.msra.mxu0 0.0
        %1332 = vmatprep.subr.mxu0 0.0
        %1333 = vmatpush1.xpose.msra.mxu0 0.0
        %1334 = vmatprep.subr.mxu0 0.0
        %1335 = vmatpush1.xpose.msra.mxu0 0.0
        %1336 = vmatprep.subr.mxu0 0.0
        %1337 = vmatpush1.xpose.msra.mxu0 0.0
        %1338 = vmatprep.subr.mxu0 0.0
        %1339 = vmatpush1.xpose.msra.mxu0 0.0
        %1340 = vmatprep.subr.mxu0 0.0
        %1341 = vmatpush1.xpose.msra.mxu0 0.0
        %1342 = vmatprep.subr.mxu0 0.0
        %1343 = vmatpush1.xpose.msra.mxu0 0.0
        %1344 = vmatprep.subr.mxu0 0.0
        %1345 = vmatpush1.xpose.msra.mxu0 0.0
        %1346 = vmatprep.subr.mxu0 0.0
        %1347 = vmatpush1.xpose.msra.mxu0 0.0
        %1348 = vmatprep.mubr.f32.mxu0 0.0
        %1349 = vmatmul.mubr.f32.gmra.mrb[0].mxu0 %v1279
        %v1350 = vpop.f32.mrb[0].mxu0
        %v1351 = vadd.f32 %v1200, %v1350
        %v1352 = vpop.f32.mrb[0].mxu0
        %1353 = vdwg.mxu0
        %v1355 = vsel %vm1201, %v1084, 0
        %v1358 = vsel %vm1201, %v1192, 0
        %1360 = vmatprep.subr.mxu0 0.0
        %1361 = vmatpush1.xpose.msra.mxu0 %v1358
        %1362 = vmatprep.subr.mxu0 0.0
        %1363 = vmatpush1.xpose.msra.mxu0 0.0
        %1364 = vmatprep.subr.mxu0 0.0
        %1365 = vmatpush1.xpose.msra.mxu0 0.0
        %1366 = vmatprep.subr.mxu0 0.0
        %1367 = vmatpush1.xpose.msra.mxu0 0.0
        %1368 = vmatprep.subr.mxu0 0.0
        %1369 = vmatpush1.xpose.msra.mxu0 0.0
        %1370 = vmatprep.subr.mxu0 0.0
        %1371 = vmatpush1.xpose.msra.mxu0 0.0
        %1372 = vmatprep.subr.mxu0 0.0
        %1373 = vmatpush1.xpose.msra.mxu0 0.0
        %1374 = vmatprep.subr.mxu0 0.0
        %1375 = vmatpush1.xpose.msra.mxu0 0.0
        %1376 = vmatprep.subr.mxu0 0.0
        %1377 = vmatpush1.xpose.msra.mxu0 0.0
        %1378 = vmatprep.subr.mxu0 0.0
        %1379 = vmatpush1.xpose.msra.mxu0 0.0
        %1380 = vmatprep.subr.mxu0 0.0
        %1381 = vmatpush1.xpose.msra.mxu0 0.0
        %1382 = vmatprep.subr.mxu0 0.0
        %1383 = vmatpush1.xpose.msra.mxu0 0.0
        %1384 = vmatprep.subr.mxu0 0.0
        %1385 = vmatpush1.xpose.msra.mxu0 0.0
        %1386 = vmatprep.subr.mxu0 0.0
        %1387 = vmatpush1.xpose.msra.mxu0 0.0
        %1388 = vmatprep.subr.mxu0 0.0
        %1389 = vmatpush1.xpose.msra.mxu0 0.0
        %1390 = vmatprep.subr.mxu0 0.0
        %1391 = vmatpush1.xpose.msra.mxu0 0.0
        %1392 = vmatprep.subr.mxu0 0.0
        %1393 = vmatpush1.xpose.msra.mxu0 0.0
        %1394 = vmatprep.subr.mxu0 0.0
        %1395 = vmatpush1.xpose.msra.mxu0 0.0
        %1396 = vmatprep.subr.mxu0 0.0
        %1397 = vmatpush1.xpose.msra.mxu0 0.0
        %1398 = vmatprep.subr.mxu0 0.0
        %1399 = vmatpush1.xpose.msra.mxu0 0.0
        %1400 = vmatprep.subr.mxu0 0.0
        %1401 = vmatpush1.xpose.msra.mxu0 0.0
        %1402 = vmatprep.subr.mxu0 0.0
        %1403 = vmatpush1.xpose.msra.mxu0 0.0
        %1404 = vmatprep.subr.mxu0 0.0
        %1405 = vmatpush1.xpose.msra.mxu0 0.0
        %1406 = vmatprep.subr.mxu0 0.0
        %1407 = vmatpush1.xpose.msra.mxu0 0.0
        %1408 = vmatprep.subr.mxu0 0.0
        %1409 = vmatpush1.xpose.msra.mxu0 0.0
        %1410 = vmatprep.subr.mxu0 0.0
        %1411 = vmatpush1.xpose.msra.mxu0 0.0
        %1412 = vmatprep.subr.mxu0 0.0
        %1413 = vmatpush1.xpose.msra.mxu0 0.0
        %1414 = vmatprep.subr.mxu0 0.0
        %1415 = vmatpush1.xpose.msra.mxu0 0.0
        %1416 = vmatprep.subr.mxu0 0.0
        %1417 = vmatpush1.xpose.msra.mxu0 0.0
        %1418 = vmatprep.subr.mxu0 0.0
        %1419 = vmatpush1.xpose.msra.mxu0 0.0
        %1420 = vmatprep.subr.mxu0 0.0
        %1421 = vmatpush1.xpose.msra.mxu0 0.0
        %1422 = vmatprep.subr.mxu0 0.0
        %1423 = vmatpush1.xpose.msra.mxu0 0.0
        %1424 = vmatprep.mubr.f32.mxu0 0.0
        %1425 = vmatmul.mubr.f32.gmra.mrb[0].mxu0 %v1355
        %v1426 = vpop.f32.mrb[0].mxu0
        %v1427 = vadd.f32 %v1200, %v1426
        %v1428 = vpop.f32.mrb[0].mxu0
        %1429 = vdwg.mxu0
        %v1431 = vsel %vm1201, %v1089, 0
        %v1434 = vsel %vm1201, %v1197, 0
        %1436 = vmatprep.subr.mxu0 0.0
        %1437 = vmatpush1.xpose.msra.mxu0 %v1434
        %1438 = vmatprep.subr.mxu0 0.0
        %1439 = vmatpush1.xpose.msra.mxu0 0.0
        %1440 = vmatprep.subr.mxu0 0.0
        %1441 = vmatpush1.xpose.msra.mxu0 0.0
        %1442 = vmatprep.subr.mxu0 0.0
        %1443 = vmatpush1.xpose.msra.mxu0 0.0
        %1444 = vmatprep.subr.mxu0 0.0
        %1445 = vmatpush1.xpose.msra.mxu0 0.0
        %1446 = vmatprep.subr.mxu0 0.0
        %1447 = vmatpush1.xpose.msra.mxu0 0.0
        %1448 = vmatprep.subr.mxu0 0.0
        %1449 = vmatpush1.xpose.msra.mxu0 0.0
        %1450 = vmatprep.subr.mxu0 0.0
        %1451 = vmatpush1.xpose.msra.mxu0 0.0
        %1452 = vmatprep.subr.mxu0 0.0
        %1453 = vmatpush1.xpose.msra.mxu0 0.0
        %1454 = vmatprep.subr.mxu0 0.0
        %1455 = vmatpush1.xpose.msra.mxu0 0.0
        %1456 = vmatprep.subr.mxu0 0.0
        %1457 = vmatpush1.xpose.msra.mxu0 0.0
        %1458 = vmatprep.subr.mxu0 0.0
        %1459 = vmatpush1.xpose.msra.mxu0 0.0
        %1460 = vmatprep.subr.mxu0 0.0
        %1461 = vmatpush1.xpose.msra.mxu0 0.0
        %1462 = vmatprep.subr.mxu0 0.0
        %1463 = vmatpush1.xpose.msra.mxu0 0.0
        %1464 = vmatprep.subr.mxu0 0.0
        %1465 = vmatpush1.xpose.msra.mxu0 0.0
        %1466 = vmatprep.subr.mxu0 0.0
        %1467 = vmatpush1.xpose.msra.mxu0 0.0
        %1468 = vmatprep.subr.mxu0 0.0
        %1469 = vmatpush1.xpose.msra.mxu0 0.0
        %1470 = vmatprep.subr.mxu0 0.0
        %1471 = vmatpush1.xpose.msra.mxu0 0.0
        %1472 = vmatprep.subr.mxu0 0.0
        %1473 = vmatpush1.xpose.msra.mxu0 0.0
        %1474 = vmatprep.subr.mxu0 0.0
        %1475 = vmatpush1.xpose.msra.mxu0 0.0
        %1476 = vmatprep.subr.mxu0 0.0
        %1477 = vmatpush1.xpose.msra.mxu0 0.0
        %1478 = vmatprep.subr.mxu0 0.0
        %1479 = vmatpush1.xpose.msra.mxu0 0.0
        %1480 = vmatprep.subr.mxu0 0.0
        %1481 = vmatpush1.xpose.msra.mxu0 0.0
        %1482 = vmatprep.subr.mxu0 0.0
        %1483 = vmatpush1.xpose.msra.mxu0 0.0
        %1484 = vmatprep.subr.mxu0 0.0
        %1485 = vmatpush1.xpose.msra.mxu0 0.0
        %1486 = vmatprep.subr.mxu0 0.0
        %1487 = vmatpush1.xpose.msra.mxu0 0.0
        %1488 = vmatprep.subr.mxu0 0.0
        %1489 = vmatpush1.xpose.msra.mxu0 0.0
        %1490 = vmatprep.subr.mxu0 0.0
        %1491 = vmatpush1.xpose.msra.mxu0 0.0
        %1492 = vmatprep.subr.mxu0 0.0
        %1493 = vmatpush1.xpose.msra.mxu0 0.0
        %1494 = vmatprep.subr.mxu0 0.0
        %1495 = vmatpush1.xpose.msra.mxu0 0.0
        %1496 = vmatprep.subr.mxu0 0.0
        %1497 = vmatpush1.xpose.msra.mxu0 0.0
        %1498 = vmatprep.subr.mxu0 0.0
        %1499 = vmatpush1.xpose.msra.mxu0 0.0
        %1500 = vmatprep.mubr.f32.mxu0 0.0
        %1501 = vmatmul.mubr.f32.gmra.mrb[0].mxu0 %v1431
        %v1502 = vpop.f32.mrb[0].mxu0
        %v1503 = vadd.f32 %v1200, %v1502
        %v1504 = vpop.f32.mrb[0].mxu0
        %1505 = vdwg.mxu0
        %vm1506 = vcmask 64512
        %v1507 = vsel %vm1506, %v1275, -inf
        %1508 = vmax.xlane.f32.xlu0 %v1507
        %v1509 = vpop.xlane.xlu0 %1508
        %v1510 = vsel %vm1506, %v1351, -inf
        %1511 = vmax.xlane.f32.xlu0 %v1510
        %v1512 = vpop.xlane.xlu0 %1511
        %v1513 = vsel %vm1506, %v1427, -inf
        %1514 = vmax.xlane.f32.xlu0 %v1513
        %v1515 = vpop.xlane.xlu0 %1514
        %v1516 = vsel %vm1506, %v1503, -inf
        %1517 = vmax.xlane.f32.xlu0 %v1516
        %v1518 = vpop.xlane.xlu0 %1517
        %v1519 = vsub.f32 %v1275, %v1509
        %v1520 = vsub.f32 %v1351, %v1512
        %v1521 = vsub.f32 %v1427, %v1515
        %v1522 = vsub.f32 %v1503, %v1518
        %v1523 = vmul.f32 %v1519, 1.442695
        %v1524 = vpow.pop %v1523
        %v1525 = vmul.f32 %v1520, 1.442695
        %v1526 = vpow.pop %v1525
        %v1527 = vmul.f32 %v1521, 1.442695
        %v1528 = vpow.pop %v1527
        %v1529 = vmul.f32 %v1522, 1.442695
        %v1530 = vpow.pop %v1529
        %v1531 = vsel %vm1506, %v1524, 0.0
        %1532 = vadd.xlane.f32.xlu0 %v1531
        %v1533 = vpop.xlane.xlu0 %1532
        %v1534 = vsel %vm1506, %v1526, 0.0
        %1535 = vadd.xlane.f32.xlu0 %v1534
        %v1536 = vpop.xlane.xlu0 %1535
        %v1537 = vsel %vm1506, %v1528, 0.0
        %1538 = vadd.xlane.f32.xlu0 %v1537
        %v1539 = vpop.xlane.xlu0 %1538
        %v1540 = vsel %vm1506, %v1530, 0.0
        %1541 = vadd.xlane.f32.xlu0 %v1540
        %v1542 = vpop.xlane.xlu0 %1541
        %v1543 = vrcp.pop %v1533
        %v1544 = vrcp.pop %v1536
        %v1545 = vrcp.pop %v1539
        %v1546 = vrcp.pop %v1542
        %v1547 = vmul.f32 %v1524, %v1543
        %v1548 = vmul.f32 %v1526, %v1544
        %v1549 = vmul.f32 %v1528, %v1545
        %v1550 = vmul.f32 %v1530, %v1546
        %1551 = vrot.lane.b32.xlu0 %v1182, 96
        %v1552 = vpop.permute.xlu0 %1551
        %v1555 = vsel %vm1506, %v1547, 0
        %1557 = vmatprep.subr.mxu0 0.0
        %1558 = vmatpush1.msra.mxu0 %v1552
        %1559 = vmatprep.subr.mxu0 0.0
        %1560 = vmatpush1.msra.mxu0 0.0
        %1561 = vmatprep.subr.mxu0 0.0
        %1562 = vmatpush1.msra.mxu0 0.0
        %1563 = vmatprep.subr.mxu0 0.0
        %1564 = vmatpush1.msra.mxu0 0.0
        %1565 = vmatprep.subr.mxu0 0.0
        %1566 = vmatpush1.msra.mxu0 0.0
        %1567 = vmatprep.subr.mxu0 0.0
        %1568 = vmatpush1.msra.mxu0 0.0
        %1569 = vmatprep.subr.mxu0 0.0
        %1570 = vmatpush1.msra.mxu0 0.0
        %1571 = vmatprep.subr.mxu0 0.0
        %1572 = vmatpush1.msra.mxu0 0.0
        %1573 = vmatprep.subr.mxu0 0.0
        %1574 = vmatpush1.msra.mxu0 0.0
        %1575 = vmatprep.subr.mxu0 0.0
        %1576 = vmatpush1.msra.mxu0 0.0
        %1577 = vmatprep.subr.mxu0 0.0
        %1578 = vmatpush1.msra.mxu0 0.0
        %1579 = vmatprep.subr.mxu0 0.0
        %1580 = vmatpush1.msra.mxu0 0.0
        %1581 = vmatprep.subr.mxu0 0.0
        %1582 = vmatpush1.msra.mxu0 0.0
        %1583 = vmatprep.subr.mxu0 0.0
        %1584 = vmatpush1.msra.mxu0 0.0
        %1585 = vmatprep.subr.mxu0 0.0
        %1586 = vmatpush1.msra.mxu0 0.0
        %1587 = vmatprep.subr.mxu0 0.0
        %1588 = vmatpush1.msra.mxu0 0.0
        %1589 = vmatprep.subr.mxu0 0.0
        %1590 = vmatpush1.msra.mxu0 0.0
        %1591 = vmatprep.subr.mxu0 0.0
        %1592 = vmatpush1.msra.mxu0 0.0
        %1593 = vmatprep.subr.mxu0 0.0
        %1594 = vmatpush1.msra.mxu0 0.0
        %1595 = vmatprep.subr.mxu0 0.0
        %1596 = vmatpush1.msra.mxu0 0.0
        %1597 = vmatprep.subr.mxu0 0.0
        %1598 = vmatpush1.msra.mxu0 0.0
        %1599 = vmatprep.subr.mxu0 0.0
        %1600 = vmatpush1.msra.mxu0 0.0
        %1601 = vmatprep.subr.mxu0 0.0
        %1602 = vmatpush1.msra.mxu0 0.0
        %1603 = vmatprep.subr.mxu0 0.0
        %1604 = vmatpush1.msra.mxu0 0.0
        %1605 = vmatprep.subr.mxu0 0.0
        %1606 = vmatpush1.msra.mxu0 0.0
        %1607 = vmatprep.subr.mxu0 0.0
        %1608 = vmatpush1.msra.mxu0 0.0
        %1609 = vmatprep.subr.mxu0 0.0
        %1610 = vmatpush1.msra.mxu0 0.0
        %1611 = vmatprep.subr.mxu0 0.0
        %1612 = vmatpush1.msra.mxu0 0.0
        %1613 = vmatprep.subr.mxu0 0.0
        %1614 = vmatpush1.msra.mxu0 0.0
        %1615 = vmatprep.subr.mxu0 0.0
        %1616 = vmatpush1.msra.mxu0 0.0
        %1617 = vmatprep.subr.mxu0 0.0
        %1618 = vmatpush1.msra.mxu0 0.0
        %1619 = vmatprep.subr.mxu0 0.0
        %1620 = vmatpush1.msra.mxu0 0.0
        %1621 = vmatprep.mubr.f32.mxu0 0.0
        %1622 = vmatmul.mubr.f32.gmra.mrb[0].mxu0 %v1555
        %v1623 = vpop.f32.mrb[0].mxu0
        %v1624 = vadd.f32 0.0, %v1623
        %v1625 = vpop.f32.mrb[0].mxu0
        %1626 = vdwg.mxu0
        %1627 = vrot.lane.b32.xlu0 %v1187, 96
        %v1628 = vpop.permute.xlu0 %1627
        %v1631 = vsel %vm1506, %v1548, 0
        %1633 = vmatprep.subr.mxu0 0.0
        %1634 = vmatpush1.msra.mxu0 %v1628
        %1635 = vmatprep.subr.mxu0 0.0
        %1636 = vmatpush1.msra.mxu0 0.0
        %1637 = vmatprep.subr.mxu0 0.0
        %1638 = vmatpush1.msra.mxu0 0.0
        %1639 = vmatprep.subr.mxu0 0.0
        %1640 = vmatpush1.msra.mxu0 0.0
        %1641 = vmatprep.subr.mxu0 0.0
        %1642 = vmatpush1.msra.mxu0 0.0
        %1643 = vmatprep.subr.mxu0 0.0
        %1644 = vmatpush1.msra.mxu0 0.0
        %1645 = vmatprep.subr.mxu0 0.0
        %1646 = vmatpush1.msra.mxu0 0.0
        %1647 = vmatprep.subr.mxu0 0.0
        %1648 = vmatpush1.msra.mxu0 0.0
        %1649 = vmatprep.subr.mxu0 0.0
        %1650 = vmatpush1.msra.mxu0 0.0
        %1651 = vmatprep.subr.mxu0 0.0
        %1652 = vmatpush1.msra.mxu0 0.0
        %1653 = vmatprep.subr.mxu0 0.0
        %1654 = vmatpush1.msra.mxu0 0.0
        %1655 = vmatprep.subr.mxu0 0.0
        %1656 = vmatpush1.msra.mxu0 0.0
        %1657 = vmatprep.subr.mxu0 0.0
        %1658 = vmatpush1.msra.mxu0 0.0
        %1659 = vmatprep.subr.mxu0 0.0
        %1660 = vmatpush1.msra.mxu0 0.0
        %1661 = vmatprep.subr.mxu0 0.0
        %1662 = vmatpush1.msra.mxu0 0.0
        %1663 = vmatprep.subr.mxu0 0.0
        %1664 = vmatpush1.msra.mxu0 0.0
        %1665 = vmatprep.subr.mxu0 0.0
        %1666 = vmatpush1.msra.mxu0 0.0
        %1667 = vmatprep.subr.mxu0 0.0
        %1668 = vmatpush1.msra.mxu0 0.0
        %1669 = vmatprep.subr.mxu0 0.0
        %1670 = vmatpush1.msra.mxu0 0.0
        %1671 = vmatprep.subr.mxu0 0.0
        %1672 = vmatpush1.msra.mxu0 0.0
        %1673 = vmatprep.subr.mxu0 0.0
        %1674 = vmatpush1.msra.mxu0 0.0
        %1675 = vmatprep.subr.mxu0 0.0
        %1676 = vmatpush1.msra.mxu0 0.0
        %1677 = vmatprep.subr.mxu0 0.0
        %1678 = vmatpush1.msra.mxu0 0.0
        %1679 = vmatprep.subr.mxu0 0.0
        %1680 = vmatpush1.msra.mxu0 0.0
        %1681 = vmatprep.subr.mxu0 0.0
        %1682 = vmatpush1.msra.mxu0 0.0
        %1683 = vmatprep.subr.mxu0 0.0
        %1684 = vmatpush1.msra.mxu0 0.0
        %1685 = vmatprep.subr.mxu0 0.0
        %1686 = vmatpush1.msra.mxu0 0.0
        %1687 = vmatprep.subr.mxu0 0.0
        %1688 = vmatpush1.msra.mxu0 0.0
        %1689 = vmatprep.subr.mxu0 0.0
        %1690 = vmatpush1.msra.mxu0 0.0
        %1691 = vmatprep.subr.mxu0 0.0
        %1692 = vmatpush1.msra.mxu0 0.0
        %1693 = vmatprep.subr.mxu0 0.0
        %1694 = vmatpush1.msra.mxu0 0.0
        %1695 = vmatprep.subr.mxu0 0.0
        %1696 = vmatpush1.msra.mxu0 0.0
        %1697 = vmatprep.mubr.f32.mxu0 0.0
        %1698 = vmatmul.mubr.f32.gmra.mrb[0].mxu0 %v1631
        %v1699 = vpop.f32.mrb[0].mxu0
        %v1700 = vadd.f32 0.0, %v1699
        %v1701 = vpop.f32.mrb[0].mxu0
        %1702 = vdwg.mxu0
        %1703 = vrot.lane.b32.xlu0 %v1192, 96
        %v1704 = vpop.permute.xlu0 %1703
        %v1707 = vsel %vm1506, %v1549, 0
        %1709 = vmatprep.subr.mxu0 0.0
        %1710 = vmatpush1.msra.mxu0 %v1704
        %1711 = vmatprep.subr.mxu0 0.0
        %1712 = vmatpush1.msra.mxu0 0.0
        %1713 = vmatprep.subr.mxu0 0.0
        %1714 = vmatpush1.msra.mxu0 0.0
        %1715 = vmatprep.subr.mxu0 0.0
        %1716 = vmatpush1.msra.mxu0 0.0
        %1717 = vmatprep.subr.mxu0 0.0
        %1718 = vmatpush1.msra.mxu0 0.0
        %1719 = vmatprep.subr.mxu0 0.0
        %1720 = vmatpush1.msra.mxu0 0.0
        %1721 = vmatprep.subr.mxu0 0.0
        %1722 = vmatpush1.msra.mxu0 0.0
        %1723 = vmatprep.subr.mxu0 0.0
        %1724 = vmatpush1.msra.mxu0 0.0
        %1725 = vmatprep.subr.mxu0 0.0
        %1726 = vmatpush1.msra.mxu0 0.0
        %1727 = vmatprep.subr.mxu0 0.0
        %1728 = vmatpush1.msra.mxu0 0.0
        %1729 = vmatprep.subr.mxu0 0.0
        %1730 = vmatpush1.msra.mxu0 0.0
        %1731 = vmatprep.subr.mxu0 0.0
        %1732 = vmatpush1.msra.mxu0 0.0
        %1733 = vmatprep.subr.mxu0 0.0
        %1734 = vmatpush1.msra.mxu0 0.0
        %1735 = vmatprep.subr.mxu0 0.0
        %1736 = vmatpush1.msra.mxu0 0.0
        %1737 = vmatprep.subr.mxu0 0.0
        %1738 = vmatpush1.msra.mxu0 0.0
        %1739 = vmatprep.subr.mxu0 0.0
        %1740 = vmatpush1.msra.mxu0 0.0
        %1741 = vmatprep.subr.mxu0 0.0
        %1742 = vmatpush1.msra.mxu0 0.0
        %1743 = vmatprep.subr.mxu0 0.0
        %1744 = vmatpush1.msra.mxu0 0.0
        %1745 = vmatprep.subr.mxu0 0.0
        %1746 = vmatpush1.msra.mxu0 0.0
        %1747 = vmatprep.subr.mxu0 0.0
        %1748 = vmatpush1.msra.mxu0 0.0
        %1749 = vmatprep.subr.mxu0 0.0
        %1750 = vmatpush1.msra.mxu0 0.0
        %1751 = vmatprep.subr.mxu0 0.0
        %1752 = vmatpush1.msra.mxu0 0.0
        %1753 = vmatprep.subr.mxu0 0.0
        %1754 = vmatpush1.msra.mxu0 0.0
        %1755 = vmatprep.subr.mxu0 0.0
        %1756 = vmatpush1.msra.mxu0 0.0
        %1757 = vmatprep.subr.mxu0 0.0
        %1758 = vmatpush1.msra.mxu0 0.0
        %1759 = vmatprep.subr.mxu0 0.0
        %1760 = vmatpush1.msra.mxu0 0.0
        %1761 = vmatprep.subr.mxu0 0.0
        %1762 = vmatpush1.msra.mxu0 0.0
        %1763 = vmatprep.subr.mxu0 0.0
        %1764 = vmatpush1.msra.mxu0 0.0
        %1765 = vmatprep.subr.mxu0 0.0
        %1766 = vmatpush1.msra.mxu0 0.0
        %1767 = vmatprep.subr.mxu0 0.0
        %1768 = vmatpush1.msra.mxu0 0.0
        %1769 = vmatprep.subr.mxu0 0.0
        %1770 = vmatpush1.msra.mxu0 0.0
        %1771 = vmatprep.subr.mxu0 0.0
        %1772 = vmatpush1.msra.mxu0 0.0
        %1773 = vmatprep.mubr.f32.mxu0 0.0
        %1774 = vmatmul.mubr.f32.gmra.mrb[0].mxu0 %v1707
        %v1775 = vpop.f32.mrb[0].mxu0
        %v1776 = vadd.f32 0.0, %v1775
        %v1777 = vpop.f32.mrb[0].mxu0
        %1778 = vdwg.mxu0
        %1779 = vrot.lane.b32.xlu0 %v1197, 96
        %v1780 = vpop.permute.xlu0 %1779
        %v1783 = vsel %vm1506, %v1550, 0
        %1785 = vmatprep.subr.mxu0 0.0
        %1786 = vmatpush1.msra.mxu0 %v1780
        %1787 = vmatprep.subr.mxu0 0.0
        %1788 = vmatpush1.msra.mxu0 0.0
        %1789 = vmatprep.subr.mxu0 0.0
        %1790 = vmatpush1.msra.mxu0 0.0
        %1791 = vmatprep.subr.mxu0 0.0
        %1792 = vmatpush1.msra.mxu0 0.0
        %1793 = vmatprep.subr.mxu0 0.0
        %1794 = vmatpush1.msra.mxu0 0.0
        %1795 = vmatprep.subr.mxu0 0.0
        %1796 = vmatpush1.msra.mxu0 0.0
        %1797 = vmatprep.subr.mxu0 0.0
        %1798 = vmatpush1.msra.mxu0 0.0
        %1799 = vmatprep.subr.mxu0 0.0
        %1800 = vmatpush1.msra.mxu0 0.0
        %1801 = vmatprep.subr.mxu0 0.0
        %1802 = vmatpush1.msra.mxu0 0.0
        %1803 = vmatprep.subr.mxu0 0.0
        %1804 = vmatpush1.msra.mxu0 0.0
        %1805 = vmatprep.subr.mxu0 0.0
        %1806 = vmatpush1.msra.mxu0 0.0
        %1807 = vmatprep.subr.mxu0 0.0
        %1808 = vmatpush1.msra.mxu0 0.0
        %1809 = vmatprep.subr.mxu0 0.0
        %1810 = vmatpush1.msra.mxu0 0.0
        %1811 = vmatprep.subr.mxu0 0.0
        %1812 = vmatpush1.msra.mxu0 0.0
        %1813 = vmatprep.subr.mxu0 0.0
        %1814 = vmatpush1.msra.mxu0 0.0
        %1815 = vmatprep.subr.mxu0 0.0
        %1816 = vmatpush1.msra.mxu0 0.0
        %1817 = vmatprep.subr.mxu0 0.0
        %1818 = vmatpush1.msra.mxu0 0.0
        %1819 = vmatprep.subr.mxu0 0.0
        %1820 = vmatpush1.msra.mxu0 0.0
        %1821 = vmatprep.subr.mxu0 0.0
        %1822 = vmatpush1.msra.mxu0 0.0
        %1823 = vmatprep.subr.mxu0 0.0
        %1824 = vmatpush1.msra.mxu0 0.0
        %1825 = vmatprep.subr.mxu0 0.0
        %1826 = vmatpush1.msra.mxu0 0.0
        %1827 = vmatprep.subr.mxu0 0.0
        %1828 = vmatpush1.msra.mxu0 0.0
        %1829 = vmatprep.subr.mxu0 0.0
        %1830 = vmatpush1.msra.mxu0 0.0
        %1831 = vmatprep.subr.mxu0 0.0
        %1832 = vmatpush1.msra.mxu0 0.0
        %1833 = vmatprep.subr.mxu0 0.0
        %1834 = vmatpush1.msra.mxu0 0.0
        %1835 = vmatprep.subr.mxu0 0.0
        %1836 = vmatpush1.msra.mxu0 0.0
        %1837 = vmatprep.subr.mxu0 0.0
        %1838 = vmatpush1.msra.mxu0 0.0
        %1839 = vmatprep.subr.mxu0 0.0
        %1840 = vmatpush1.msra.mxu0 0.0
        %1841 = vmatprep.subr.mxu0 0.0
        %1842 = vmatpush1.msra.mxu0 0.0
        %1843 = vmatprep.subr.mxu0 0.0
        %1844 = vmatpush1.msra.mxu0 0.0
        %1845 = vmatprep.subr.mxu0 0.0
        %1846 = vmatpush1.msra.mxu0 0.0
        %1847 = vmatprep.subr.mxu0 0.0
        %1848 = vmatpush1.msra.mxu0 0.0
        %1849 = vmatprep.mubr.f32.mxu0 0.0
        %1850 = vmatmul.mubr.f32.gmra.mrb[0].mxu0 %v1783
        %v1851 = vpop.f32.mrb[0].mxu0
        %v1852 = vadd.f32 0.0, %v1851
        %v1853 = vpop.f32.mrb[0].mxu0
        %1854 = vdwg.mxu0
        %1855 = vrot.lane.b32.xlu0 %v1074, 112
        %v1856 = vpop.permute.xlu0 %1855
        %1857 = vrot.lane.b32.xlu0 %v1182, 112
        %v1858 = vpop.permute.xlu0 %1857
        %v1859 = vsel %vm1201, %v1856, 0
        %v1861 = vsel %vm1201, %v1858, 0
        %1863 = vmatprep.subr.mxu0 0.0
        %1864 = vmatpush1.xpose.msra.mxu0 %v1861
        %1865 = vmatprep.subr.mxu0 0.0
        %1866 = vmatpush1.xpose.msra.mxu0 0.0
        %1867 = vmatprep.subr.mxu0 0.0
        %1868 = vmatpush1.xpose.msra.mxu0 0.0
        %1869 = vmatprep.subr.mxu0 0.0
        %1870 = vmatpush1.xpose.msra.mxu0 0.0
        %1871 = vmatprep.subr.mxu0 0.0
        %1872 = vmatpush1.xpose.msra.mxu0 0.0
        %1873 = vmatprep.subr.mxu0 0.0
        %1874 = vmatpush1.xpose.msra.mxu0 0.0
        %1875 = vmatprep.subr.mxu0 0.0
        %1876 = vmatpush1.xpose.msra.mxu0 0.0
        %1877 = vmatprep.subr.mxu0 0.0
        %1878 = vmatpush1.xpose.msra.mxu0 0.0
        %1879 = vmatprep.subr.mxu0 0.0
        %1880 = vmatpush1.xpose.msra.mxu0 0.0
        %1881 = vmatprep.subr.mxu0 0.0
        %1882 = vmatpush1.xpose.msra.mxu0 0.0
        %1883 = vmatprep.subr.mxu0 0.0
        %1884 = vmatpush1.xpose.msra.mxu0 0.0
        %1885 = vmatprep.subr.mxu0 0.0
        %1886 = vmatpush1.xpose.msra.mxu0 0.0
        %1887 = vmatprep.subr.mxu0 0.0
        %1888 = vmatpush1.xpose.msra.mxu0 0.0
        %1889 = vmatprep.subr.mxu0 0.0
        %1890 = vmatpush1.xpose.msra.mxu0 0.0
        %1891 = vmatprep.subr.mxu0 0.0
        %1892 = vmatpush1.xpose.msra.mxu0 0.0
        %1893 = vmatprep.subr.mxu0 0.0
        %1894 = vmatpush1.xpose.msra.mxu0 0.0
        %1895 = vmatprep.subr.mxu0 0.0
        %1896 = vmatpush1.xpose.msra.mxu0 0.0
        %1897 = vmatprep.subr.mxu0 0.0
        %1898 = vmatpush1.xpose.msra.mxu0 0.0
        %1899 = vmatprep.subr.mxu0 0.0
        %1900 = vmatpush1.xpose.msra.mxu0 0.0
        %1901 = vmatprep.subr.mxu0 0.0
        %1902 = vmatpush1.xpose.msra.mxu0 0.0
        %1903 = vmatprep.subr.mxu0 0.0
        %1904 = vmatpush1.xpose.msra.mxu0 0.0
        %1905 = vmatprep.subr.mxu0 0.0
        %1906 = vmatpush1.xpose.msra.mxu0 0.0
        %1907 = vmatprep.subr.mxu0 0.0
        %1908 = vmatpush1.xpose.msra.mxu0 0.0
        %1909 = vmatprep.subr.mxu0 0.0
        %1910 = vmatpush1.xpose.msra.mxu0 0.0
        %1911 = vmatprep.subr.mxu0 0.0
        %1912 = vmatpush1.xpose.msra.mxu0 0.0
        %1913 = vmatprep.subr.mxu0 0.0
        %1914 = vmatpush1.xpose.msra.mxu0 0.0
        %1915 = vmatprep.subr.mxu0 0.0
        %1916 = vmatpush1.xpose.msra.mxu0 0.0
        %1917 = vmatprep.subr.mxu0 0.0
        %1918 = vmatpush1.xpose.msra.mxu0 0.0
        %1919 = vmatprep.subr.mxu0 0.0
        %1920 = vmatpush1.xpose.msra.mxu0 0.0
        %1921 = vmatprep.subr.mxu0 0.0
        %1922 = vmatpush1.xpose.msra.mxu0 0.0
        %1923 = vmatprep.subr.mxu0 0.0
        %1924 = vmatpush1.xpose.msra.mxu0 0.0
        %1925 = vmatprep.subr.mxu0 0.0
        %1926 = vmatpush1.xpose.msra.mxu0 0.0
        %1927 = vmatprep.mubr.f32.mxu0 0.0
        %1928 = vmatmul.mubr.f32.gmra.mrb[0].mxu0 %v1859
        %v1929 = vpop.f32.mrb[0].mxu0
        %v1930 = vadd.f32 %v1200, %v1929
        %v1931 = vpop.f32.mrb[0].mxu0
        %1932 = vdwg.mxu0
        %1933 = vrot.lane.b32.xlu0 %v1079, 112
        %v1934 = vpop.permute.xlu0 %1933
        %1935 = vrot.lane.b32.xlu0 %v1187, 112
        %v1936 = vpop.permute.xlu0 %1935
        %v1937 = vsel %vm1201, %v1934, 0
        %v1939 = vsel %vm1201, %v1936, 0
        %1941 = vmatprep.subr.mxu0 0.0
        %1942 = vmatpush1.xpose.msra.mxu0 %v1939
        %1943 = vmatprep.subr.mxu0 0.0
        %1944 = vmatpush1.xpose.msra.mxu0 0.0
        %1945 = vmatprep.subr.mxu0 0.0
        %1946 = vmatpush1.xpose.msra.mxu0 0.0
        %1947 = vmatprep.subr.mxu0 0.0
        %1948 = vmatpush1.xpose.msra.mxu0 0.0
        %1949 = vmatprep.subr.mxu0 0.0
        %1950 = vmatpush1.xpose.msra.mxu0 0.0
        %1951 = vmatprep.subr.mxu0 0.0
        %1952 = vmatpush1.xpose.msra.mxu0 0.0
        %1953 = vmatprep.subr.mxu0 0.0
        %1954 = vmatpush1.xpose.msra.mxu0 0.0
        %1955 = vmatprep.subr.mxu0 0.0
        %1956 = vmatpush1.xpose.msra.mxu0 0.0
        %1957 = vmatprep.subr.mxu0 0.0
        %1958 = vmatpush1.xpose.msra.mxu0 0.0
        %1959 = vmatprep.subr.mxu0 0.0
        %1960 = vmatpush1.xpose.msra.mxu0 0.0
        %1961 = vmatprep.subr.mxu0 0.0
        %1962 = vmatpush1.xpose.msra.mxu0 0.0
        %1963 = vmatprep.subr.mxu0 0.0
        %1964 = vmatpush1.xpose.msra.mxu0 0.0
        %1965 = vmatprep.subr.mxu0 0.0
        %1966 = vmatpush1.xpose.msra.mxu0 0.0
        %1967 = vmatprep.subr.mxu0 0.0
        %1968 = vmatpush1.xpose.msra.mxu0 0.0
        %1969 = vmatprep.subr.mxu0 0.0
        %1970 = vmatpush1.xpose.msra.mxu0 0.0
        %1971 = vmatprep.subr.mxu0 0.0
        %1972 = vmatpush1.xpose.msra.mxu0 0.0
        %1973 = vmatprep.subr.mxu0 0.0
        %1974 = vmatpush1.xpose.msra.mxu0 0.0
        %1975 = vmatprep.subr.mxu0 0.0
        %1976 = vmatpush1.xpose.msra.mxu0 0.0
        %1977 = vmatprep.subr.mxu0 0.0
        %1978 = vmatpush1.xpose.msra.mxu0 0.0
        %1979 = vmatprep.subr.mxu0 0.0
        %1980 = vmatpush1.xpose.msra.mxu0 0.0
        %1981 = vmatprep.subr.mxu0 0.0
        %1982 = vmatpush1.xpose.msra.mxu0 0.0
        %1983 = vmatprep.subr.mxu0 0.0
        %1984 = vmatpush1.xpose.msra.mxu0 0.0
        %1985 = vmatprep.subr.mxu0 0.0
        %1986 = vmatpush1.xpose.msra.mxu0 0.0
        %1987 = vmatprep.subr.mxu0 0.0
        %1988 = vmatpush1.xpose.msra.mxu0 0.0
        %1989 = vmatprep.subr.mxu0 0.0
        %1990 = vmatpush1.xpose.msra.mxu0 0.0
        %1991 = vmatprep.subr.mxu0 0.0
        %1992 = vmatpush1.xpose.msra.mxu0 0.0
        %1993 = vmatprep.subr.mxu0 0.0
        %1994 = vmatpush1.xpose.msra.mxu0 0.0
        %1995 = vmatprep.subr.mxu0 0.0
        %1996 = vmatpush1.xpose.msra.mxu0 0.0
        %1997 = vmatprep.subr.mxu0 0.0
        %1998 = vmatpush1.xpose.msra.mxu0 0.0
        %1999 = vmatprep.subr.mxu0 0.0
        %2000 = vmatpush1.xpose.msra.mxu0 0.0
        %2001 = vmatprep.subr.mxu0 0.0
        %2002 = vmatpush1.xpose.msra.mxu0 0.0
        %2003 = vmatprep.subr.mxu0 0.0
        %2004 = vmatpush1.xpose.msra.mxu0 0.0
        %2005 = vmatprep.mubr.f32.mxu0 0.0
        %2006 = vmatmul.mubr.f32.gmra.mrb[0].mxu0 %v1937
        %v2007 = vpop.f32.mrb[0].mxu0
        %v2008 = vadd.f32 %v1200, %v2007
        %v2009 = vpop.f32.mrb[0].mxu0
        %2010 = vdwg.mxu0
        %2011 = vrot.lane.b32.xlu0 %v1084, 112
        %v2012 = vpop.permute.xlu0 %2011
        %2013 = vrot.lane.b32.xlu0 %v1192, 112
        %v2014 = vpop.permute.xlu0 %2013
        %v2015 = vsel %vm1201, %v2012, 0
        %v2017 = vsel %vm1201, %v2014, 0
        %2019 = vmatprep.subr.mxu0 0.0
        %2020 = vmatpush1.xpose.msra.mxu0 %v2017
        %2021 = vmatprep.subr.mxu0 0.0
        %2022 = vmatpush1.xpose.msra.mxu0 0.0
        %2023 = vmatprep.subr.mxu0 0.0
        %2024 = vmatpush1.xpose.msra.mxu0 0.0
        %2025 = vmatprep.subr.mxu0 0.0
        %2026 = vmatpush1.xpose.msra.mxu0 0.0
        %2027 = vmatprep.subr.mxu0 0.0
        %2028 = vmatpush1.xpose.msra.mxu0 0.0
        %2029 = vmatprep.subr.mxu0 0.0
        %2030 = vmatpush1.xpose.msra.mxu0 0.0
        %2031 = vmatprep.subr.mxu0 0.0
        %2032 = vmatpush1.xpose.msra.mxu0 0.0
        %2033 = vmatprep.subr.mxu0 0.0
        %2034 = vmatpush1.xpose.msra.mxu0 0.0
        %2035 = vmatprep.subr.mxu0 0.0
        %2036 = vmatpush1.xpose.msra.mxu0 0.0
        %2037 = vmatprep.subr.mxu0 0.0
        %2038 = vmatpush1.xpose.msra.mxu0 0.0
        %2039 = vmatprep.subr.mxu0 0.0
        %2040 = vmatpush1.xpose.msra.mxu0 0.0
        %2041 = vmatprep.subr.mxu0 0.0
        %2042 = vmatpush1.xpose.msra.mxu0 0.0
        %2043 = vmatprep.subr.mxu0 0.0
        %2044 = vmatpush1.xpose.msra.mxu0 0.0
        %2045 = vmatprep.subr.mxu0 0.0
        %2046 = vmatpush1.xpose.msra.mxu0 0.0
        %2047 = vmatprep.subr.mxu0 0.0
        %2048 = vmatpush1.xpose.msra.mxu0 0.0
        %2049 = vmatprep.subr.mxu0 0.0
        %2050 = vmatpush1.xpose.msra.mxu0 0.0
        %2051 = vmatprep.subr.mxu0 0.0
        %2052 = vmatpush1.xpose.msra.mxu0 0.0
        %2053 = vmatprep.subr.mxu0 0.0
        %2054 = vmatpush1.xpose.msra.mxu0 0.0
        %2055 = vmatprep.subr.mxu0 0.0
        %2056 = vmatpush1.xpose.msra.mxu0 0.0
        %2057 = vmatprep.subr.mxu0 0.0
        %2058 = vmatpush1.xpose.msra.mxu0 0.0
        %2059 = vmatprep.subr.mxu0 0.0
        %2060 = vmatpush1.xpose.msra.mxu0 0.0
        %2061 = vmatprep.subr.mxu0 0.0
        %2062 = vmatpush1.xpose.msra.mxu0 0.0
        %2063 = vmatprep.subr.mxu0 0.0
        %2064 = vmatpush1.xpose.msra.mxu0 0.0
        %2065 = vmatprep.subr.mxu0 0.0
        %2066 = vmatpush1.xpose.msra.mxu0 0.0
        %2067 = vmatprep.subr.mxu0 0.0
        %2068 = vmatpush1.xpose.msra.mxu0 0.0
        %2069 = vmatprep.subr.mxu0 0.0
        %2070 = vmatpush1.xpose.msra.mxu0 0.0
        %2071 = vmatprep.subr.mxu0 0.0
        %2072 = vmatpush1.xpose.msra.mxu0 0.0
        %2073 = vmatprep.subr.mxu0 0.0
        %2074 = vmatpush1.xpose.msra.mxu0 0.0
        %2075 = vmatprep.subr.mxu0 0.0
        %2076 = vmatpush1.xpose.msra.mxu0 0.0
        %2077 = vmatprep.subr.mxu0 0.0
        %2078 = vmatpush1.xpose.msra.mxu0 0.0
        %2079 = vmatprep.subr.mxu0 0.0
        %2080 = vmatpush1.xpose.msra.mxu0 0.0
        %2081 = vmatprep.subr.mxu0 0.0
        %2082 = vmatpush1.xpose.msra.mxu0 0.0
        %2083 = vmatprep.mubr.f32.mxu0 0.0
        %2084 = vmatmul.mubr.f32.gmra.mrb[0].mxu0 %v2015
        %v2085 = vpop.f32.mrb[0].mxu0
        %v2086 = vadd.f32 %v1200, %v2085
        %v2087 = vpop.f32.mrb[0].mxu0
        %2088 = vdwg.mxu0
        %2089 = vrot.lane.b32.xlu0 %v1089, 112
        %v2090 = vpop.permute.xlu0 %2089
        %2091 = vrot.lane.b32.xlu0 %v1197, 112
        %v2092 = vpop.permute.xlu0 %2091
        %v2093 = vsel %vm1201, %v2090, 0
        %v2095 = vsel %vm1201, %v2092, 0
        %2097 = vmatprep.subr.mxu0 0.0
        %2098 = vmatpush1.xpose.msra.mxu0 %v2095
        %2099 = vmatprep.subr.mxu0 0.0
        %2100 = vmatpush1.xpose.msra.mxu0 0.0
        %2101 = vmatprep.subr.mxu0 0.0
        %2102 = vmatpush1.xpose.msra.mxu0 0.0
        %2103 = vmatprep.subr.mxu0 0.0
        %2104 = vmatpush1.xpose.msra.mxu0 0.0
        %2105 = vmatprep.subr.mxu0 0.0
        %2106 = vmatpush1.xpose.msra.mxu0 0.0
        %2107 = vmatprep.subr.mxu0 0.0
        %2108 = vmatpush1.xpose.msra.mxu0 0.0
        %2109 = vmatprep.subr.mxu0 0.0
        %2110 = vmatpush1.xpose.msra.mxu0 0.0
        %2111 = vmatprep.subr.mxu0 0.0
        %2112 = vmatpush1.xpose.msra.mxu0 0.0
        %2113 = vmatprep.subr.mxu0 0.0
        %2114 = vmatpush1.xpose.msra.mxu0 0.0
        %2115 = vmatprep.subr.mxu0 0.0
        %2116 = vmatpush1.xpose.msra.mxu0 0.0
        %2117 = vmatprep.subr.mxu0 0.0
        %2118 = vmatpush1.xpose.msra.mxu0 0.0
        %2119 = vmatprep.subr.mxu0 0.0
        %2120 = vmatpush1.xpose.msra.mxu0 0.0
        %2121 = vmatprep.subr.mxu0 0.0
        %2122 = vmatpush1.xpose.msra.mxu0 0.0
        %2123 = vmatprep.subr.mxu0 0.0
        %2124 = vmatpush1.xpose.msra.mxu0 0.0
        %2125 = vmatprep.subr.mxu0 0.0
        %2126 = vmatpush1.xpose.msra.mxu0 0.0
        %2127 = vmatprep.subr.mxu0 0.0
        %2128 = vmatpush1.xpose.msra.mxu0 0.0
        %2129 = vmatprep.subr.mxu0 0.0
        %2130 = vmatpush1.xpose.msra.mxu0 0.0
        %2131 = vmatprep.subr.mxu0 0.0
        %2132 = vmatpush1.xpose.msra.mxu0 0.0
        %2133 = vmatprep.subr.mxu0 0.0
        %2134 = vmatpush1.xpose.msra.mxu0 0.0
        %2135 = vmatprep.subr.mxu0 0.0
        %2136 = vmatpush1.xpose.msra.mxu0 0.0
        %2137 = vmatprep.subr.mxu0 0.0
        %2138 = vmatpush1.xpose.msra.mxu0 0.0
        %2139 = vmatprep.subr.mxu0 0.0
        %2140 = vmatpush1.xpose.msra.mxu0 0.0
        %2141 = vmatprep.subr.mxu0 0.0
        %2142 = vmatpush1.xpose.msra.mxu0 0.0
        %2143 = vmatprep.subr.mxu0 0.0
        %2144 = vmatpush1.xpose.msra.mxu0 0.0
        %2145 = vmatprep.subr.mxu0 0.0
        %2146 = vmatpush1.xpose.msra.mxu0 0.0
        %2147 = vmatprep.subr.mxu0 0.0
        %2148 = vmatpush1.xpose.msra.mxu0 0.0
        %2149 = vmatprep.subr.mxu0 0.0
        %2150 = vmatpush1.xpose.msra.mxu0 0.0
        %2151 = vmatprep.subr.mxu0 0.0
        %2152 = vmatpush1.xpose.msra.mxu0 0.0
        %2153 = vmatprep.subr.mxu0 0.0
        %2154 = vmatpush1.xpose.msra.mxu0 0.0
        %2155 = vmatprep.subr.mxu0 0.0
        %2156 = vmatpush1.xpose.msra.mxu0 0.0
        %2157 = vmatprep.subr.mxu0 0.0
        %2158 = vmatpush1.xpose.msra.mxu0 0.0
        %2159 = vmatprep.subr.mxu0 0.0
        %2160 = vmatpush1.xpose.msra.mxu0 0.0
        %2161 = vmatprep.mubr.f32.mxu0 0.0
        %2162 = vmatmul.mubr.f32.gmra.mrb[0].mxu0 %v2093
        %v2163 = vpop.f32.mrb[0].mxu0
        %v2164 = vadd.f32 %v1200, %v2163
        %v2165 = vpop.f32.mrb[0].mxu0
        %2166 = vdwg.mxu0
        %v2167 = vsel %vm1506, %v1930, -inf
        %2168 = vmax.xlane.f32.xlu0 %v2167
        %v2169 = vpop.xlane.xlu0 %2168
        %v2170 = vsel %vm1506, %v2008, -inf
        %2171 = vmax.xlane.f32.xlu0 %v2170
        %v2172 = vpop.xlane.xlu0 %2171
        %v2173 = vsel %vm1506, %v2086, -inf
        %2174 = vmax.xlane.f32.xlu0 %v2173
        %v2175 = vpop.xlane.xlu0 %2174
        %v2176 = vsel %vm1506, %v2164, -inf
        %2177 = vmax.xlane.f32.xlu0 %v2176
        %v2178 = vpop.xlane.xlu0 %2177
        %v2179 = vsub.f32 %v1930, %v2169
        %v2180 = vsub.f32 %v2008, %v2172
        %v2181 = vsub.f32 %v2086, %v2175
        %v2182 = vsub.f32 %v2164, %v2178
        %v2183 = vmul.f32 %v2179, 1.442695
        %v2184 = vpow.pop %v2183
        %v2185 = vmul.f32 %v2180, 1.442695
        %v2186 = vpow.pop %v2185
        %v2187 = vmul.f32 %v2181, 1.442695
        %v2188 = vpow.pop %v2187
        %v2189 = vmul.f32 %v2182, 1.442695
        %v2190 = vpow.pop %v2189
        %v2191 = vsel %vm1506, %v2184, 0.0
        %2192 = vadd.xlane.f32.xlu0 %v2191
        %v2193 = vpop.xlane.xlu0 %2192
        %v2194 = vsel %vm1506, %v2186, 0.0
        %2195 = vadd.xlane.f32.xlu0 %v2194
        %v2196 = vpop.xlane.xlu0 %2195
        %v2197 = vsel %vm1506, %v2188, 0.0
        %2198 = vadd.xlane.f32.xlu0 %v2197
        %v2199 = vpop.xlane.xlu0 %2198
        %v2200 = vsel %vm1506, %v2190, 0.0
        %2201 = vadd.xlane.f32.xlu0 %v2200
        %v2202 = vpop.xlane.xlu0 %2201
        %v2203 = vrcp.pop %v2193
        %v2204 = vrcp.pop %v2196
        %v2205 = vrcp.pop %v2199
        %v2206 = vrcp.pop %v2202
        %v2207 = vmul.f32 %v2184, %v2203
        %v2208 = vmul.f32 %v2186, %v2204
        %v2209 = vmul.f32 %v2188, %v2205
        %v2210 = vmul.f32 %v2190, %v2206
        %2211 = vrot.lane.b32.xlu0 %v1182, 80
        %v2212 = vpop.permute.xlu0 %2211
        %v2215 = vsel %vm1506, %v2207, 0
        %2217 = vmatprep.subr.mxu0 0.0
        %2218 = vmatpush1.msra.mxu0 %v2212
        %2219 = vmatprep.subr.mxu0 0.0
        %2220 = vmatpush1.msra.mxu0 0.0
        %2221 = vmatprep.subr.mxu0 0.0
        %2222 = vmatpush1.msra.mxu0 0.0
        %2223 = vmatprep.subr.mxu0 0.0
        %2224 = vmatpush1.msra.mxu0 0.0
        %2225 = vmatprep.subr.mxu0 0.0
        %2226 = vmatpush1.msra.mxu0 0.0
        %2227 = vmatprep.subr.mxu0 0.0
        %2228 = vmatpush1.msra.mxu0 0.0
        %2229 = vmatprep.subr.mxu0 0.0
        %2230 = vmatpush1.msra.mxu0 0.0
        %2231 = vmatprep.subr.mxu0 0.0
        %2232 = vmatpush1.msra.mxu0 0.0
        %2233 = vmatprep.subr.mxu0 0.0
        %2234 = vmatpush1.msra.mxu0 0.0
        %2235 = vmatprep.subr.mxu0 0.0
        %2236 = vmatpush1.msra.mxu0 0.0
        %2237 = vmatprep.subr.mxu0 0.0
        %2238 = vmatpush1.msra.mxu0 0.0
        %2239 = vmatprep.subr.mxu0 0.0
        %2240 = vmatpush1.msra.mxu0 0.0
        %2241 = vmatprep.subr.mxu0 0.0
        %2242 = vmatpush1.msra.mxu0 0.0
        %2243 = vmatprep.subr.mxu0 0.0
        %2244 = vmatpush1.msra.mxu0 0.0
        %2245 = vmatprep.subr.mxu0 0.0
        %2246 = vmatpush1.msra.mxu0 0.0
        %2247 = vmatprep.subr.mxu0 0.0
        %2248 = vmatpush1.msra.mxu0 0.0
        %2249 = vmatprep.subr.mxu0 0.0
        %2250 = vmatpush1.msra.mxu0 0.0
        %2251 = vmatprep.subr.mxu0 0.0
        %2252 = vmatpush1.msra.mxu0 0.0
        %2253 = vmatprep.subr.mxu0 0.0
        %2254 = vmatpush1.msra.mxu0 0.0
        %2255 = vmatprep.subr.mxu0 0.0
        %2256 = vmatpush1.msra.mxu0 0.0
        %2257 = vmatprep.subr.mxu0 0.0
        %2258 = vmatpush1.msra.mxu0 0.0
        %2259 = vmatprep.subr.mxu0 0.0
        %2260 = vmatpush1.msra.mxu0 0.0
        %2261 = vmatprep.subr.mxu0 0.0
        %2262 = vmatpush1.msra.mxu0 0.0
        %2263 = vmatprep.subr.mxu0 0.0
        %2264 = vmatpush1.msra.mxu0 0.0
        %2265 = vmatprep.subr.mxu0 0.0
        %2266 = vmatpush1.msra.mxu0 0.0
        %2267 = vmatprep.subr.mxu0 0.0
        %2268 = vmatpush1.msra.mxu0 0.0
        %2269 = vmatprep.subr.mxu0 0.0
        %2270 = vmatpush1.msra.mxu0 0.0
        %2271 = vmatprep.subr.mxu0 0.0
        %2272 = vmatpush1.msra.mxu0 0.0
        %2273 = vmatprep.subr.mxu0 0.0
        %2274 = vmatpush1.msra.mxu0 0.0
        %2275 = vmatprep.subr.mxu0 0.0
        %2276 = vmatpush1.msra.mxu0 0.0
        %2277 = vmatprep.subr.mxu0 0.0
        %2278 = vmatpush1.msra.mxu0 0.0
        %2279 = vmatprep.subr.mxu0 0.0
        %2280 = vmatpush1.msra.mxu0 0.0
        %2281 = vmatprep.mubr.f32.mxu0 0.0
        %2282 = vmatmul.mubr.f32.gmra.mrb[0].mxu0 %v2215
        %v2283 = vpop.f32.mrb[0].mxu0
        %v2284 = vadd.f32 0.0, %v2283
        %v2285 = vpop.f32.mrb[0].mxu0
        %2286 = vdwg.mxu0
        %2287 = vrot.lane.b32.xlu0 %v1187, 80
        %v2288 = vpop.permute.xlu0 %2287
        %v2291 = vsel %vm1506, %v2208, 0
        %2293 = vmatprep.subr.mxu0 0.0
        %2294 = vmatpush1.msra.mxu0 %v2288
        %2295 = vmatprep.subr.mxu0 0.0
        %2296 = vmatpush1.msra.mxu0 0.0
        %2297 = vmatprep.subr.mxu0 0.0
        %2298 = vmatpush1.msra.mxu0 0.0
        %2299 = vmatprep.subr.mxu0 0.0
        %2300 = vmatpush1.msra.mxu0 0.0
        %2301 = vmatprep.subr.mxu0 0.0
        %2302 = vmatpush1.msra.mxu0 0.0
        %2303 = vmatprep.subr.mxu0 0.0
        %2304 = vmatpush1.msra.mxu0 0.0
        %2305 = vmatprep.subr.mxu0 0.0
        %2306 = vmatpush1.msra.mxu0 0.0
        %2307 = vmatprep.subr.mxu0 0.0
        %2308 = vmatpush1.msra.mxu0 0.0
        %2309 = vmatprep.subr.mxu0 0.0
        %2310 = vmatpush1.msra.mxu0 0.0
        %2311 = vmatprep.subr.mxu0 0.0
        %2312 = vmatpush1.msra.mxu0 0.0
        %2313 = vmatprep.subr.mxu0 0.0
        %2314 = vmatpush1.msra.mxu0 0.0
        %2315 = vmatprep.subr.mxu0 0.0
        %2316 = vmatpush1.msra.mxu0 0.0
        %2317 = vmatprep.subr.mxu0 0.0
        %2318 = vmatpush1.msra.mxu0 0.0
        %2319 = vmatprep.subr.mxu0 0.0
        %2320 = vmatpush1.msra.mxu0 0.0
        %2321 = vmatprep.subr.mxu0 0.0
        %2322 = vmatpush1.msra.mxu0 0.0
        %2323 = vmatprep.subr.mxu0 0.0
        %2324 = vmatpush1.msra.mxu0 0.0
        %2325 = vmatprep.subr.mxu0 0.0
        %2326 = vmatpush1.msra.mxu0 0.0
        %2327 = vmatprep.subr.mxu0 0.0
        %2328 = vmatpush1.msra.mxu0 0.0
        %2329 = vmatprep.subr.mxu0 0.0
        %2330 = vmatpush1.msra.mxu0 0.0
        %2331 = vmatprep.subr.mxu0 0.0
        %2332 = vmatpush1.msra.mxu0 0.0
        %2333 = vmatprep.subr.mxu0 0.0
        %2334 = vmatpush1.msra.mxu0 0.0
        %2335 = vmatprep.subr.mxu0 0.0
        %2336 = vmatpush1.msra.mxu0 0.0
        %2337 = vmatprep.subr.mxu0 0.0
        %2338 = vmatpush1.msra.mxu0 0.0
        %2339 = vmatprep.subr.mxu0 0.0
        %2340 = vmatpush1.msra.mxu0 0.0
        %2341 = vmatprep.subr.mxu0 0.0
        %2342 = vmatpush1.msra.mxu0 0.0
        %2343 = vmatprep.subr.mxu0 0.0
        %2344 = vmatpush1.msra.mxu0 0.0
        %2345 = vmatprep.subr.mxu0 0.0
        %2346 = vmatpush1.msra.mxu0 0.0
        %2347 = vmatprep.subr.mxu0 0.0
        %2348 = vmatpush1.msra.mxu0 0.0
        %2349 = vmatprep.subr.mxu0 0.0
        %2350 = vmatpush1.msra.mxu0 0.0
        %2351 = vmatprep.subr.mxu0 0.0
        %2352 = vmatpush1.msra.mxu0 0.0
        %2353 = vmatprep.subr.mxu0 0.0
        %2354 = vmatpush1.msra.mxu0 0.0
        %2355 = vmatprep.subr.mxu0 0.0
        %2356 = vmatpush1.msra.mxu0 0.0
        %2357 = vmatprep.mubr.f32.mxu0 0.0
        %2358 = vmatmul.mubr.f32.gmra.mrb[0].mxu0 %v2291
        %v2359 = vpop.f32.mrb[0].mxu0
        %v2360 = vadd.f32 0.0, %v2359
        %v2361 = vpop.f32.mrb[0].mxu0
        %2362 = vdwg.mxu0
        %2363 = vrot.lane.b32.xlu0 %v1192, 80
        %v2364 = vpop.permute.xlu0 %2363
        %v2367 = vsel %vm1506, %v2209, 0
        %2369 = vmatprep.subr.mxu0 0.0
        %2370 = vmatpush1.msra.mxu0 %v2364
        %2371 = vmatprep.subr.mxu0 0.0
        %2372 = vmatpush1.msra.mxu0 0.0
        %2373 = vmatprep.subr.mxu0 0.0
        %2374 = vmatpush1.msra.mxu0 0.0
        %2375 = vmatprep.subr.mxu0 0.0
        %2376 = vmatpush1.msra.mxu0 0.0
        %2377 = vmatprep.subr.mxu0 0.0
        %2378 = vmatpush1.msra.mxu0 0.0
        %2379 = vmatprep.subr.mxu0 0.0
        %2380 = vmatpush1.msra.mxu0 0.0
        %2381 = vmatprep.subr.mxu0 0.0
        %2382 = vmatpush1.msra.mxu0 0.0
        %2383 = vmatprep.subr.mxu0 0.0
        %2384 = vmatpush1.msra.mxu0 0.0
        %2385 = vmatprep.subr.mxu0 0.0
        %2386 = vmatpush1.msra.mxu0 0.0
        %2387 = vmatprep.subr.mxu0 0.0
        %2388 = vmatpush1.msra.mxu0 0.0
        %2389 = vmatprep.subr.mxu0 0.0
        %2390 = vmatpush1.msra.mxu0 0.0
        %2391 = vmatprep.subr.mxu0 0.0
        %2392 = vmatpush1.msra.mxu0 0.0
        %2393 = vmatprep.subr.mxu0 0.0
        %2394 = vmatpush1.msra.mxu0 0.0
        %2395 = vmatprep.subr.mxu0 0.0
        %2396 = vmatpush1.msra.mxu0 0.0
        %2397 = vmatprep.subr.mxu0 0.0
        %2398 = vmatpush1.msra.mxu0 0.0
        %2399 = vmatprep.subr.mxu0 0.0
        %2400 = vmatpush1.msra.mxu0 0.0
        %2401 = vmatprep.subr.mxu0 0.0
        %2402 = vmatpush1.msra.mxu0 0.0
        %2403 = vmatprep.subr.mxu0 0.0
        %2404 = vmatpush1.msra.mxu0 0.0
        %2405 = vmatprep.subr.mxu0 0.0
        %2406 = vmatpush1.msra.mxu0 0.0
        %2407 = vmatprep.subr.mxu0 0.0
        %2408 = vmatpush1.msra.mxu0 0.0
        %2409 = vmatprep.subr.mxu0 0.0
        %2410 = vmatpush1.msra.mxu0 0.0
        %2411 = vmatprep.subr.mxu0 0.0
        %2412 = vmatpush1.msra.mxu0 0.0
        %2413 = vmatprep.subr.mxu0 0.0
        %2414 = vmatpush1.msra.mxu0 0.0
        %2415 = vmatprep.subr.mxu0 0.0
        %2416 = vmatpush1.msra.mxu0 0.0
        %2417 = vmatprep.subr.mxu0 0.0
        %2418 = vmatpush1.msra.mxu0 0.0
        %2419 = vmatprep.subr.mxu0 0.0
        %2420 = vmatpush1.msra.mxu0 0.0
        %2421 = vmatprep.subr.mxu0 0.0
        %2422 = vmatpush1.msra.mxu0 0.0
        %2423 = vmatprep.subr.mxu0 0.0
        %2424 = vmatpush1.msra.mxu0 0.0
        %2425 = vmatprep.subr.mxu0 0.0
        %2426 = vmatpush1.msra.mxu0 0.0
        %2427 = vmatprep.subr.mxu0 0.0
        %2428 = vmatpush1.msra.mxu0 0.0
        %2429 = vmatprep.subr.mxu0 0.0
        %2430 = vmatpush1.msra.mxu0 0.0
        %2431 = vmatprep.subr.mxu0 0.0
        %2432 = vmatpush1.msra.mxu0 0.0
        %2433 = vmatprep.mubr.f32.mxu0 0.0
        %2434 = vmatmul.mubr.f32.gmra.mrb[0].mxu0 %v2367
        %v2435 = vpop.f32.mrb[0].mxu0
        %v2436 = vadd.f32 0.0, %v2435
        %v2437 = vpop.f32.mrb[0].mxu0
        %2438 = vdwg.mxu0
        %2439 = vrot.lane.b32.xlu0 %v1197, 80
        %v2440 = vpop.permute.xlu0 %2439
        %v2443 = vsel %vm1506, %v2210, 0
        %2445 = vmatprep.subr.mxu0 0.0
        %2446 = vmatpush1.msra.mxu0 %v2440
        %2447 = vmatprep.subr.mxu0 0.0
        %2448 = vmatpush1.msra.mxu0 0.0
        %2449 = vmatprep.subr.mxu0 0.0
        %2450 = vmatpush1.msra.mxu0 0.0
        %2451 = vmatprep.subr.mxu0 0.0
        %2452 = vmatpush1.msra.mxu0 0.0
        %2453 = vmatprep.subr.mxu0 0.0
        %2454 = vmatpush1.msra.mxu0 0.0
        %2455 = vmatprep.subr.mxu0 0.0
        %2456 = vmatpush1.msra.mxu0 0.0
        %2457 = vmatprep.subr.mxu0 0.0
        %2458 = vmatpush1.msra.mxu0 0.0
        %2459 = vmatprep.subr.mxu0 0.0
        %2460 = vmatpush1.msra.mxu0 0.0
        %2461 = vmatprep.subr.mxu0 0.0
        %2462 = vmatpush1.msra.mxu0 0.0
        %2463 = vmatprep.subr.mxu0 0.0
        %2464 = vmatpush1.msra.mxu0 0.0
        %2465 = vmatprep.subr.mxu0 0.0
        %2466 = vmatpush1.msra.mxu0 0.0
        %2467 = vmatprep.subr.mxu0 0.0
        %2468 = vmatpush1.msra.mxu0 0.0
        %2469 = vmatprep.subr.mxu0 0.0
        %2470 = vmatpush1.msra.mxu0 0.0
        %2471 = vmatprep.subr.mxu0 0.0
        %2472 = vmatpush1.msra.mxu0 0.0
        %2473 = vmatprep.subr.mxu0 0.0
        %2474 = vmatpush1.msra.mxu0 0.0
        %2475 = vmatprep.subr.mxu0 0.0
        %2476 = vmatpush1.msra.mxu0 0.0
        %2477 = vmatprep.subr.mxu0 0.0
        %2478 = vmatpush1.msra.mxu0 0.0
        %2479 = vmatprep.subr.mxu0 0.0
        %2480 = vmatpush1.msra.mxu0 0.0
        %2481 = vmatprep.subr.mxu0 0.0
        %2482 = vmatpush1.msra.mxu0 0.0
        %2483 = vmatprep.subr.mxu0 0.0
        %2484 = vmatpush1.msra.mxu0 0.0
        %2485 = vmatprep.subr.mxu0 0.0
        %2486 = vmatpush1.msra.mxu0 0.0
        %2487 = vmatprep.subr.mxu0 0.0
        %2488 = vmatpush1.msra.mxu0 0.0
        %2489 = vmatprep.subr.mxu0 0.0
        %2490 = vmatpush1.msra.mxu0 0.0
        %2491 = vmatprep.subr.mxu0 0.0
        %2492 = vmatpush1.msra.mxu0 0.0
        %2493 = vmatprep.subr.mxu0 0.0
        %2494 = vmatpush1.msra.mxu0 0.0
        %2495 = vmatprep.subr.mxu0 0.0
        %2496 = vmatpush1.msra.mxu0 0.0
        %2497 = vmatprep.subr.mxu0 0.0
        %2498 = vmatpush1.msra.mxu0 0.0
        %2499 = vmatprep.subr.mxu0 0.0
        %2500 = vmatpush1.msra.mxu0 0.0
        %2501 = vmatprep.subr.mxu0 0.0
        %2502 = vmatpush1.msra.mxu0 0.0
        %2503 = vmatprep.subr.mxu0 0.0
        %2504 = vmatpush1.msra.mxu0 0.0
        %2505 = vmatprep.subr.mxu0 0.0
        %2506 = vmatpush1.msra.mxu0 0.0
        %2507 = vmatprep.subr.mxu0 0.0
        %2508 = vmatpush1.msra.mxu0 0.0
        %2509 = vmatprep.mubr.f32.mxu0 0.0
        %2510 = vmatmul.mubr.f32.gmra.mrb[0].mxu0 %v2443
        %v2511 = vpop.f32.mrb[0].mxu0
        %v2512 = vadd.f32 0.0, %v2511
        %v2513 = vpop.f32.mrb[0].mxu0
        %2514 = vdwg.mxu0
        %2519 = vrot.lane.b32.xlu0 %v2284, 16
        %v2520 = vpop.permute.xlu0 %2519
        %2521 = vrot.lane.b32.xlu0 %v2360, 16
        %v2522 = vpop.permute.xlu0 %2521
        %2523 = vrot.lane.b32.xlu0 %v2436, 16
        %v2524 = vpop.permute.xlu0 %2523
        %2525 = vrot.lane.b32.xlu0 %v2512, 16
        %v2526 = vpop.permute.xlu0 %2525
        %v2531 = vsel %vm1201, %v1624, %v2520
        %v2532 = vsel %vm1201, %v1700, %v2522
        %v2533 = vsel %vm1201, %v1776, %v2524
        %v2534 = vsel %vm1201, %v1852, %v2526
        %v2535 = vld [vmem:[#allocation15] sm:$0xff]
        %v2536 = vld [vmem:[#allocation15 + $0x8] sm:$0xff]
        %v2537 = vld [vmem:[#allocation15 + $0x10] sm:$0xff]
        %v2538 = vld [vmem:[#allocation15 + $0x18] sm:$0xff]
        %v2539 = vld [vmem:[#allocation16] sm:$0x1]
        %v2541 = vlaneseq
        %v2542 = vshrl.u32 %v2541, 7
        %v2543 = vsub.s32 0, %v2542
        %v2544 = vrot.slane %v2539, %v2543
        %v2547 = vsel %vm910, %v2531, 0
        %v2550 = vsel %vm910, %v2532, 0
        %v2553 = vsel %vm910, %v2533, 0
        %v2556 = vsel %vm910, %v2534, 0
        %2558 = vmatprep.subr.mxu0 0.0
        %2559 = vmatpush1.msra.mxu0 %v2535
        %2560 = vmatprep.subr.mxu0 0.0
        %2561 = vmatpush1.msra.mxu0 %v2536
        %2562 = vmatprep.subr.mxu0 0.0
        %2563 = vmatpush1.msra.mxu0 %v2537
        %2564 = vmatprep.subr.mxu0 0.0
        %2565 = vmatpush1.msra.mxu0 %v2538
        %2566 = vmatprep.subr.mxu0 0.0
        %2567 = vmatpush1.msra.mxu0 0.0
        %2568 = vmatprep.subr.mxu0 0.0
        %2569 = vmatpush1.msra.mxu0 0.0
        %2570 = vmatprep.subr.mxu0 0.0
        %2571 = vmatpush1.msra.mxu0 0.0
        %2572 = vmatprep.subr.mxu0 0.0
        %2573 = vmatpush1.msra.mxu0 0.0
        %2574 = vmatprep.subr.mxu0 0.0
        %2575 = vmatpush1.msra.mxu0 0.0
        %2576 = vmatprep.subr.mxu0 0.0
        %2577 = vmatpush1.msra.mxu0 0.0
        %2578 = vmatprep.subr.mxu0 0.0
        %2579 = vmatpush1.msra.mxu0 0.0
        %2580 = vmatprep.subr.mxu0 0.0
        %2581 = vmatpush1.msra.mxu0 0.0
        %2582 = vmatprep.subr.mxu0 0.0
        %2583 = vmatpush1.msra.mxu0 0.0
        %2584 = vmatprep.subr.mxu0 0.0
        %2585 = vmatpush1.msra.mxu0 0.0
        %2586 = vmatprep.subr.mxu0 0.0
        %2587 = vmatpush1.msra.mxu0 0.0
        %2588 = vmatprep.subr.mxu0 0.0
        %2589 = vmatpush1.msra.mxu0 0.0
        %2590 = vmatprep.subr.mxu0 0.0
        %2591 = vmatpush1.msra.mxu0 0.0
        %2592 = vmatprep.subr.mxu0 0.0
        %2593 = vmatpush1.msra.mxu0 0.0
        %2594 = vmatprep.subr.mxu0 0.0
        %2595 = vmatpush1.msra.mxu0 0.0
        %2596 = vmatprep.subr.mxu0 0.0
        %2597 = vmatpush1.msra.mxu0 0.0
        %2598 = vmatprep.subr.mxu0 0.0
        %2599 = vmatpush1.msra.mxu0 0.0
        %2600 = vmatprep.subr.mxu0 0.0
        %2601 = vmatpush1.msra.mxu0 0.0
        %2602 = vmatprep.subr.mxu0 0.0
        %2603 = vmatpush1.msra.mxu0 0.0
        %2604 = vmatprep.subr.mxu0 0.0
        %2605 = vmatpush1.msra.mxu0 0.0
        %2606 = vmatprep.subr.mxu0 0.0
        %2607 = vmatpush1.msra.mxu0 0.0
        %2608 = vmatprep.subr.mxu0 0.0
        %2609 = vmatpush1.msra.mxu0 0.0
        %2610 = vmatprep.subr.mxu0 0.0
        %2611 = vmatpush1.msra.mxu0 0.0
        %2612 = vmatprep.subr.mxu0 0.0
        %2613 = vmatpush1.msra.mxu0 0.0
        %2614 = vmatprep.subr.mxu0 0.0
        %2615 = vmatpush1.msra.mxu0 0.0
        %2616 = vmatprep.subr.mxu0 0.0
        %2617 = vmatpush1.msra.mxu0 0.0
        %2618 = vmatprep.subr.mxu0 0.0
        %2619 = vmatpush1.msra.mxu0 0.0
        %2620 = vmatprep.subr.mxu0 0.0
        %2621 = vmatpush1.msra.mxu0 0.0
        %2622 = vmatprep.mubr.f32.mxu0 0.0
        %2623 = vmatmul.mubr.f32.gmra.mrb[0].mxu0 %v2547
        %v2624 = vpop.f32.mrb[0].mxu0
        %v2625 = vadd.f32 %v2544, %v2624
        %v2626 = vpop.f32.mrb[0].mxu0
        %2627 = vmatprep.mubr.f32.mxu0 0.0
        %2628 = vmatmul.mubr.f32.gmra.mrb[0].mxu0 %v2550
        %v2629 = vpop.f32.mrb[0].mxu0
        %v2630 = vadd.f32 %v2544, %v2629
        %v2631 = vpop.f32.mrb[0].mxu0
        %2632 = vmatprep.mubr.f32.mxu0 0.0
        %2633 = vmatmul.mubr.f32.gmra.mrb[0].mxu0 %v2553
        %v2634 = vpop.f32.mrb[0].mxu0
        %v2635 = vadd.f32 %v2544, %v2634
        %v2636 = vpop.f32.mrb[0].mxu0
        %2637 = vmatprep.mubr.f32.mxu0 0.0
        %2638 = vmatmul.mubr.f32.gmra.mrb[0].mxu0 %v2556
        %v2639 = vpop.f32.mrb[0].mxu0
        %v2640 = vadd.f32 %v2544, %v2639
        %v2641 = vpop.f32.mrb[0].mxu0
        %2642 = vdwg.mxu0
        %v2643 = vadd.f32 %v2625, %v980
        %v2644 = vadd.f32 %v2630, %v981
        %v2645 = vadd.f32 %v2635, %v982
        %v2646 = vadd.f32 %v2640, %v983
        %v2647 = vld [vmem:[#allocation18] sm:$0x1]
        %v2648 = vld [vmem:[#allocation19] sm:$0x1]
        %v2649 = vsel %vm910, %v2643, 0.0
        %2650 = vadd.xlane.f32.xlu0 %v2649
        %v2651 = vpop.xlane.xlu0 %2650
        %v2652 = vsel %vm910, %v2644, 0.0
        %2653 = vadd.xlane.f32.xlu0 %v2652
        %v2654 = vpop.xlane.xlu0 %2653
        %v2655 = vsel %vm910, %v2645, 0.0
        %2656 = vadd.xlane.f32.xlu0 %v2655
        %v2657 = vpop.xlane.xlu0 %2656
        %v2658 = vsel %vm910, %v2646, 0.0
        %2659 = vadd.xlane.f32.xlu0 %v2658
        %v2660 = vpop.xlane.xlu0 %2659
        %v2661 = vmul.f32 %v2651, %v923
        %v2662 = vmul.f32 %v2654, %v923
        %v2663 = vmul.f32 %v2657, %v923
        %v2664 = vmul.f32 %v2660, %v923
        %v2665 = vsub.f32 %v2643, %v2661
        %v2666 = vsub.f32 %v2644, %v2662
        %v2667 = vsub.f32 %v2645, %v2663
        %v2668 = vsub.f32 %v2646, %v2664
        %v2669 = vmul.f32 %v2665, %v2665
        %v2670 = vmul.f32 %v2666, %v2666
        %v2671 = vmul.f32 %v2667, %v2667
        %v2672 = vmul.f32 %v2668, %v2668
        %v2673 = vsel %vm910, %v2669, 0.0
        %2674 = vadd.xlane.f32.xlu0 %v2673
        %v2675 = vpop.xlane.xlu0 %2674
        %v2676 = vsel %vm910, %v2670, 0.0
        %2677 = vadd.xlane.f32.xlu0 %v2676
        %v2678 = vpop.xlane.xlu0 %2677
        %v2679 = vsel %vm910, %v2671, 0.0
        %2680 = vadd.xlane.f32.xlu0 %v2679
        %v2681 = vpop.xlane.xlu0 %2680
        %v2682 = vsel %vm910, %v2672, 0.0
        %2683 = vadd.xlane.f32.xlu0 %v2682
        %v2684 = vpop.xlane.xlu0 %2683
        %v2685 = vmul.f32 %v2675, %v923
        %v2686 = vmul.f32 %v2678, %v923
        %v2687 = vmul.f32 %v2681, %v923
        %v2688 = vmul.f32 %v2684, %v923
        %v2689 = vadd.f32 %v2685, 1e-08
        %v2690 = vadd.f32 %v2686, 1e-08
        %v2691 = vadd.f32 %v2687, 1e-08
        %v2692 = vadd.f32 %v2688, 1e-08
        %v2693 = vrsqrt.pop %v2689
        %v2694 = vrsqrt.pop %v2690
        %v2695 = vrsqrt.pop %v2691
        %v2696 = vrsqrt.pop %v2692
        %v2697 = vmul.f32 %v2665, %v2693
        %v2698 = vmul.f32 %v2666, %v2694
        %v2699 = vmul.f32 %v2667, %v2695
        %v2700 = vmul.f32 %v2668, %v2696
        %v2702 = vlaneseq
        %v2703 = vshrl.u32 %v2702, 7
        %v2704 = vsub.s32 0, %v2703
        %v2705 = vrot.slane %v2647, %v2704
        %v2707 = vmul.f32 %v2697, %v2705
        %v2708 = vmul.f32 %v2698, %v2705
        %v2709 = vmul.f32 %v2699, %v2705
        %v2710 = vmul.f32 %v2700, %v2705
        %v2712 = vlaneseq
        %v2713 = vshrl.u32 %v2712, 7
        %v2714 = vsub.s32 0, %v2713
        %v2715 = vrot.slane %v2648, %v2714
        %v2717 = vadd.f32 %v2707, %v2715
        %v2718 = vadd.f32 %v2708, %v2715
        %v2719 = vadd.f32 %v2709, %v2715
        %v2720 = vadd.f32 %v2710, %v2715
        %v2721 = vld [vmem:[%s15] sm:$0xff]
        %v2722 = vld [vmem:[%s15 + $0x8] sm:$0xff]
        %v2723 = vld [vmem:[%s15 + $0x10] sm:$0xff]
        %v2724 = vld [vmem:[%s15 + $0x18] sm:$0xff]
        %v2725 = vld [vmem:[%s16] sm:$0x1]
        %v2727 = vlaneseq
        %v2728 = vshrl.u32 %v2727, 7
        %v2729 = vsub.s32 0, %v2728
        %v2730 = vrot.slane %v2725, %v2729
        %v2733 = vsel %vm910, %v2717, 0
        %v2736 = vsel %vm910, %v2718, 0
        %v2739 = vsel %vm910, %v2719, 0
        %v2742 = vsel %vm910, %v2720, 0
        %2744 = vmatprep.subr.mxu0 0.0
        %2745 = vmatpush1.msra.mxu0 %v2721
        %2746 = vmatprep.subr.mxu0 0.0
        %2747 = vmatpush1.msra.mxu0 %v2722
        %2748 = vmatprep.subr.mxu0 0.0
        %2749 = vmatpush1.msra.mxu0 %v2723
        %2750 = vmatprep.subr.mxu0 0.0
        %2751 = vmatpush1.msra.mxu0 %v2724
        %2752 = vmatprep.subr.mxu0 0.0
        %2753 = vmatpush1.msra.mxu0 0.0
        %2754 = vmatprep.subr.mxu0 0.0
        %2755 = vmatpush1.msra.mxu0 0.0
        %2756 = vmatprep.subr.mxu0 0.0
        %2757 = vmatpush1.msra.mxu0 0.0
        %2758 = vmatprep.subr.mxu0 0.0
        %2759 = vmatpush1.msra.mxu0 0.0
        %2760 = vmatprep.subr.mxu0 0.0
        %2761 = vmatpush1.msra.mxu0 0.0
        %2762 = vmatprep.subr.mxu0 0.0
        %2763 = vmatpush1.msra.mxu0 0.0
        %2764 = vmatprep.subr.mxu0 0.0
        %2765 = vmatpush1.msra.mxu0 0.0
        %2766 = vmatprep.subr.mxu0 0.0
        %2767 = vmatpush1.msra.mxu0 0.0
        %2768 = vmatprep.subr.mxu0 0.0
        %2769 = vmatpush1.msra.mxu0 0.0
        %2770 = vmatprep.subr.mxu0 0.0
        %2771 = vmatpush1.msra.mxu0 0.0
        %2772 = vmatprep.subr.mxu0 0.0
        %2773 = vmatpush1.msra.mxu0 0.0
        %2774 = vmatprep.subr.mxu0 0.0
        %2775 = vmatpush1.msra.mxu0 0.0
        %2776 = vmatprep.subr.mxu0 0.0
        %2777 = vmatpush1.msra.mxu0 0.0
        %2778 = vmatprep.subr.mxu0 0.0
        %2779 = vmatpush1.msra.mxu0 0.0
        %2780 = vmatprep.subr.mxu0 0.0
        %2781 = vmatpush1.msra.mxu0 0.0
        %2782 = vmatprep.subr.mxu0 0.0
        %2783 = vmatpush1.msra.mxu0 0.0
        %2784 = vmatprep.subr.mxu0 0.0
        %2785 = vmatpush1.msra.mxu0 0.0
        %2786 = vmatprep.subr.mxu0 0.0
        %2787 = vmatpush1.msra.mxu0 0.0
        %2788 = vmatprep.subr.mxu0 0.0
        %2789 = vmatpush1.msra.mxu0 0.0
        %2790 = vmatprep.subr.mxu0 0.0
        %2791 = vmatpush1.msra.mxu0 0.0
        %2792 = vmatprep.subr.mxu0 0.0
        %2793 = vmatpush1.msra.mxu0 0.0
        %2794 = vmatprep.subr.mxu0 0.0
        %2795 = vmatpush1.msra.mxu0 0.0
        %2796 = vmatprep.subr.mxu0 0.0
        %2797 = vmatpush1.msra.mxu0 0.0
        %2798 = vmatprep.subr.mxu0 0.0
        %2799 = vmatpush1.msra.mxu0 0.0
        %2800 = vmatprep.subr.mxu0 0.0
        %2801 = vmatpush1.msra.mxu0 0.0
        %2802 = vmatprep.subr.mxu0 0.0
        %2803 = vmatpush1.msra.mxu0 0.0
        %2804 = vmatprep.subr.mxu0 0.0
        %2805 = vmatpush1.msra.mxu0 0.0
        %2806 = vmatprep.subr.mxu0 0.0
        %2807 = vmatpush1.msra.mxu0 0.0
        %2808 = vmatprep.mubr.f32.mxu0 0.0
        %2809 = vmatmul.mubr.f32.gmra.mrb[0].mxu0 %v2733
        %v2810 = vpop.f32.mrb[0].mxu0
        %v2811 = vadd.f32 %v2730, %v2810
        %v2812 = vpop.f32.mrb[0].mxu0
        %2813 = vmatprep.mubr.f32.mxu0 0.0
        %2814 = vmatmul.mubr.f32.gmra.mrb[0].mxu0 %v2736
        %v2815 = vpop.f32.mrb[0].mxu0
        %v2816 = vadd.f32 %v2730, %v2815
        %v2817 = vpop.f32.mrb[0].mxu0
        %2818 = vmatprep.mubr.f32.mxu0 0.0
        %2819 = vmatmul.mubr.f32.gmra.mrb[0].mxu0 %v2739
        %v2820 = vpop.f32.mrb[0].mxu0
        %v2821 = vadd.f32 %v2730, %v2820
        %v2822 = vpop.f32.mrb[0].mxu0
        %2823 = vmatprep.mubr.f32.mxu0 0.0
        %2824 = vmatmul.mubr.f32.gmra.mrb[0].mxu0 %v2742
        %v2825 = vpop.f32.mrb[0].mxu0
        %v2826 = vadd.f32 %v2730, %v2825
        %v2827 = vpop.f32.mrb[0].mxu0
        %2828 = vdwg.mxu0
        %v2829 = vmax.f32 %v2811, 0.0
        %v2830 = vmax.f32 %v2816, 0.0
        %v2831 = vmax.f32 %v2821, 0.0
        %v2832 = vmax.f32 %v2826, 0.0
        %v2833 = vld [vmem:[#allocation21] sm:$0xff]
        %v2834 = vld [vmem:[#allocation21 + $0x8] sm:$0xff]
        %v2835 = vld [vmem:[#allocation21 + $0x10] sm:$0xff]
        %v2836 = vld [vmem:[#allocation21 + $0x18] sm:$0xff]
        %v2837 = vld [vmem:[%s18] sm:$0x1]
        %v2839 = vlaneseq
        %v2840 = vshrl.u32 %v2839, 7
        %v2841 = vsub.s32 0, %v2840
        %v2842 = vrot.slane %v2837, %v2841
        %v2845 = vsel %vm910, %v2829, 0
        %v2848 = vsel %vm910, %v2830, 0
        %v2851 = vsel %vm910, %v2831, 0
        %v2854 = vsel %vm910, %v2832, 0
        %2856 = vmatprep.subr.mxu0 0.0
        %2857 = vmatpush1.msra.mxu0 %v2833
        %2858 = vmatprep.subr.mxu0 0.0
        %2859 = vmatpush1.msra.mxu0 %v2834
        %2860 = vmatprep.subr.mxu0 0.0
        %2861 = vmatpush1.msra.mxu0 %v2835
        %2862 = vmatprep.subr.mxu0 0.0
        %2863 = vmatpush1.msra.mxu0 %v2836
        %2864 = vmatprep.subr.mxu0 0.0
        %2865 = vmatpush1.msra.mxu0 0.0
        %2866 = vmatprep.subr.mxu0 0.0
        %2867 = vmatpush1.msra.mxu0 0.0
        %2868 = vmatprep.subr.mxu0 0.0
        %2869 = vmatpush1.msra.mxu0 0.0
        %2870 = vmatprep.subr.mxu0 0.0
        %2871 = vmatpush1.msra.mxu0 0.0
        %2872 = vmatprep.subr.mxu0 0.0
        %2873 = vmatpush1.msra.mxu0 0.0
        %2874 = vmatprep.subr.mxu0 0.0
        %2875 = vmatpush1.msra.mxu0 0.0
        %2876 = vmatprep.subr.mxu0 0.0
        %2877 = vmatpush1.msra.mxu0 0.0
        %2878 = vmatprep.subr.mxu0 0.0
        %2879 = vmatpush1.msra.mxu0 0.0
        %2880 = vmatprep.subr.mxu0 0.0
        %2881 = vmatpush1.msra.mxu0 0.0
        %2882 = vmatprep.subr.mxu0 0.0
        %2883 = vmatpush1.msra.mxu0 0.0
        %2884 = vmatprep.subr.mxu0 0.0
        %2885 = vmatpush1.msra.mxu0 0.0
        %2886 = vmatprep.subr.mxu0 0.0
        %2887 = vmatpush1.msra.mxu0 0.0
        %2888 = vmatprep.subr.mxu0 0.0
        %2889 = vmatpush1.msra.mxu0 0.0
        %2890 = vmatprep.subr.mxu0 0.0
        %2891 = vmatpush1.msra.mxu0 0.0
        %2892 = vmatprep.subr.mxu0 0.0
        %2893 = vmatpush1.msra.mxu0 0.0
        %2894 = vmatprep.subr.mxu0 0.0
        %2895 = vmatpush1.msra.mxu0 0.0
        %2896 = vmatprep.subr.mxu0 0.0
        %2897 = vmatpush1.msra.mxu0 0.0
        %2898 = vmatprep.subr.mxu0 0.0
        %2899 = vmatpush1.msra.mxu0 0.0
        %2900 = vmatprep.subr.mxu0 0.0
        %2901 = vmatpush1.msra.mxu0 0.0
        %2902 = vmatprep.subr.mxu0 0.0
        %2903 = vmatpush1.msra.mxu0 0.0
        %2904 = vmatprep.subr.mxu0 0.0
        %2905 = vmatpush1.msra.mxu0 0.0
        %2906 = vmatprep.subr.mxu0 0.0
        %2907 = vmatpush1.msra.mxu0 0.0
        %2908 = vmatprep.subr.mxu0 0.0
        %2909 = vmatpush1.msra.mxu0 0.0
        %2910 = vmatprep.subr.mxu0 0.0
        %2911 = vmatpush1.msra.mxu0 0.0
        %2912 = vmatprep.subr.mxu0 0.0
        %2913 = vmatpush1.msra.mxu0 0.0
        %2914 = vmatprep.subr.mxu0 0.0
        %2915 = vmatpush1.msra.mxu0 0.0
        %2916 = vmatprep.subr.mxu0 0.0
        %2917 = vmatpush1.msra.mxu0 0.0
        %2918 = vmatprep.subr.mxu0 0.0
        %2919 = vmatpush1.msra.mxu0 0.0
        %2920 = vmatprep.mubr.f32.mxu0 0.0
        %2921 = vmatmul.mubr.f32.gmra.mrb[0].mxu0 %v2845
        %v2922 = vpop.f32.mrb[0].mxu0
        %v2923 = vadd.f32 %v2842, %v2922
        %v2924 = vpop.f32.mrb[0].mxu0
        %2925 = vmatprep.mubr.f32.mxu0 0.0
        %2926 = vmatmul.mubr.f32.gmra.mrb[0].mxu0 %v2848
        %v2927 = vpop.f32.mrb[0].mxu0
        %v2928 = vadd.f32 %v2842, %v2927
        %v2929 = vpop.f32.mrb[0].mxu0
        %2930 = vmatprep.mubr.f32.mxu0 0.0
        %2931 = vmatmul.mubr.f32.gmra.mrb[0].mxu0 %v2851
        %v2932 = vpop.f32.mrb[0].mxu0
        %v2933 = vadd.f32 %v2842, %v2932
        %v2934 = vpop.f32.mrb[0].mxu0
        %2935 = vmatprep.mubr.f32.mxu0 0.0
        %2936 = vmatmul.mubr.f32.gmra.mrb[0].mxu0 %v2854
        %v2937 = vpop.f32.mrb[0].mxu0
        %v2938 = vadd.f32 %v2842, %v2937
        %v2939 = vpop.f32.mrb[0].mxu0
        %2940 = vdwg.mxu0
        %v2941 = vadd.f32 %v2923, %v2717
        %v2942 = vadd.f32 %v2928, %v2718
        %v2943 = vadd.f32 %v2933, %v2719
        %v2944 = vadd.f32 %v2938, %v2720
        %v2945 = vld [vmem:[%s895] sm:$0xff]
        %v2946 = vld [vmem:[%s895 + $0x8] sm:$0xff]
        %v2947 = vld [vmem:[%s895 + $0x10] sm:$0xff]
        %v2948 = vld [vmem:[%s895 + $0x18] sm:$0xff]
        %2950 = vset.pattern.permute.xlu0 0
        %2951 = vperm.xlu0 %2950, %v2945
        %v2952 = vpop.permute.xlu0 %2951
        %2955 = vset.pattern.permute.xlu0 0
        %2956 = vperm.xlu0 %2955, %v2946
        %v2957 = vpop.permute.xlu0 %2956
        %2960 = vset.pattern.permute.xlu0 0
        %2961 = vperm.xlu0 %2960, %v2947
        %v2962 = vpop.permute.xlu0 %2961
        %2965 = vset.pattern.permute.xlu0 0
        %2966 = vperm.xlu0 %2965, %v2948
        %v2967 = vpop.permute.xlu0 %2966
        %v2969 = vmul.f32 %v2941, %v2952
        %v2970 = vmul.f32 %v2942, %v2957
        %v2971 = vmul.f32 %v2943, %v2962
        %v2972 = vmul.f32 %v2944, %v2967
        %v2973 = vld [vmem:[%s19] sm:$0x1]
        %v2974 = vld [vmem:[%s20] sm:$0x1]
        %v2975 = vsel %vm910, %v2969, 0.0
        %2976 = vadd.xlane.f32.xlu0 %v2975
        %v2977 = vpop.xlane.xlu0 %2976
        %v2978 = vsel %vm910, %v2970, 0.0
        %2979 = vadd.xlane.f32.xlu0 %v2978
        %v2980 = vpop.xlane.xlu0 %2979
        %v2981 = vsel %vm910, %v2971, 0.0
        %2982 = vadd.xlane.f32.xlu0 %v2981
        %v2983 = vpop.xlane.xlu0 %2982
        %v2984 = vsel %vm910, %v2972, 0.0
        %2985 = vadd.xlane.f32.xlu0 %v2984
        %v2986 = vpop.xlane.xlu0 %2985
        %v2987 = vmul.f32 %v2977, %v923
        %v2988 = vmul.f32 %v2980, %v923
        %v2989 = vmul.f32 %v2983, %v923
        %v2990 = vmul.f32 %v2986, %v923
        %v2991 = vsub.f32 %v2969, %v2987
        %v2992 = vsub.f32 %v2970, %v2988
        %v2993 = vsub.f32 %v2971, %v2989
        %v2994 = vsub.f32 %v2972, %v2990
        %v2995 = vmul.f32 %v2991, %v2991
        %v2996 = vmul.f32 %v2992, %v2992
        %v2997 = vmul.f32 %v2993, %v2993
        %v2998 = vmul.f32 %v2994, %v2994
        %v2999 = vsel %vm910, %v2995, 0.0
        %3000 = vadd.xlane.f32.xlu0 %v2999
        %v3001 = vpop.xlane.xlu0 %3000
        %v3002 = vsel %vm910, %v2996, 0.0
        %3003 = vadd.xlane.f32.xlu0 %v3002
        %v3004 = vpop.xlane.xlu0 %3003
        %v3005 = vsel %vm910, %v2997, 0.0
        %3006 = vadd.xlane.f32.xlu0 %v3005
        %v3007 = vpop.xlane.xlu0 %3006
        %v3008 = vsel %vm910, %v2998, 0.0
        %3009 = vadd.xlane.f32.xlu0 %v3008
        %v3010 = vpop.xlane.xlu0 %3009
        %v3011 = vmul.f32 %v3001, %v923
        %v3012 = vmul.f32 %v3004, %v923
        %v3013 = vmul.f32 %v3007, %v923
        %v3014 = vmul.f32 %v3010, %v923
        %v3015 = vadd.f32 %v3011, 1e-08
        %v3016 = vadd.f32 %v3012, 1e-08
        %v3017 = vadd.f32 %v3013, 1e-08
        %v3018 = vadd.f32 %v3014, 1e-08
        %v3019 = vrsqrt.pop %v3015
        %v3020 = vrsqrt.pop %v3016
        %v3021 = vrsqrt.pop %v3017
        %v3022 = vrsqrt.pop %v3018
        %v3023 = vmul.f32 %v2991, %v3019
        %v3024 = vmul.f32 %v2992, %v3020
        %v3025 = vmul.f32 %v2993, %v3021
        %v3026 = vmul.f32 %v2994, %v3022
        %v3028 = vlaneseq
        %v3029 = vshrl.u32 %v3028, 7
        %v3030 = vsub.s32 0, %v3029
        %v3031 = vrot.slane %v2973, %v3030
        %v3033 = vmul.f32 %v3023, %v3031
        %v3034 = vmul.f32 %v3024, %v3031
        %v3035 = vmul.f32 %v3025, %v3031
        %v3036 = vmul.f32 %v3026, %v3031
        %v3038 = vlaneseq
        %v3039 = vshrl.u32 %v3038, 7
        %v3040 = vsub.s32 0, %v3039
        %v3041 = vrot.slane %v2974, %v3040
        %v3043 = vadd.f32 %v3033, %v3041
        %v3044 = vadd.f32 %v3034, %v3041
        %v3045 = vadd.f32 %v3035, %v3041
        %v3046 = vadd.f32 %v3036, %v3041
        %v3047 = vld [vmem:[%s762] sm:$0xff]
        %v3048 = vld [vmem:[%s762 + $0x8] sm:$0xff]
        %v3049 = vld [vmem:[%s762 + $0x10] sm:$0xff]
        %v3050 = vld [vmem:[%s762 + $0x18] sm:$0xff]
        %v3051 = vmul.f32 %v3043, %v3047
        %v3052 = vmul.f32 %v3044, %v3048
        %v3053 = vmul.f32 %v3045, %v3049
        %v3054 = vmul.f32 %v3046, %v3050
        %v3055 = vsel %vm910, %v3051, 0.0
        %3056 = vadd.xlane.f32.xlu0 %v3055
        %v3057 = vpop.xlane.xlu0 %3056
        %v3058 = vsel %vm910, %v3052, 0.0
        %3059 = vadd.xlane.f32.xlu0 %v3058
        %v3060 = vpop.xlane.xlu0 %3059
        %v3061 = vsel %vm910, %v3053, 0.0
        %3062 = vadd.xlane.f32.xlu0 %v3061
        %v3063 = vpop.xlane.xlu0 %3062
        %v3064 = vsel %vm910, %v3054, 0.0
        %3065 = vadd.xlane.f32.xlu0 %v3064
        %v3066 = vpop.xlane.xlu0 %3065
        %v3067 = vld [vmem:[%s771] sm:$0xff]
        %v3068 = vld [vmem:[%s771 + $0x8] sm:$0xff]
        %v3069 = vld [vmem:[%s771 + $0x10] sm:$0xff]
        %v3070 = vld [vmem:[%s771 + $0x18] sm:$0xff]
        %v3071 = vmul.f32 %v3043, %v3067
        %v3072 = vmul.f32 %v3044, %v3068
        %v3073 = vmul.f32 %v3045, %v3069
        %v3074 = vmul.f32 %v3046, %v3070
        %v3075 = vsel %vm910, %v3071, 0.0
        %3076 = vadd.xlane.f32.xlu0 %v3075
        %v3077 = vpop.xlane.xlu0 %3076
        %v3078 = vsel %vm910, %v3072, 0.0
        %3079 = vadd.xlane.f32.xlu0 %v3078
        %v3080 = vpop.xlane.xlu0 %3079
        %v3081 = vsel %vm910, %v3073, 0.0
        %3082 = vadd.xlane.f32.xlu0 %v3081
        %v3083 = vpop.xlane.xlu0 %3082
        %v3084 = vsel %vm910, %v3074, 0.0
        %3085 = vadd.xlane.f32.xlu0 %v3084
        %v3086 = vpop.xlane.xlu0 %3085
        %v3091 = vlaneseq
        %v3092 = vand.u32 %v3091, 127
        %v3093 = vlaneseq
        %v3094 = vshrl.u32 %v3093, 7
        %v3095 = vsub.s32 %v3092, %v3094
        %v3096 = vrot.slane %v3057, %v3095
        %v3097 = vlaneseq
        %v3098 = vshrl.u32 %v3097, 7
        %v3099 = vsub.s32 %v3092, %v3098
        %v3100 = vrot.slane %v3060, %v3099
        %v3101 = vlaneseq
        %v3102 = vshrl.u32 %v3101, 7
        %v3103 = vsub.s32 %v3092, %v3102
        %v3104 = vrot.slane %v3063, %v3103
        %v3105 = vlaneseq
        %v3106 = vshrl.u32 %v3105, 7
        %v3107 = vsub.s32 %v3092, %v3106
        %v3108 = vrot.slane %v3066, %v3107
        %vm3109 = vcmask 1041409
        %v3110 = vsel %vm3109, %v3100, %v3096
        %vm3111 = vcmask 1042434
        %v3112 = vsel %vm3111, %v3104, %v3110
        %vm3113 = vcmask 1043459
        %v3114 = vsel %vm3113, %v3108, %v3112
        %v3120 = vadd.s32 %v3092, 4294967288
        %v3121 = vlaneseq
        %v3122 = vshrl.u32 %v3121, 7
        %v3123 = vsub.s32 %v3120, %v3122
        %v3124 = vrot.slane %v3077, %v3123
        %v3125 = vlaneseq
        %v3126 = vshrl.u32 %v3125, 7
        %v3127 = vsub.s32 %v3120, %v3126
        %v3128 = vrot.slane %v3080, %v3127
        %v3129 = vlaneseq
        %v3130 = vshrl.u32 %v3129, 7
        %v3131 = vsub.s32 %v3120, %v3130
        %v3132 = vrot.slane %v3083, %v3131
        %v3133 = vlaneseq
        %v3134 = vshrl.u32 %v3133, 7
        %v3135 = vsub.s32 %v3120, %v3134
        %v3136 = vrot.slane %v3086, %v3135
        %v3137 = vsel %vm3109, %v3128, %v3124
        %v3138 = vsel %vm3111, %v3132, %v3137
        %v3139 = vsel %vm3113, %v3136, %v3138
        %v3141 = vsel %vm1506, %v3114, %v3139
        %3142 = vxpose.xlu0.b32.start [1/16] %v3141, 128
        %3143 = vxpose.xlu0.b32.cont [2/16] 0.0, 128
        %3144 = vxpose.xlu0.b32.cont [3/16] 0.0, 128
        %3145 = vxpose.xlu0.b32.cont [4/16] 0.0, 128
        %3146 = vxpose.xlu0.b32.cont [5/16] 0.0, 128
        %3147 = vxpose.xlu0.b32.cont [6/16] 0.0, 128
        %3148 = vxpose.xlu0.b32.cont [7/16] 0.0, 128
        %3149 = vxpose.xlu0.b32.cont [8/16] 0.0, 128
        %3150 = vxpose.xlu0.b32.cont [9/16] 0.0, 128
        %3151 = vxpose.xlu0.b32.cont [10/16] 0.0, 128
        %3152 = vxpose.xlu0.b32.cont [11/16] 0.0, 128
        %3153 = vxpose.xlu0.b32.cont [12/16] 0.0, 128
        %3154 = vxpose.xlu0.b32.cont [13/16] 0.0, 128
        %3155 = vxpose.xlu0.b32.cont [14/16] 0.0, 128
        %3156 = vxpose.xlu0.b32.cont [15/16] 0.0, 128
        %3157 = vxpose.xlu0.b32.end [16/16] 0.0, 128
        %v3158 = vpop.trf.xlu0
        %v3159 = vpop.trf.xlu0
        %v3160 = vpop.trf.xlu0
        %v3161 = vpop.trf.xlu0
        %v3162 = vpop.trf.xlu0
        %v3163 = vpop.trf.xlu0
        %v3164 = vpop.trf.xlu0
        %v3165 = vpop.trf.xlu0
        %v3166 = vpop.trf.xlu0
        %v3167 = vpop.trf.xlu0
        %v3168 = vpop.trf.xlu0
        %v3169 = vpop.trf.xlu0
        %v3170 = vpop.trf.xlu0
        %v3171 = vpop.trf.xlu0
        %v3172 = vpop.trf.xlu0
        %v3173 = vpop.trf.xlu0
        %vm3174 = vcmask 31744
        %3175 = vst.msk [vmem:[%s903] sm:$0xff] %vm3174, %v3158
        %3176 = vst.msk [vmem:[%s903 + $0x8] sm:$0xff] %vm3174, %v3159
        %p3177 = scmp.lt.s32.totalorder %s41, 1
        %s3178 = scalar_select %p3177, %s41, 1
        %s3179 = smul.addr %s3178, 2
        %s3180 = smul.addr %s3179, 8
        %s3181 = scalar_lea.vmem %s21, %s3180
        // Predicated region
        $region157: #{tpu_custom_call.1} parent=103 // pred_check
          %p3182 = pneg %p520
        $region158: #{tpu_custom_call.1} parent=103 // pred_check_branch
          %3184 = sbr.rel (%p3182) target = $region160
        $region159: #{tpu_custom_call.1} parent=103 // pred_region
          _
        $region160: #{tpu_custom_call.1} parent=103 // pred_fallthru
          _
      $region104: #{tpu_custom_call.1} parent=5 // pred_fallthru
        _
      %p3185 = scmp.le.s32.totalorder 2, %s36
      // Predicated region
      $region161: #{tpu_custom_call.1} parent=5 // pred_check
        %p3186 = pneg %p3185
      $region162: #{tpu_custom_call.1} parent=5 // pred_check_branch
        %3188 = sbr.rel (%p3186) target = $region164
      $region163: #{tpu_custom_call.1} parent=5 // pred_region
        %s3189 = ssub.s32 %s36, 2
        // Predicated region
        $region165: #{tpu_custom_call.1} parent=163 // pred_check
          %p3190 = pneg %p526
        $region166: #{tpu_custom_call.1} parent=163 // pred_check_branch
          %3192 = sbr.rel (%p3190) target = $region168
        $region167: #{tpu_custom_call.1} parent=163 // pred_region
          %p3193 = scmp.lt.s32.totalorder %s42, 1
          %s3194 = scalar_select %p3193, %s42, 1
          %s3195 = smul.addr %s3194, 2
          %s3196 = smul.addr %s3195, 8
          %s3197 = scalar_lea.vmem %s21, %s3196
        $region168: #{tpu_custom_call.1} parent=163 // pred_fallthru
          _
      $region164: #{tpu_custom_call.1} parent=5 // pred_fallthru
        _
    $region6: #{tpu_custom_call.1} parent=1 // loop_footer
      %s40 = sadd.s32 1, %s36
    $region7: #{tpu_custom_call.1} parent=1 // loop_footer_branch
      %35 = sbr.rel target = $region3
    $region8: #{tpu_custom_call.1} parent=1 // loop_exit
      _
    %3198 = vsyncpa [#allocation3], 1
    %s3199 = scalar_lea.sflag [#allocation3], 1
    %3200 = vsyncpa %s3199, 1
    %3201 = vsyncpa [#allocation5], 1
    %s3202 = scalar_lea.sflag [#allocation5], 1
    %3203 = vsyncpa %s3202, 1
    %3204 = vsyncpa [#allocation8], 1
    %3205 = vsyncpa [#allocation11], 1
    %3206 = vsyncpa [#allocation14], 1
    %3207 = vsyncpa [#allocation17], 1
    %3208 = vsyncpa [#allocation20], 1

</llo_original>
